<compile_context>
chip_gen: v6e
topology: v6e:2x2x1
jax: 0.10.0
libtpu: 0.0.40
codegen_flags: <defaults>
</compile_context>

<pallas_src>
import functools

import jax
import jax.numpy as jnp
from jax.experimental import pallas as pl
from jax.experimental.pallas import tpu as pltpu


# ----------------------------- Pallas kernel ------------------------------ #

def _conv3x3_kernel(x_ref, w_ref, b_ref, o_ref, pad_ref, col_ref, *,
                    Hin, Win, Cin, Cout, Ho, Wo, stride, row_rep, neg_slope):
    """Fused 3x3 conv (+bias +activation) for one batch element.

    x_ref  : (1, Hin, Win, Cx) bf16   input tile (Cx = Cin, or 4*Cin when stride==2)
    w_ref  : (9*Cin, Cout)     bf16   im2col weight matrix (ky, kx, ci row-major)
    b_ref  : (1, Cout)         f32    bias
    o_ref  : (1, Ho*Wo, Cout)         output tile
    pad_ref: (Hp, Wp, Cx)      bf16   VMEM scratch: zero-halo'd input
    col_ref: (Ho*Wo, 9*Cin)    bf16   VMEM scratch: im2col matrix
    """
    Cx = pad_ref.shape[-1]
    Hp, Wp = pad_ref.shape[0], pad_ref.shape[1]

    # 1) zero ONLY the halo border (the interior is fully overwritten in step 2, so a
    #    full-tile memset would write those bytes twice). Stride-2 path only ever reads
    #    a top/left halo (bottom/right taps stay in-bounds after space-to-depth).
    zrow = jnp.zeros((1, Wp, Cx), jnp.bfloat16)
    zcol = jnp.zeros((Hp, 1, Cx), jnp.bfloat16)
    pad_ref[pl.ds(0, 1), :, :] = zrow                       # top halo
    pad_ref[:, pl.ds(0, 1), :] = zcol                       # left halo
    if stride == 1:
        pad_ref[pl.ds(Hp - 1, 1), :, :] = zrow              # bottom halo
        pad_ref[:, pl.ds(Wp - 1, 1), :] = zcol              # right halo

    # 2) place the (row-replicated) input in the interior.
    x = x_ref[0]                                            # (Hin, Win, Cx)
    if row_rep > 1:                                         # nearest-upsample rows in VMEM
        x = jnp.broadcast_to(x[:, None, :, :], (Hin, row_rep, Win, Cx))
        x = x.reshape(Hin * row_rep, Win, Cx)
    pad_ref[pl.ds(1, Ho), pl.ds(1, Wo), :] = x

    # 3) build the full im2col matrix with static slice copies (single MXU matmul after).
    for idx in range(9):
        ky, kx = idx // 3, idx % 3
        if stride == 1:
            patch = pad_ref[pl.ds(ky, Ho), pl.ds(kx, Wo), :]
        else:
            # stride-2: input is space-to-depth, pick the parity field + block offset.
            r0 = 0 if ky == 0 else 1
            c0 = 0 if kx == 0 else 1
            ch = (2 * ((ky + 1) % 2) + ((kx + 1) % 2)) * Cin
            patch = pad_ref[pl.ds(r0, Ho), pl.ds(c0, Wo), pl.ds(ch, Cin)]
        col_ref[:, pl.ds(idx * Cin, Cin)] = patch.reshape(Ho * Wo, Cin)

    # 4) one matmul (K = 9*Cin), f32 accumulate; fused bias + activation epilogue.
    acc = jnp.dot(col_ref[...], w_ref[...], preferred_element_type=jnp.float32)
    acc = acc + b_ref[...]
    if neg_slope == 0.0:
        acc = jnp.maximum(acc, 0.0)                         # ReLU
    else:
        acc = jnp.where(acc >= 0.0, acc, neg_slope * acc)   # LeakyReLU
    o_ref[...] = acc.reshape(1, Ho * Wo, Cout).astype(o_ref.dtype)


def conv3x3_act(x, w_mat, b, *, stride=1, up_factor=1, neg_slope=0.2,
                out_dtype=jnp.bfloat16):
    """One conv layer of the module as a single pallas_call (pad/stride/upsample fused)."""
    x = x.astype(jnp.bfloat16)
    N, H, W, Cin = x.shape
    Cout = w_mat.shape[1]
    assert w_mat.shape[0] == 9 * Cin

    if stride == 1:
        if up_factor > 1:
            # nearest upsample: column repeat as XLA glue (tiny, downsampled resolution),
            # row repeat inside the kernel (see TODO at top about fusing columns too).
            x = jnp.repeat(x, up_factor, axis=2)
        Hin, Win, Cx = H, W * up_factor, Cin
        row_rep = up_factor
        Ho, Wo = H * up_factor, W * up_factor
        Hp, Wp = Ho + 2, Wo + 2
    else:
        assert up_factor == 1
        assert H % 2 == 0 and W % 2 == 0  # TODO(synk): odd spatial sizes for stride-2
        Ho, Wo = H // 2, W // 2
        # space-to-depth: x_s2d[n, i, j, (2*pr + pc)*Cin + c] == x[n, 2i+pr, 2j+pc, c]
        x = x.reshape(N, Ho, 2, Wo, 2, Cin).transpose(0, 1, 3, 2, 4, 5)
        x = x.reshape(N, Ho, Wo, 4 * Cin)
        Hin, Win, Cx = Ho, Wo, 4 * Cin
        row_rep = 1
        Hp, Wp = Ho + 1, Wo + 1          # only the top/left halo is ever read

    kernel = functools.partial(
        _conv3x3_kernel, Hin=Hin, Win=Win, Cin=Cin, Cout=Cout, Ho=Ho, Wo=Wo,
        stride=stride, row_rep=row_rep, neg_slope=neg_slope)

    out_bytes = N * Ho * Wo * Cout * jnp.dtype(out_dtype).itemsize
    cost = pl.CostEstimate(
        flops=2 * N * Ho * Wo * 9 * Cin * Cout,
        transcendentals=0,
        bytes_accessed=x.size * 2 + w_mat.size * 2 + b.size * 4 + out_bytes)

    out = pl.pallas_call(
        kernel,
        out_shape=jax.ShapeDtypeStruct((N, Ho * Wo, Cout), out_dtype),
        grid=(N,),
        in_specs=[
            pl.BlockSpec((1, Hin, Win, Cx), lambda n: (n, 0, 0, 0)),
            pl.BlockSpec((9 * Cin, Cout), lambda n: (0, 0)),   # resident across batch
            pl.BlockSpec((1, Cout), lambda n: (0, 0)),         # resident across batch
        ],
        out_specs=pl.BlockSpec((1, Ho * Wo, Cout), lambda n: (n, 0, 0)),
        scratch_shapes=[
            pltpu.VMEM((Hp, Wp, Cx), jnp.bfloat16),        # zero-halo'd input tile
            pltpu.VMEM((Ho * Wo, 9 * Cin), jnp.bfloat16),  # im2col matrix
        ],
        compiler_params=pltpu.CompilerParams(dimension_semantics=("parallel",)),
        cost_estimate=cost,
    )(x, w_mat, b.reshape(1, Cout))
    return out.reshape(N, Ho, Wo, Cout)


# ------------------------- parameters (synthetic) -------------------------- #

def _spectral_normalize(w_oihw, key, n_iter=1, eps=1e-12):
    """One power-iteration spectral norm (PyTorch spectral_norm default), plain JAX."""
    cout = w_oihw.shape[0]
    wm = w_oihw.reshape(cout, -1)
    u = jax.random.normal(key, (cout,), jnp.float32)
    u = u / (jnp.linalg.norm(u) + eps)
    v = None
    for _ in range(n_iter):
        v = wm.T @ u
        v = v / (jnp.linalg.norm(v) + eps)
        u = wm @ v
        u = u / (jnp.linalg.norm(u) + eps)
    sigma = u @ (wm @ v)
    return w_oihw / sigma


def init_params(key, fin, fout, nf, num_down):
    keys = jax.random.split(key, 6 * num_down)
    ki = 0
    down = []
    f_in, f_out = fin, nf
    for i in range(num_down):
        w = 0.1 * jax.random.normal(keys[ki], (f_out, f_in, 3, 3), jnp.float32); ki += 1
        b = 0.05 * jax.random.normal(keys[ki], (f_out,), jnp.float32); ki += 1
        w = _spectral_normalize(w, keys[ki]); ki += 1
        w_hwio = jnp.transpose(w, (2, 3, 1, 0))                       # OIHW -> HWIO
        down.append(dict(
            w_mat=w_hwio.reshape(9 * f_in, f_out).astype(jnp.bfloat16),
            w_hwio=w_hwio.astype(jnp.bfloat16),                       # for the reference
            b=b,
            stride=1 if i == 0 else 2))
        f_in = f_out
        f_out = min(f_out * 2, 512)
    up = []
    for i in range(num_down):
        w = 0.1 * jax.random.normal(keys[ki], (fout, f_in, 3, 3), jnp.float32); ki += 1
        b = 0.05 * jax.random.normal(keys[ki], (fout,), jnp.float32); ki += 1
        w_hwio = jnp.transpose(w, (2, 3, 1, 0))
        up.append(dict(
            w_mat=w_hwio.reshape(9 * f_in, fout).astype(jnp.bfloat16),
            w_hwio=w_hwio.astype(jnp.bfloat16),
            b=b))
    return {"down": down, "up": up}


# ------------------------------ forward pass ------------------------------- #

def global_encoder_forward(x, params, num_down):
    """Pallas-backed forward. x: NHWC. Returns num_down NHWC float32 arrays."""
    h = x.astype(jnp.bfloat16)
    for layer in params["down"]:
        h = conv3x3_act(h, layer["w_mat"], layer["b"], stride=layer["stride"],
                        up_factor=1, neg_slope=0.2, out_dtype=jnp.bfloat16)
    outs = []
    for i, layer in enumerate(params["up"]):
        f = 2 ** (num_down - i - 1)
        outs.append(conv3x3_act(h, layer["w_mat"], layer["b"], stride=1,
                                up_factor=f, neg_slope=0.0, out_dtype=jnp.float32))
    return outs


# --------------------------- pure-JAX reference ---------------------------- #

def _conv_ref(x, w_hwio, b, stride):
    y = jax.lax.conv_general_dilated(
        x, w_hwio, window_strides=(stride, stride), padding=((1, 1), (1, 1)),
        dimension_numbers=("NHWC", "HWIO", "NHWC"),
        preferred_element_type=jnp.float32)
    return y + b.reshape(1, 1, 1, -1)


def global_encoder_reference(x, params, num_down):
    """Pure-JAX reference mirroring the kernel's bf16-in / f32-accumulate numerics."""
    h = x.astype(jnp.bfloat16)
    for layer in params["down"]:
        y = _conv_ref(h, layer["w_hwio"], layer["b"], layer["stride"])
        y = jnp.where(y >= 0.0, y, 0.2 * y)
        h = y.astype(jnp.bfloat16)
    outs = []
    for i, layer in enumerate(params["up"]):
        f = 2 ** (num_down - i - 1)
        u = h
        if f > 1:
            u = jnp.repeat(jnp.repeat(u, f, axis=1), f, axis=2)
        outs.append(jnp.maximum(_conv_ref(u, layer["w_hwio"], layer["b"], 1), 0.0))
    return outs


# ----------------------------------- main ---------------------------------- #

if __name__ == "__main__":
    fin, fout, nf, num_down = 4, 8, 16, 3
    N, H, W = 2, 16, 16

    key = jax.random.PRNGKey(0)
    kx_, kp = jax.random.split(key)
    x_nchw = jax.random.normal(kx_, (N, fin, H, W), dtype=jnp.float32)   # PyTorch NCHW
    x = jnp.transpose(x_nchw, (0, 2, 3, 1))                              # -> NHWC

    params = init_params(kp, fin, fout, nf, num_down)

    outs = global_encoder_forward(x, params, num_down)
    outs = jax.block_until_ready(outs)

    refs = global_encoder_reference(x, params, num_down)
    for o, r in zip(outs, refs):
        assert o.shape == r.shape, (o.shape, r.shape)
        of, rf = o.astype(jnp.float32), r.astype(jnp.float32)
        assert bool(jnp.allclose(of, rf, atol=2e-2, rtol=2e-2)), \
            float(jnp.max(jnp.abs(of - rf)))

    print("KERNEL_OK")
</pallas_src>

<mosaic_0001>
module attributes {stable_mosaic.version = 11 : i64} {
  func.func @_conv3x3_kernel(%arg0: i32, %arg1: memref<1x16x16x4xbf16, #tpu.memory_space<vmem>>, %arg2: memref<36x16xbf16, #tpu.memory_space<vmem>>, %arg3: memref<1x16xf32, #tpu.memory_space<vmem>>, %arg4: memref<1x256x16xbf16, #tpu.memory_space<vmem>>, %arg5: memref<18x18x4xbf16, #tpu.memory_space<vmem>>, %arg6: memref<256x36xbf16, #tpu.memory_space<vmem>>) attributes {dimension_semantics = [#tpu.dimension_semantics<parallel>], iteration_bounds = array<i64: 2>, scalar_prefetch = 0 : i64, scratch_operands = 2 : i64, tpu.core_type = #tpu.core_type<tc>, window_params = [{transform_indices = @transform_0, window_bounds = array<i64: 1, 16, 16, 4>}, {pipeline_mode = #tpu.pipeline_mode<synchronous>, transform_indices = @transform_1, window_bounds = array<i64: 36, 16>}, {pipeline_mode = #tpu.pipeline_mode<synchronous>, transform_indices = @transform_2, window_bounds = array<i64: 1, 16>}, {transform_indices = @transform_3, window_bounds = array<i64: 1, 256, 16>}]} {
    %cst = arith.constant 0.000000e+00 : bf16
    %0 = vector.broadcast %cst : bf16 to vector<1x18x4xbf16>
    %cst_0 = arith.constant 0.000000e+00 : bf16
    %1 = vector.broadcast %cst_0 : bf16 to vector<18x1x4xbf16>
    %c0 = arith.constant 0 : index
    %c0_1 = arith.constant 0 : index
    %c0_2 = arith.constant 0 : index
    %2 = vector.load %arg5[%c0, %c0_1, %c0_2] : memref<18x18x4xbf16, #tpu.memory_space<vmem>>, vector<1x18x4xbf16>
    tpu.vector_store %arg5[%c0, %c0_1, %c0_2], %0 {strides = array<i32>} : memref<18x18x4xbf16, #tpu.memory_space<vmem>>, vector<1x18x4xbf16>,
    %c0_3 = arith.constant 0 : index
    %c0_4 = arith.constant 0 : index
    %c0_5 = arith.constant 0 : index
    %3 = vector.load %arg5[%c0_3, %c0_4, %c0_5] : memref<18x18x4xbf16, #tpu.memory_space<vmem>>, vector<18x1x4xbf16>
    tpu.vector_store %arg5[%c0_3, %c0_4, %c0_5], %1 {strides = array<i32>} : memref<18x18x4xbf16, #tpu.memory_space<vmem>>, vector<18x1x4xbf16>,
    %c17 = arith.constant 17 : index
    %c0_6 = arith.constant 0 : index
    %c0_7 = arith.constant 0 : index
    %4 = vector.load %arg5[%c17, %c0_6, %c0_7] : memref<18x18x4xbf16, #tpu.memory_space<vmem>>, vector<1x18x4xbf16>
    tpu.vector_store %arg5[%c17, %c0_6, %c0_7], %0 {strides = array<i32>} : memref<18x18x4xbf16, #tpu.memory_space<vmem>>, vector<1x18x4xbf16>,
    %c0_8 = arith.constant 0 : index
    %c17_9 = arith.constant 17 : index
    %c0_10 = arith.constant 0 : index
    %5 = vector.load %arg5[%c0_8, %c17_9, %c0_10] : memref<18x18x4xbf16, #tpu.memory_space<vmem>>, vector<18x1x4xbf16>
    tpu.vector_store %arg5[%c0_8, %c17_9, %c0_10], %1 {strides = array<i32>} : memref<18x18x4xbf16, #tpu.memory_space<vmem>>, vector<18x1x4xbf16>,
    %c0_11 = arith.constant 0 : index
    %c0_12 = arith.constant 0 : index
    %c0_13 = arith.constant 0 : index
    %c0_14 = arith.constant 0 : index
    %6 = vector.load %arg1[%c0_11, %c0_12, %c0_13, %c0_14] : memref<1x16x16x4xbf16, #tpu.memory_space<vmem>>, vector<1x16x16x4xbf16>
    %7 = vector.shape_cast %6 : vector<1x16x16x4xbf16> to vector<16x16x4xbf16>
    %c1 = arith.constant 1 : index
    %c1_15 = arith.constant 1 : index
    %c0_16 = arith.constant 0 : index
    %8 = vector.load %arg5[%c1, %c1_15, %c0_16] : memref<18x18x4xbf16, #tpu.memory_space<vmem>>, vector<16x16x4xbf16>
    tpu.vector_store %arg5[%c1, %c1_15, %c0_16], %7 {strides = array<i32>} : memref<18x18x4xbf16, #tpu.memory_space<vmem>>, vector<16x16x4xbf16>,
    %c0_17 = arith.constant 0 : index
    %c0_18 = arith.constant 0 : index
    %c0_19 = arith.constant 0 : index
    %9 = vector.load %arg5[%c0_17, %c0_18, %c0_19] : memref<18x18x4xbf16, #tpu.memory_space<vmem>>, vector<16x16x4xbf16>
    %10 = vector.shape_cast %9 : vector<16x16x4xbf16> to vector<256x4xbf16>
    %c0_20 = arith.constant 0 : index
    %c0_21 = arith.constant 0 : index
    %11 = vector.load %arg6[%c0_20, %c0_21] : memref<256x36xbf16, #tpu.memory_space<vmem>>, vector<256x4xbf16>
    tpu.vector_store %arg6[%c0_20, %c0_21], %10 {strides = array<i32>} : memref<256x36xbf16, #tpu.memory_space<vmem>>, vector<256x4xbf16>,
    %c0_22 = arith.constant 0 : index
    %c1_23 = arith.constant 1 : index
    %c0_24 = arith.constant 0 : index
    %12 = vector.load %arg5[%c0_22, %c1_23, %c0_24] : memref<18x18x4xbf16, #tpu.memory_space<vmem>>, vector<16x16x4xbf16>
    %13 = vector.shape_cast %12 : vector<16x16x4xbf16> to vector<256x4xbf16>
    %c0_25 = arith.constant 0 : index
    %c4 = arith.constant 4 : index
    %14 = vector.load %arg6[%c0_25, %c4] : memref<256x36xbf16, #tpu.memory_space<vmem>>, vector<256x4xbf16>
    tpu.vector_store %arg6[%c0_25, %c4], %13 {strides = array<i32>} : memref<256x36xbf16, #tpu.memory_space<vmem>>, vector<256x4xbf16>,
    %c0_26 = arith.constant 0 : index
    %c2 = arith.constant 2 : index
    %c0_27 = arith.constant 0 : index
    %15 = vector.load %arg5[%c0_26, %c2, %c0_27] : memref<18x18x4xbf16, #tpu.memory_space<vmem>>, vector<16x16x4xbf16>
    %16 = vector.shape_cast %15 : vector<16x16x4xbf16> to vector<256x4xbf16>
    %c0_28 = arith.constant 0 : index
    %c8 = arith.constant 8 : index
    %17 = vector.load %arg6[%c0_28, %c8] : memref<256x36xbf16, #tpu.memory_space<vmem>>, vector<256x4xbf16>
    tpu.vector_store %arg6[%c0_28, %c8], %16 {strides = array<i32>} : memref<256x36xbf16, #tpu.memory_space<vmem>>, vector<256x4xbf16>,
    %c1_29 = arith.constant 1 : index
    %c0_30 = arith.constant 0 : index
    %c0_31 = arith.constant 0 : index
    %18 = vector.load %arg5[%c1_29, %c0_30, %c0_31] : memref<18x18x4xbf16, #tpu.memory_space<vmem>>, vector<16x16x4xbf16>
    %19 = vector.shape_cast %18 : vector<16x16x4xbf16> to vector<256x4xbf16>
    %c0_32 = arith.constant 0 : index
    %c12 = arith.constant 12 : index
    %20 = vector.load %arg6[%c0_32, %c12] : memref<256x36xbf16, #tpu.memory_space<vmem>>, vector<256x4xbf16>
    tpu.vector_store %arg6[%c0_32, %c12], %19 {strides = array<i32>} : memref<256x36xbf16, #tpu.memory_space<vmem>>, vector<256x4xbf16>,
    %c1_33 = arith.constant 1 : index
    %c1_34 = arith.constant 1 : index
    %c0_35 = arith.constant 0 : index
    %21 = vector.load %arg5[%c1_33, %c1_34, %c0_35] : memref<18x18x4xbf16, #tpu.memory_space<vmem>>, vector<16x16x4xbf16>
    %22 = vector.shape_cast %21 : vector<16x16x4xbf16> to vector<256x4xbf16>
    %c0_36 = arith.constant 0 : index
    %c16 = arith.constant 16 : index
    %23 = vector.load %arg6[%c0_36, %c16] : memref<256x36xbf16, #tpu.memory_space<vmem>>, vector<256x4xbf16>
    tpu.vector_store %arg6[%c0_36, %c16], %22 {strides = array<i32>} : memref<256x36xbf16, #tpu.memory_space<vmem>>, vector<256x4xbf16>,
    %c1_37 = arith.constant 1 : index
    %c2_38 = arith.constant 2 : index
    %c0_39 = arith.constant 0 : index
    %24 = vector.load %arg5[%c1_37, %c2_38, %c0_39] : memref<18x18x4xbf16, #tpu.memory_space<vmem>>, vector<16x16x4xbf16>
    %25 = vector.shape_cast %24 : vector<16x16x4xbf16> to vector<256x4xbf16>
    %c0_40 = arith.constant 0 : index
    %c20 = arith.constant 20 : index
    %26 = vector.load %arg6[%c0_40, %c20] : memref<256x36xbf16, #tpu.memory_space<vmem>>, vector<256x4xbf16>
    tpu.vector_store %arg6[%c0_40, %c20], %25 {strides = array<i32>} : memref<256x36xbf16, #tpu.memory_space<vmem>>, vector<256x4xbf16>,
    %c2_41 = arith.constant 2 : index
    %c0_42 = arith.constant 0 : index
    %c0_43 = arith.constant 0 : index
    %27 = vector.load %arg5[%c2_41, %c0_42, %c0_43] : memref<18x18x4xbf16, #tpu.memory_space<vmem>>, vector<16x16x4xbf16>
    %28 = vector.shape_cast %27 : vector<16x16x4xbf16> to vector<256x4xbf16>
    %c0_44 = arith.constant 0 : index
    %c24 = arith.constant 24 : index
    %29 = vector.load %arg6[%c0_44, %c24] : memref<256x36xbf16, #tpu.memory_space<vmem>>, vector<256x4xbf16>
    tpu.vector_store %arg6[%c0_44, %c24], %28 {strides = array<i32>} : memref<256x36xbf16, #tpu.memory_space<vmem>>, vector<256x4xbf16>,
    %c2_45 = arith.constant 2 : index
    %c1_46 = arith.constant 1 : index
    %c0_47 = arith.constant 0 : index
    %30 = vector.load %arg5[%c2_45, %c1_46, %c0_47] : memref<18x18x4xbf16, #tpu.memory_space<vmem>>, vector<16x16x4xbf16>
    %31 = vector.shape_cast %30 : vector<16x16x4xbf16> to vector<256x4xbf16>
    %c0_48 = arith.constant 0 : index
    %c28 = arith.constant 28 : index
    %32 = vector.load %arg6[%c0_48, %c28] : memref<256x36xbf16, #tpu.memory_space<vmem>>, vector<256x4xbf16>
    tpu.vector_store %arg6[%c0_48, %c28], %31 {strides = array<i32>} : memref<256x36xbf16, #tpu.memory_space<vmem>>, vector<256x4xbf16>,
    %c2_49 = arith.constant 2 : index
    %c2_50 = arith.constant 2 : index
    %c0_51 = arith.constant 0 : index
    %33 = vector.load %arg5[%c2_49, %c2_50, %c0_51] : memref<18x18x4xbf16, #tpu.memory_space<vmem>>, vector<16x16x4xbf16>
    %34 = vector.shape_cast %33 : vector<16x16x4xbf16> to vector<256x4xbf16>
    %c0_52 = arith.constant 0 : index
    %c32 = arith.constant 32 : index
    %35 = vector.load %arg6[%c0_52, %c32] : memref<256x36xbf16, #tpu.memory_space<vmem>>, vector<256x4xbf16>
    tpu.vector_store %arg6[%c0_52, %c32], %34 {strides = array<i32>} : memref<256x36xbf16, #tpu.memory_space<vmem>>, vector<256x4xbf16>,
    %c0_53 = arith.constant 0 : index
    %c0_54 = arith.constant 0 : index
    %36 = vector.load %arg6[%c0_53, %c0_54] : memref<256x36xbf16, #tpu.memory_space<vmem>>, vector<256x36xbf16>
    %c0_55 = arith.constant 0 : index
    %c0_56 = arith.constant 0 : index
    %37 = vector.load %arg2[%c0_55, %c0_56] : memref<36x16xbf16, #tpu.memory_space<vmem>>, vector<36x16xbf16>
    %cst_57 = arith.constant dense<0.000000e+00> : vector<256x16xf32>
    %38 = tpu.matmul %36, %37, %cst_57 {dimension_numbers = #tpu.dot_dimension_numbers<[1], [0], [0], [1], [0, 0, 1, 1], [], []>} : vector<256x36xbf16>, vector<36x16xbf16>, vector<256x16xf32> -> vector<256x16xf32>
    %c0_58 = arith.constant 0 : index
    %c0_59 = arith.constant 0 : index
    %39 = vector.load %arg3[%c0_58, %c0_59] : memref<1x16xf32, #tpu.memory_space<vmem>>, vector<1x16xf32>
    %40 = vector.broadcast %39 : vector<1x16xf32> to vector<256x16xf32>
    %41 = arith.addf %38, %40 : vector<256x16xf32>
    %cst_60 = arith.constant 0.000000e+00 : f32
    %42 = vector.broadcast %cst_60 : f32 to vector<256x16xf32>
    %43 = arith.cmpf oge, %41, %42 : vector<256x16xf32>
    %cst_61 = arith.constant 2.000000e-01 : f32
    %44 = vector.broadcast %cst_61 : f32 to vector<256x16xf32>
    %45 = arith.mulf %44, %41 : vector<256x16xf32>
    %46 = arith.select %43, %41, %45 : vector<256x16xi1>, vector<256x16xf32>
    %47 = vector.shape_cast %46 : vector<256x16xf32> to vector<1x256x16xf32>
    %48 = arith.truncf %47 : vector<1x256x16xf32> to vector<1x256x16xbf16>
    %c0_62 = arith.constant 0 : index
    %c0_63 = arith.constant 0 : index
    %c0_64 = arith.constant 0 : index
    %49 = vector.load %arg4[%c0_62, %c0_63, %c0_64] : memref<1x256x16xbf16, #tpu.memory_space<vmem>>, vector<1x256x16xbf16>
    tpu.vector_store %arg4[%c0_62, %c0_63, %c0_64], %48 {strides = array<i32>} : memref<1x256x16xbf16, #tpu.memory_space<vmem>>, vector<1x256x16xbf16>,
    return
  }
  func.func @transform_0(%arg0: i32) -> (i32, i32, i32, i32) {
    %c0_i32 = arith.constant 0 : i32
    %c0_i32_0 = arith.constant 0 : i32
    %c0_i32_1 = arith.constant 0 : i32
    %c0_i32_2 = arith.constant 0 : i32
    return %arg0, %c0_i32, %c0_i32_0, %c0_i32_1 : i32, i32, i32, i32
  }
  func.func @transform_1(%arg0: i32) -> (i32, i32) {
    %c0_i32 = arith.constant 0 : i32
    %c0_i32_0 = arith.constant 0 : i32
    %c0_i32_1 = arith.constant 0 : i32
    return %c0_i32, %c0_i32_0 : i32, i32
  }
  func.func @transform_2(%arg0: i32) -> (i32, i32) {
    %c0_i32 = arith.constant 0 : i32
    %c0_i32_0 = arith.constant 0 : i32
    %c0_i32_1 = arith.constant 0 : i32
    return %c0_i32, %c0_i32_0 : i32, i32
  }
  func.func @transform_3(%arg0: i32) -> (i32, i32, i32) {
    %c0_i32 = arith.constant 0 : i32
    %c0_i32_0 = arith.constant 0 : i32
    %c0_i32_1 = arith.constant 0 : i32
    return %arg0, %c0_i32, %c0_i32_0 : i32, i32, i32
  }
}

</mosaic_0001>

<llo_original>
// kernel: tpu_custom_call.1
$region0: #{tpu_custom_call.1}
  #allocation0 [shape = 'u32[]', space=smem, size = 0x4, offset = 0x4, fixed_abs, tag = 'smem constant byte address 0x4 - core index']
  #allocation1 [shape = 'u32[144,128]{1,0:T(1,128)}', space=vmem, size = 0x12000, scoped, tag = 'internal scratch']
  #allocation2 [shape = 'bf16[18,18,4]{2,1,0:T(8,128)(2,1)}', space=vmem, size = 0x1b000, scoped, tag = 'scratch operand']
  #allocation3 [shape = 'bf16[256,36]{1,0:T(8,128)(2,1)}', space=vmem, size = 0x10000, scoped, tag = 'scratch operand']
  %s0 = inlined_call_operand.vmem [shape: bf16[2,16,16,4], index: 0, kind: input, shape index: {}]
  %s1 = inlined_call_operand.vmem [shape: bf16[36,16], index: 1, kind: input, shape index: {}]
  %s2 = inlined_call_operand.vmem [shape: f32[1,16], index: 2, kind: input, shape index: {}]
  %s3 = inlined_call_operand.vmem [shape: bf16[2,256,16], index: 3, kind: output, shape index: {}]
  %s4 = sld [smem:[#allocation0]]
  $region45: #{tpu_custom_call.1} parent=0
    _
  %s6 = ssub.s32 1, %s4
  %s7 = scalar_select 0, %s6, %s4
  loop: start=0, step=1, limit=4
  $region2: #{tpu_custom_call.1} parent=0 // loop_pre_header
    _
  $region3: #{tpu_custom_call.1} parent=0 // loop_header
    %s9 = sphi 0, %s13
    %p10 = scmp.ge.s32.totalorder %s9, 4
    %s19 = sphi 0, %s21
    %s22 = sphi 0, %s19
    %s23 = sphi 0, %s22
    %s39 = sphi 0, %s23
    %s43 = sphi 0, %s43
    %s45 = sphi 0, %s43
    %s46 = sphi 0, %s45
    %s60 = sphi 0, %s46
    %s64 = sphi 0, %s64
    %s66 = sphi 0, %s64
    %s67 = sphi 0, %s66
    %s81 = sphi 0, %s67
    %s87 = sphi 0, %s89
    %s90 = sphi 0, %s87
    %s91 = sphi 0, %s90
    %s107 = sphi 0, %s91
  $region4: #{tpu_custom_call.1} parent=0 // loop_header_branch
    %12 = sbr.rel (%p10) target = $region8
  $region5: #{tpu_custom_call.1} parent=0 // loop_body
    %s14 = ssub.s32 %s9, 1
    %s15 = ssub.s32 %s9, 2
    %s16 = sadd.s32 %s9, 1
    %s17 = ssub.s32 %s9, %s16
    %p18 = scmp.eq.s32.totalorder %s17, 0
    %s20 = sadd.s32 %s19, 1
    %s21 = scalar_select %p18, %s19, %s20
    %p24 = pneg %p18
    %p25 = scmp.eq.s32.totalorder %s9, 1
    %p26 = por %p24, %p25
    %p27 = scmp.ne.s32.totalorder %s19, %s22
    %p28 = scmp.eq.s32.totalorder %s9, 0
    %p29 = por %p27, %p28
    %p30 = scmp.ne.s32.totalorder %s19, %s22
    %p31 = scmp.eq.s32.totalorder %s14, 1
    %p32 = por %p30, %p31
    %p33 = scmp.ne.s32.totalorder %s22, %s23
    %p34 = scmp.eq.s32.totalorder %s14, 0
    %p35 = por %p33, %p34
    %p36 = scmp.ne.s32.totalorder %s22, %s23
    %p37 = scmp.eq.s32.totalorder %s15, 1
    %p38 = por %p36, %p37
    %p40 = scmp.ne.s32.totalorder %s23, %s39
    %p41 = scmp.eq.s32.totalorder %s15, 0
    %p42 = por %p40, %p41
    %s44 = sadd.s32 %s43, 1
    %p47 = scmp.eq.s32.totalorder %s9, 1
    %p48 = scmp.ne.s32.totalorder %s43, %s45
    %p49 = scmp.eq.s32.totalorder %s9, 0
    %p50 = por %p48, %p49
    %p51 = scmp.ne.s32.totalorder %s43, %s45
    %p52 = scmp.eq.s32.totalorder %s14, 1
    %p53 = por %p51, %p52
    %p54 = scmp.ne.s32.totalorder %s45, %s46
    %p55 = scmp.eq.s32.totalorder %s14, 0
    %p56 = por %p54, %p55
    %p57 = scmp.ne.s32.totalorder %s45, %s46
    %p58 = scmp.eq.s32.totalorder %s15, 1
    %p59 = por %p57, %p58
    %p61 = scmp.ne.s32.totalorder %s46, %s60
    %p62 = scmp.eq.s32.totalorder %s15, 0
    %p63 = por %p61, %p62
    %s65 = sadd.s32 %s64, 1
    %p68 = scmp.eq.s32.totalorder %s9, 1
    %p69 = scmp.ne.s32.totalorder %s64, %s66
    %p70 = scmp.eq.s32.totalorder %s9, 0
    %p71 = por %p69, %p70
    %p72 = scmp.ne.s32.totalorder %s64, %s66
    %p73 = scmp.eq.s32.totalorder %s14, 1
    %p74 = por %p72, %p73
    %p75 = scmp.ne.s32.totalorder %s66, %s67
    %p76 = scmp.eq.s32.totalorder %s14, 0
    %p77 = por %p75, %p76
    %p78 = scmp.ne.s32.totalorder %s66, %s67
    %p79 = scmp.eq.s32.totalorder %s15, 1
    %p80 = por %p78, %p79
    %p82 = scmp.ne.s32.totalorder %s67, %s81
    %p83 = scmp.eq.s32.totalorder %s15, 0
    %p84 = por %p82, %p83
    %s85 = ssub.s32 %s9, %s16
    %p86 = scmp.eq.s32.totalorder %s85, 0
    %s88 = sadd.s32 %s87, 1
    %s89 = scalar_select %p86, %s87, %s88
    %p92 = pneg %p86
    %p93 = scmp.eq.s32.totalorder %s9, 1
    %p94 = por %p92, %p93
    %p95 = scmp.ne.s32.totalorder %s87, %s90
    %p96 = scmp.eq.s32.totalorder %s9, 0
    %p97 = por %p95, %p96
    %p98 = scmp.ne.s32.totalorder %s87, %s90
    %p99 = scmp.eq.s32.totalorder %s14, 1
    %p100 = por %p98, %p99
    %p101 = scmp.ne.s32.totalorder %s90, %s91
    %p102 = scmp.eq.s32.totalorder %s14, 0
    %p103 = por %p101, %p102
    %p104 = scmp.ne.s32.totalorder %s90, %s91
    %p105 = scmp.eq.s32.totalorder %s15, 1
    %p106 = por %p104, %p105
    %p108 = scmp.ne.s32.totalorder %s91, %s107
    %p109 = scmp.eq.s32.totalorder %s15, 0
    %p110 = por %p108, %p109
    %p111 = scmp.le.s32.totalorder 1, %s9
    %p112 = scmp.lt.s32.totalorder %s9, 3
    %p113 = pnand %p111, %p112
    %p114 = pneg %p113
    // Predicated region
    $region9: #{tpu_custom_call.1} parent=5 // pred_check
      _
    $region10: #{tpu_custom_call.1} parent=5 // pred_check_branch
      %116 = sbr.rel (%p113) target = $region12
    $region11: #{tpu_custom_call.1} parent=5 // pred_region
      %s117 = ssub.s32 %s9, 1
      // Predicated region
      $region13: #{tpu_custom_call.1} parent=11 // pred_check
        %p118 = pneg %p56
      $region14: #{tpu_custom_call.1} parent=11 // pred_check_branch
        %120 = sbr.rel (%p118) target = $region16
      $region15: #{tpu_custom_call.1} parent=11 // pred_region
        _
      $region16: #{tpu_custom_call.1} parent=11 // pred_fallthru
        _
      // Predicated region
      $region17: #{tpu_custom_call.1} parent=11 // pred_check
        %p121 = pneg %p77
      $region18: #{tpu_custom_call.1} parent=11 // pred_check_branch
        %123 = sbr.rel (%p121) target = $region20
      $region19: #{tpu_custom_call.1} parent=11 // pred_region
        _
      $region20: #{tpu_custom_call.1} parent=11 // pred_fallthru
        _
    $region12: #{tpu_custom_call.1} parent=5 // pred_fallthru
      _
    %p124 = scmp.lt.s32.totalorder %s9, 2
    // Predicated region
    $region21: #{tpu_custom_call.1} parent=5 // pred_check
      %p125 = pneg %p124
    $region22: #{tpu_custom_call.1} parent=5 // pred_check_branch
      %127 = sbr.rel (%p125) target = $region24
    $region23: #{tpu_custom_call.1} parent=5 // pred_region
      // Predicated region
      $region25: #{tpu_custom_call.1} parent=23 // pred_check
        %p128 = pneg %p29
      $region26: #{tpu_custom_call.1} parent=23 // pred_check_branch
        %130 = sbr.rel (%p128) target = $region28
      $region27: #{tpu_custom_call.1} parent=23 // pred_region
        %p131 = scmp.lt.s32.totalorder %s9, 1
        %s132 = scalar_select %p131, %s9, 1
        %s133 = smul.addr %s132, 32
        %s134 = smul.addr %s133, 4
        %s135 = scalar_lea.vmem %s0, %s134
      $region28: #{tpu_custom_call.1} parent=23 // pred_fallthru
        _
    $region24: #{tpu_custom_call.1} parent=5 // pred_fallthru
      _
    %p136 = scmp.le.s32.totalorder 1, %s9
    %p137 = scmp.lt.s32.totalorder %s9, 3
    %p138 = pnand %p136, %p137
    %p139 = pneg %p138
    // Predicated region
    $region29: #{tpu_custom_call.1} parent=5 // pred_check
      _
    $region30: #{tpu_custom_call.1} parent=5 // pred_check_branch
      %141 = sbr.rel (%p138) target = $region32
    $region31: #{tpu_custom_call.1} parent=5 // pred_region
      %s142 = ssub.s32 %s9, 1
      %p143 = scmp.lt.s32.totalorder %s14, 1
      %s144 = scalar_select %p143, %s14, 1
      %s145 = smul.addr %s144, 32
      %s146 = smul.addr %s145, 4
      %s147 = scalar_lea.vmem %s0, %s146
      %p148 = pneg %p35
      %p149 = pneg %p32
      %p150 = pneg %p56
      %p151 = pneg %p53
      %p152 = pneg %p77
      %p153 = pneg %p74
      %p154 = pneg %p103
      %p155 = pneg %p100
      %p156 = scmp.lt.s32.totalorder %s14, 1
      %s157 = scalar_select %p156, %s14, 1
      %s158 = smul.addr %s157, 32
      %s159 = smul.addr %s158, 4
      %s160 = scalar_lea.vmem %s3, %s159
      %p161 = scmp.lt.s32.totalorder %s14, 1
      %s162 = scalar_select %p161, %s14, 1
      %s163 = smul.addr %s162, 32
      %s164 = smul.addr %s163, 4
      %s165 = scalar_lea.vmem %s0, %s164
      %p166 = scmp.lt.s32.totalorder %s14, 1
      %s167 = scalar_select %p166, %s14, 1
      %s168 = smul.addr %s167, 32
      %s169 = smul.addr %s168, 4
      %s170 = scalar_lea.vmem %s3, %s169
      %vm172 = vcmask 27648
      %173 = vst.msk [vmem:[#allocation2] sm:$0xf] %vm172, 0
      %174 = vst.msk [vmem:[#allocation2 + $0x4] sm:$0xf] %vm172, 0
      %vm175 = vcmask 24576
      %176 = vst.msk [vmem:[#allocation2 + $0x8] sm:$0x1] %vm175, 0
      %vm177 = vcmask 24576
      %vm178 = vsmask.f32 256
      %vm179 = vmand %vm177, %vm178
      %v180 = vld [vmem:[#allocation2] sm:$0x1]
      %v181 = vsel %vm179, 0, %v180
      %182 = vst [vmem:[#allocation2] sm:$0x1] %v181
      %v183 = vld [vmem:[#allocation2 + $0xc] sm:$0x1]
      %v184 = vsel %vm179, 0, %v183
      %185 = vst [vmem:[#allocation2 + $0xc] sm:$0x1] %v184
      %v186 = vld [vmem:[#allocation2 + $0x18] sm:$0x1]
      %v187 = vsel %vm179, 0, %v186
      %188 = vst [vmem:[#allocation2 + $0x18] sm:$0x1] %v187
      %v189 = vld [vmem:[#allocation2 + $0x24] sm:$0x1]
      %v190 = vsel %vm179, 0, %v189
      %191 = vst [vmem:[#allocation2 + $0x24] sm:$0x1] %v190
      %v192 = vld [vmem:[#allocation2 + $0x30] sm:$0x1]
      %v193 = vsel %vm179, 0, %v192
      %194 = vst [vmem:[#allocation2 + $0x30] sm:$0x1] %v193
      %v195 = vld [vmem:[#allocation2 + $0x3c] sm:$0x1]
      %v196 = vsel %vm179, 0, %v195
      %197 = vst [vmem:[#allocation2 + $0x3c] sm:$0x1] %v196
      %v198 = vld [vmem:[#allocation2 + $0x48] sm:$0x1]
      %v199 = vsel %vm179, 0, %v198
      %200 = vst [vmem:[#allocation2 + $0x48] sm:$0x1] %v199
      %v201 = vld [vmem:[#allocation2 + $0x54] sm:$0x1]
      %v202 = vsel %vm179, 0, %v201
      %203 = vst [vmem:[#allocation2 + $0x54] sm:$0x1] %v202
      %v204 = vld [vmem:[#allocation2 + $0x60] sm:$0x1]
      %v205 = vsel %vm179, 0, %v204
      %206 = vst [vmem:[#allocation2 + $0x60] sm:$0x1] %v205
      %v207 = vld [vmem:[#allocation2 + $0x6c] sm:$0x1]
      %v208 = vsel %vm179, 0, %v207
      %209 = vst [vmem:[#allocation2 + $0x6c] sm:$0x1] %v208
      %v210 = vld [vmem:[#allocation2 + $0x78] sm:$0x1]
      %v211 = vsel %vm179, 0, %v210
      %212 = vst [vmem:[#allocation2 + $0x78] sm:$0x1] %v211
      %v213 = vld [vmem:[#allocation2 + $0x84] sm:$0x1]
      %v214 = vsel %vm179, 0, %v213
      %215 = vst [vmem:[#allocation2 + $0x84] sm:$0x1] %v214
      %v216 = vld [vmem:[#allocation2 + $0x90] sm:$0x1]
      %v217 = vsel %vm179, 0, %v216
      %218 = vst [vmem:[#allocation2 + $0x90] sm:$0x1] %v217
      %v219 = vld [vmem:[#allocation2 + $0x9c] sm:$0x1]
      %v220 = vsel %vm179, 0, %v219
      %221 = vst [vmem:[#allocation2 + $0x9c] sm:$0x1] %v220
      %v222 = vld [vmem:[#allocation2 + $0xa8] sm:$0x1]
      %v223 = vsel %vm179, 0, %v222
      %224 = vst [vmem:[#allocation2 + $0xa8] sm:$0x1] %v223
      %v225 = vld [vmem:[#allocation2 + $0xb4] sm:$0x1]
      %v226 = vsel %vm179, 0, %v225
      %227 = vst [vmem:[#allocation2 + $0xb4] sm:$0x1] %v226
      %v228 = vld [vmem:[#allocation2 + $0xc0] sm:$0x1]
      %v229 = vsel %vm179, 0, %v228
      %230 = vst [vmem:[#allocation2 + $0xc0] sm:$0x1] %v229
      %v231 = vld [vmem:[#allocation2 + $0xcc] sm:$0x1]
      %v232 = vsel %vm179, 0, %v231
      %233 = vst [vmem:[#allocation2 + $0xcc] sm:$0x1] %v232
      %s234 = scalar_lea.vmem [#allocation2], 204
      %235 = vst.msk [vmem:[%s234] sm:$0xf] %vm172, 0
      %236 = vst.msk [vmem:[%s234 + $0x4] sm:$0xf] %vm172, 0
      %237 = vst.msk [vmem:[%s234 + $0x8] sm:$0x1] %vm175, 0
      %vm238 = vsmask.f32 7938
      %vm239 = vmand %vm177, %vm238
      %v240 = vld [vmem:[#allocation2 + $0x8] sm:$0x1]
      %v241 = vsel %vm239, 0, %v240
      %242 = vst [vmem:[#allocation2 + $0x8] sm:$0x1] %v241
      %v243 = vld [vmem:[#allocation2 + $0x14] sm:$0x1]
      %v244 = vsel %vm239, 0, %v243
      %245 = vst [vmem:[#allocation2 + $0x14] sm:$0x1] %v244
      %v246 = vld [vmem:[#allocation2 + $0x20] sm:$0x1]
      %v247 = vsel %vm239, 0, %v246
      %248 = vst [vmem:[#allocation2 + $0x20] sm:$0x1] %v247
      %v249 = vld [vmem:[#allocation2 + $0x2c] sm:$0x1]
      %v250 = vsel %vm239, 0, %v249
      %251 = vst [vmem:[#allocation2 + $0x2c] sm:$0x1] %v250
      %v252 = vld [vmem:[#allocation2 + $0x38] sm:$0x1]
      %v253 = vsel %vm239, 0, %v252
      %254 = vst [vmem:[#allocation2 + $0x38] sm:$0x1] %v253
      %v255 = vld [vmem:[#allocation2 + $0x44] sm:$0x1]
      %v256 = vsel %vm239, 0, %v255
      %257 = vst [vmem:[#allocation2 + $0x44] sm:$0x1] %v256
      %v258 = vld [vmem:[#allocation2 + $0x50] sm:$0x1]
      %v259 = vsel %vm239, 0, %v258
      %260 = vst [vmem:[#allocation2 + $0x50] sm:$0x1] %v259
      %v261 = vld [vmem:[#allocation2 + $0x5c] sm:$0x1]
      %v262 = vsel %vm239, 0, %v261
      %263 = vst [vmem:[#allocation2 + $0x5c] sm:$0x1] %v262
      %v264 = vld [vmem:[#allocation2 + $0x68] sm:$0x1]
      %v265 = vsel %vm239, 0, %v264
      %266 = vst [vmem:[#allocation2 + $0x68] sm:$0x1] %v265
      %v267 = vld [vmem:[#allocation2 + $0x74] sm:$0x1]
      %v268 = vsel %vm239, 0, %v267
      %269 = vst [vmem:[#allocation2 + $0x74] sm:$0x1] %v268
      %v270 = vld [vmem:[#allocation2 + $0x80] sm:$0x1]
      %v271 = vsel %vm239, 0, %v270
      %272 = vst [vmem:[#allocation2 + $0x80] sm:$0x1] %v271
      %v273 = vld [vmem:[#allocation2 + $0x8c] sm:$0x1]
      %v274 = vsel %vm239, 0, %v273
      %275 = vst [vmem:[#allocation2 + $0x8c] sm:$0x1] %v274
      %v276 = vld [vmem:[#allocation2 + $0x98] sm:$0x1]
      %v277 = vsel %vm239, 0, %v276
      %278 = vst [vmem:[#allocation2 + $0x98] sm:$0x1] %v277
      %v279 = vld [vmem:[#allocation2 + $0xa4] sm:$0x1]
      %v280 = vsel %vm239, 0, %v279
      %281 = vst [vmem:[#allocation2 + $0xa4] sm:$0x1] %v280
      %v282 = vld [vmem:[#allocation2 + $0xb0] sm:$0x1]
      %v283 = vsel %vm239, 0, %v282
      %284 = vst [vmem:[#allocation2 + $0xb0] sm:$0x1] %v283
      %v285 = vld [vmem:[#allocation2 + $0xbc] sm:$0x1]
      %v286 = vsel %vm239, 0, %v285
      %287 = vst [vmem:[#allocation2 + $0xbc] sm:$0x1] %v286
      %v288 = vld [vmem:[#allocation2 + $0xc8] sm:$0x1]
      %v289 = vsel %vm239, 0, %v288
      %290 = vst [vmem:[#allocation2 + $0xc8] sm:$0x1] %v289
      %v291 = vld [vmem:[#allocation2 + $0xd4] sm:$0x1]
      %v292 = vsel %vm239, 0, %v291
      %293 = vst [vmem:[#allocation2 + $0xd4] sm:$0x1] %v292
      %v294 = vld [vmem:[%s165] sm:$0xf]
      %v295 = vld [vmem:[%s165 + $0x4] sm:$0xf]
      %v296 = vld [vmem:[%s165 + $0x8] sm:$0xf]
      %v297 = vld [vmem:[%s165 + $0xc] sm:$0xf]
      %v298 = vld [vmem:[%s165 + $0x10] sm:$0xf]
      %v299 = vld [vmem:[%s165 + $0x14] sm:$0xf]
      %v300 = vld [vmem:[%s165 + $0x18] sm:$0xf]
      %v301 = vld [vmem:[%s165 + $0x1c] sm:$0xf]
      %v302 = vld [vmem:[%s165 + $0x20] sm:$0xf]
      %v303 = vld [vmem:[%s165 + $0x24] sm:$0xf]
      %v304 = vld [vmem:[%s165 + $0x28] sm:$0xf]
      %v305 = vld [vmem:[%s165 + $0x2c] sm:$0xf]
      %v306 = vld [vmem:[%s165 + $0x30] sm:$0xf]
      %v307 = vld [vmem:[%s165 + $0x34] sm:$0xf]
      %v308 = vld [vmem:[%s165 + $0x38] sm:$0xf]
      %v309 = vld [vmem:[%s165 + $0x3c] sm:$0xf]
      %v310 = vld [vmem:[%s165 + $0x40] sm:$0xf]
      %v311 = vld [vmem:[%s165 + $0x44] sm:$0xf]
      %v312 = vld [vmem:[%s165 + $0x48] sm:$0xf]
      %v313 = vld [vmem:[%s165 + $0x4c] sm:$0xf]
      %v314 = vld [vmem:[%s165 + $0x50] sm:$0xf]
      %v315 = vld [vmem:[%s165 + $0x54] sm:$0xf]
      %v316 = vld [vmem:[%s165 + $0x58] sm:$0xf]
      %v317 = vld [vmem:[%s165 + $0x5c] sm:$0xf]
      %v318 = vld [vmem:[%s165 + $0x60] sm:$0xf]
      %v319 = vld [vmem:[%s165 + $0x64] sm:$0xf]
      %v320 = vld [vmem:[%s165 + $0x68] sm:$0xf]
      %v321 = vld [vmem:[%s165 + $0x6c] sm:$0xf]
      %v322 = vld [vmem:[%s165 + $0x70] sm:$0xf]
      %v323 = vld [vmem:[%s165 + $0x74] sm:$0xf]
      %v324 = vld [vmem:[%s165 + $0x78] sm:$0xf]
      %v325 = vld [vmem:[%s165 + $0x7c] sm:$0xf]
      %vm326 = vsmask.f32 4368
      %vm327 = vmor %vm178, %vm326
      %v329 = vshrl.u32 %v294, 16
      %v331 = vrot.slane %v329, 7
      %v332 = vshll.u32 %v294, 16
      %v334 = vor.u32 %v331, %v332
      %v335 = vrot.slane %v331, 4
      %v337 = vshrl.u32 %v295, 16
      %v339 = vrot.slane %v337, 7
      %v340 = vshll.u32 %v295, 16
      %v342 = vor.u32 %v339, %v340
      %v343 = vsel %vm327, %v335, %v342
      %v344 = vrot.slane %v339, 4
      %v346 = vshrl.u32 %v296, 16
      %v348 = vrot.slane %v346, 7
      %v349 = vshll.u32 %v296, 16
      %v351 = vor.u32 %v348, %v349
      %v352 = vrot.slane %v348, 4
      %v354 = vshrl.u32 %v297, 16
      %v356 = vrot.slane %v354, 7
      %v357 = vshll.u32 %v297, 16
      %v359 = vor.u32 %v356, %v357
      %v360 = vsel %vm327, %v352, %v359
      %v361 = vrot.slane %v356, 4
      %v363 = vshrl.u32 %v298, 16
      %v365 = vrot.slane %v363, 7
      %v366 = vshll.u32 %v298, 16
      %v368 = vor.u32 %v365, %v366
      %v369 = vrot.slane %v365, 4
      %v371 = vshrl.u32 %v299, 16
      %v373 = vrot.slane %v371, 7
      %v374 = vshll.u32 %v299, 16
      %v376 = vor.u32 %v373, %v374
      %v377 = vsel %vm327, %v369, %v376
      %v378 = vrot.slane %v373, 4
      %v380 = vshrl.u32 %v300, 16
      %v382 = vrot.slane %v380, 7
      %v383 = vshll.u32 %v300, 16
      %v385 = vor.u32 %v382, %v383
      %v386 = vrot.slane %v382, 4
      %v388 = vshrl.u32 %v301, 16
      %v390 = vrot.slane %v388, 7
      %v391 = vshll.u32 %v301, 16
      %v393 = vor.u32 %v390, %v391
      %v394 = vsel %vm327, %v386, %v393
      %v395 = vrot.slane %v390, 4
      %v397 = vshrl.u32 %v302, 16
      %v399 = vrot.slane %v397, 7
      %v400 = vshll.u32 %v302, 16
      %v402 = vor.u32 %v399, %v400
      %v403 = vrot.slane %v399, 4
      %v405 = vshrl.u32 %v303, 16
      %v407 = vrot.slane %v405, 7
      %v408 = vshll.u32 %v303, 16
      %v410 = vor.u32 %v407, %v408
      %v411 = vsel %vm327, %v403, %v410
      %v412 = vrot.slane %v407, 4
      %v414 = vshrl.u32 %v304, 16
      %v416 = vrot.slane %v414, 7
      %v417 = vshll.u32 %v304, 16
      %v419 = vor.u32 %v416, %v417
      %v420 = vrot.slane %v416, 4
      %v422 = vshrl.u32 %v305, 16
      %v424 = vrot.slane %v422, 7
      %v425 = vshll.u32 %v305, 16
      %v427 = vor.u32 %v424, %v425
      %v428 = vsel %vm327, %v420, %v427
      %v429 = vrot.slane %v424, 4
      %v431 = vshrl.u32 %v306, 16
      %v433 = vrot.slane %v431, 7
      %v434 = vshll.u32 %v306, 16
      %v436 = vor.u32 %v433, %v434
      %v437 = vrot.slane %v433, 4
      %v439 = vshrl.u32 %v307, 16
      %v441 = vrot.slane %v439, 7
      %v442 = vshll.u32 %v307, 16
      %v444 = vor.u32 %v441, %v442
      %v445 = vsel %vm327, %v437, %v444
      %v446 = vrot.slane %v441, 4
      %v448 = vshrl.u32 %v308, 16
      %v450 = vrot.slane %v448, 7
      %v451 = vshll.u32 %v308, 16
      %v453 = vor.u32 %v450, %v451
      %v454 = vrot.slane %v450, 4
      %v456 = vshrl.u32 %v309, 16
      %v458 = vrot.slane %v456, 7
      %v459 = vshll.u32 %v309, 16
      %v461 = vor.u32 %v458, %v459
      %v462 = vsel %vm327, %v454, %v461
      %v463 = vrot.slane %v458, 4
      %v465 = vshrl.u32 %v310, 16
      %v467 = vrot.slane %v465, 7
      %v468 = vshll.u32 %v310, 16
      %v470 = vor.u32 %v467, %v468
      %v471 = vrot.slane %v467, 4
      %v473 = vshrl.u32 %v311, 16
      %v475 = vrot.slane %v473, 7
      %v476 = vshll.u32 %v311, 16
      %v478 = vor.u32 %v475, %v476
      %v479 = vsel %vm327, %v471, %v478
      %v480 = vrot.slane %v475, 4
      %v482 = vshrl.u32 %v312, 16
      %v484 = vrot.slane %v482, 7
      %v485 = vshll.u32 %v312, 16
      %v487 = vor.u32 %v484, %v485
      %v488 = vrot.slane %v484, 4
      %v490 = vshrl.u32 %v313, 16
      %v492 = vrot.slane %v490, 7
      %v493 = vshll.u32 %v313, 16
      %v495 = vor.u32 %v492, %v493
      %v496 = vsel %vm327, %v488, %v495
      %v497 = vrot.slane %v492, 4
      %v499 = vshrl.u32 %v314, 16
      %v501 = vrot.slane %v499, 7
      %v502 = vshll.u32 %v314, 16
      %v504 = vor.u32 %v501, %v502
      %v505 = vrot.slane %v501, 4
      %v507 = vshrl.u32 %v315, 16
      %v509 = vrot.slane %v507, 7
      %v510 = vshll.u32 %v315, 16
      %v512 = vor.u32 %v509, %v510
      %v513 = vsel %vm327, %v505, %v512
      %v514 = vrot.slane %v509, 4
      %v516 = vshrl.u32 %v316, 16
      %v518 = vrot.slane %v516, 7
      %v519 = vshll.u32 %v316, 16
      %v521 = vor.u32 %v518, %v519
      %v522 = vrot.slane %v518, 4
      %v524 = vshrl.u32 %v317, 16
      %v526 = vrot.slane %v524, 7
      %v527 = vshll.u32 %v317, 16
      %v529 = vor.u32 %v526, %v527
      %v530 = vsel %vm327, %v522, %v529
      %v531 = vrot.slane %v526, 4
      %v533 = vshrl.u32 %v318, 16
      %v535 = vrot.slane %v533, 7
      %v536 = vshll.u32 %v318, 16
      %v538 = vor.u32 %v535, %v536
      %v539 = vrot.slane %v535, 4
      %v541 = vshrl.u32 %v319, 16
      %v543 = vrot.slane %v541, 7
      %v544 = vshll.u32 %v319, 16
      %v546 = vor.u32 %v543, %v544
      %v547 = vsel %vm327, %v539, %v546
      %v548 = vrot.slane %v543, 4
      %v550 = vshrl.u32 %v320, 16
      %v552 = vrot.slane %v550, 7
      %v553 = vshll.u32 %v320, 16
      %v555 = vor.u32 %v552, %v553
      %v556 = vrot.slane %v552, 4
      %v558 = vshrl.u32 %v321, 16
      %v560 = vrot.slane %v558, 7
      %v561 = vshll.u32 %v321, 16
      %v563 = vor.u32 %v560, %v561
      %v564 = vsel %vm327, %v556, %v563
      %v565 = vrot.slane %v560, 4
      %v567 = vshrl.u32 %v322, 16
      %v569 = vrot.slane %v567, 7
      %v570 = vshll.u32 %v322, 16
      %v572 = vor.u32 %v569, %v570
      %v573 = vrot.slane %v569, 4
      %v575 = vshrl.u32 %v323, 16
      %v577 = vrot.slane %v575, 7
      %v578 = vshll.u32 %v323, 16
      %v580 = vor.u32 %v577, %v578
      %v581 = vsel %vm327, %v573, %v580
      %v582 = vrot.slane %v577, 4
      %v584 = vshrl.u32 %v324, 16
      %v586 = vrot.slane %v584, 7
      %v587 = vshll.u32 %v324, 16
      %v589 = vor.u32 %v586, %v587
      %v590 = vrot.slane %v586, 4
      %v592 = vshrl.u32 %v325, 16
      %v594 = vrot.slane %v592, 7
      %v595 = vshll.u32 %v325, 16
      %v597 = vor.u32 %v594, %v595
      %v598 = vsel %vm327, %v590, %v597
      %v599 = vrot.slane %v594, 4
      %s648 = scalar_lea.vmem [#allocation2], 12
      %vm649 = vcmask 27648
      %vm650 = vmand %vm649, %vm238
      %v651 = vld [vmem:[%s648] sm:$0xf]
      %v652 = vsel %vm650, %v334, %v651
      %653 = vst [vmem:[%s648] sm:$0xf] %v652
      %654 = vst.msk [vmem:[%s648 + $0x4] sm:$0xf] %vm172, %v343
      %v655 = vld [vmem:[%s648 + $0x8] sm:$0x1]
      %v656 = vsel %vm179, %v344, %v655
      %657 = vst [vmem:[%s648 + $0x8] sm:$0x1] %v656
      %v658 = vld [vmem:[%s648 + $0xc] sm:$0xf]
      %v659 = vsel %vm650, %v351, %v658
      %660 = vst [vmem:[%s648 + $0xc] sm:$0xf] %v659
      %661 = vst.msk [vmem:[%s648 + $0x10] sm:$0xf] %vm172, %v360
      %v662 = vld [vmem:[%s648 + $0x14] sm:$0x1]
      %v663 = vsel %vm179, %v361, %v662
      %664 = vst [vmem:[%s648 + $0x14] sm:$0x1] %v663
      %v665 = vld [vmem:[%s648 + $0x18] sm:$0xf]
      %v666 = vsel %vm650, %v368, %v665
      %667 = vst [vmem:[%s648 + $0x18] sm:$0xf] %v666
      %668 = vst.msk [vmem:[%s648 + $0x1c] sm:$0xf] %vm172, %v377
      %v669 = vld [vmem:[%s648 + $0x20] sm:$0x1]
      %v670 = vsel %vm179, %v378, %v669
      %671 = vst [vmem:[%s648 + $0x20] sm:$0x1] %v670
      %v672 = vld [vmem:[%s648 + $0x24] sm:$0xf]
      %v673 = vsel %vm650, %v385, %v672
      %674 = vst [vmem:[%s648 + $0x24] sm:$0xf] %v673
      %675 = vst.msk [vmem:[%s648 + $0x28] sm:$0xf] %vm172, %v394
      %v676 = vld [vmem:[%s648 + $0x2c] sm:$0x1]
      %v677 = vsel %vm179, %v395, %v676
      %678 = vst [vmem:[%s648 + $0x2c] sm:$0x1] %v677
      %v679 = vld [vmem:[%s648 + $0x30] sm:$0xf]
      %v680 = vsel %vm650, %v402, %v679
      %681 = vst [vmem:[%s648 + $0x30] sm:$0xf] %v680
      %682 = vst.msk [vmem:[%s648 + $0x34] sm:$0xf] %vm172, %v411
      %v683 = vld [vmem:[%s648 + $0x38] sm:$0x1]
      %v684 = vsel %vm179, %v412, %v683
      %685 = vst [vmem:[%s648 + $0x38] sm:$0x1] %v684
      %v686 = vld [vmem:[%s648 + $0x3c] sm:$0xf]
      %v687 = vsel %vm650, %v419, %v686
      %688 = vst [vmem:[%s648 + $0x3c] sm:$0xf] %v687
      %689 = vst.msk [vmem:[%s648 + $0x40] sm:$0xf] %vm172, %v428
      %v690 = vld [vmem:[%s648 + $0x44] sm:$0x1]
      %v691 = vsel %vm179, %v429, %v690
      %692 = vst [vmem:[%s648 + $0x44] sm:$0x1] %v691
      %v693 = vld [vmem:[%s648 + $0x48] sm:$0xf]
      %v694 = vsel %vm650, %v436, %v693
      %695 = vst [vmem:[%s648 + $0x48] sm:$0xf] %v694
      %696 = vst.msk [vmem:[%s648 + $0x4c] sm:$0xf] %vm172, %v445
      %v697 = vld [vmem:[%s648 + $0x50] sm:$0x1]
      %v698 = vsel %vm179, %v446, %v697
      %699 = vst [vmem:[%s648 + $0x50] sm:$0x1] %v698
      %v700 = vld [vmem:[%s648 + $0x54] sm:$0xf]
      %v701 = vsel %vm650, %v453, %v700
      %702 = vst [vmem:[%s648 + $0x54] sm:$0xf] %v701
      %703 = vst.msk [vmem:[%s648 + $0x58] sm:$0xf] %vm172, %v462
      %v704 = vld [vmem:[%s648 + $0x5c] sm:$0x1]
      %v705 = vsel %vm179, %v463, %v704
      %706 = vst [vmem:[%s648 + $0x5c] sm:$0x1] %v705
      %v707 = vld [vmem:[%s648 + $0x60] sm:$0xf]
      %v708 = vsel %vm650, %v470, %v707
      %709 = vst [vmem:[%s648 + $0x60] sm:$0xf] %v708
      %710 = vst.msk [vmem:[%s648 + $0x64] sm:$0xf] %vm172, %v479
      %v711 = vld [vmem:[%s648 + $0x68] sm:$0x1]
      %v712 = vsel %vm179, %v480, %v711
      %713 = vst [vmem:[%s648 + $0x68] sm:$0x1] %v712
      %v714 = vld [vmem:[%s648 + $0x6c] sm:$0xf]
      %v715 = vsel %vm650, %v487, %v714
      %716 = vst [vmem:[%s648 + $0x6c] sm:$0xf] %v715
      %717 = vst.msk [vmem:[%s648 + $0x70] sm:$0xf] %vm172, %v496
      %v718 = vld [vmem:[%s648 + $0x74] sm:$0x1]
      %v719 = vsel %vm179, %v497, %v718
      %720 = vst [vmem:[%s648 + $0x74] sm:$0x1] %v719
      %v721 = vld [vmem:[%s648 + $0x78] sm:$0xf]
      %v722 = vsel %vm650, %v504, %v721
      %723 = vst [vmem:[%s648 + $0x78] sm:$0xf] %v722
      %724 = vst.msk [vmem:[%s648 + $0x7c] sm:$0xf] %vm172, %v513
      %v725 = vld [vmem:[%s648 + $0x80] sm:$0x1]
      %v726 = vsel %vm179, %v514, %v725
      %727 = vst [vmem:[%s648 + $0x80] sm:$0x1] %v726
      %v728 = vld [vmem:[%s648 + $0x84] sm:$0xf]
      %v729 = vsel %vm650, %v521, %v728
      %730 = vst [vmem:[%s648 + $0x84] sm:$0xf] %v729
      %731 = vst.msk [vmem:[%s648 + $0x88] sm:$0xf] %vm172, %v530
      %v732 = vld [vmem:[%s648 + $0x8c] sm:$0x1]
      %v733 = vsel %vm179, %v531, %v732
      %734 = vst [vmem:[%s648 + $0x8c] sm:$0x1] %v733
      %v735 = vld [vmem:[%s648 + $0x90] sm:$0xf]
      %v736 = vsel %vm650, %v538, %v735
      %737 = vst [vmem:[%s648 + $0x90] sm:$0xf] %v736
      %738 = vst.msk [vmem:[%s648 + $0x94] sm:$0xf] %vm172, %v547
      %v739 = vld [vmem:[%s648 + $0x98] sm:$0x1]
      %v740 = vsel %vm179, %v548, %v739
      %741 = vst [vmem:[%s648 + $0x98] sm:$0x1] %v740
      %v742 = vld [vmem:[%s648 + $0x9c] sm:$0xf]
      %v743 = vsel %vm650, %v555, %v742
      %744 = vst [vmem:[%s648 + $0x9c] sm:$0xf] %v743
      %745 = vst.msk [vmem:[%s648 + $0xa0] sm:$0xf] %vm172, %v564
      %v746 = vld [vmem:[%s648 + $0xa4] sm:$0x1]
      %v747 = vsel %vm179, %v565, %v746
      %748 = vst [vmem:[%s648 + $0xa4] sm:$0x1] %v747
      %v749 = vld [vmem:[%s648 + $0xa8] sm:$0xf]
      %v750 = vsel %vm650, %v572, %v749
      %751 = vst [vmem:[%s648 + $0xa8] sm:$0xf] %v750
      %752 = vst.msk [vmem:[%s648 + $0xac] sm:$0xf] %vm172, %v581
      %v753 = vld [vmem:[%s648 + $0xb0] sm:$0x1]
      %v754 = vsel %vm179, %v582, %v753
      %755 = vst [vmem:[%s648 + $0xb0] sm:$0x1] %v754
      %v756 = vld [vmem:[%s648 + $0xb4] sm:$0xf]
      %v757 = vsel %vm650, %v589, %v756
      %758 = vst [vmem:[%s648 + $0xb4] sm:$0xf] %v757
      %759 = vst.msk [vmem:[%s648 + $0xb8] sm:$0xf] %vm172, %v598
      %v760 = vld [vmem:[%s648 + $0xbc] sm:$0x1]
      %v761 = vsel %vm179, %v599, %v760
      %762 = vst [vmem:[%s648 + $0xbc] sm:$0x1] %v761
      %v763 = vld [vmem:[#allocation2] sm:$0xf]
      %v764 = vld [vmem:[#allocation2 + $0x4] sm:$0xf]
      %v765 = vld [vmem:[#allocation2 + $0xc] sm:$0xf]
      %v766 = vld [vmem:[#allocation2 + $0x10] sm:$0xf]
      %v767 = vld [vmem:[#allocation2 + $0x18] sm:$0xf]
      %v768 = vld [vmem:[#allocation2 + $0x1c] sm:$0xf]
      %v769 = vld [vmem:[#allocation2 + $0x24] sm:$0xf]
      %v770 = vld [vmem:[#allocation2 + $0x28] sm:$0xf]
      %v771 = vld [vmem:[#allocation2 + $0x30] sm:$0xf]
      %v772 = vld [vmem:[#allocation2 + $0x34] sm:$0xf]
      %v773 = vld [vmem:[#allocation2 + $0x3c] sm:$0xf]
      %v774 = vld [vmem:[#allocation2 + $0x40] sm:$0xf]
      %v775 = vld [vmem:[#allocation2 + $0x48] sm:$0xf]
      %v776 = vld [vmem:[#allocation2 + $0x4c] sm:$0xf]
      %v777 = vld [vmem:[#allocation2 + $0x54] sm:$0xf]
      %v778 = vld [vmem:[#allocation2 + $0x58] sm:$0xf]
      %v779 = vld [vmem:[#allocation2 + $0x60] sm:$0xf]
      %v780 = vld [vmem:[#allocation2 + $0x64] sm:$0xf]
      %v781 = vld [vmem:[#allocation2 + $0x6c] sm:$0xf]
      %v782 = vld [vmem:[#allocation2 + $0x70] sm:$0xf]
      %v783 = vld [vmem:[#allocation2 + $0x78] sm:$0xf]
      %v784 = vld [vmem:[#allocation2 + $0x7c] sm:$0xf]
      %v785 = vld [vmem:[#allocation2 + $0x84] sm:$0xf]
      %v786 = vld [vmem:[#allocation2 + $0x88] sm:$0xf]
      %v787 = vld [vmem:[#allocation2 + $0x90] sm:$0xf]
      %v788 = vld [vmem:[#allocation2 + $0x94] sm:$0xf]
      %v789 = vld [vmem:[#allocation2 + $0x9c] sm:$0xf]
      %v790 = vld [vmem:[#allocation2 + $0xa0] sm:$0xf]
      %v791 = vld [vmem:[#allocation2 + $0xa8] sm:$0xf]
      %v792 = vld [vmem:[#allocation2 + $0xac] sm:$0xf]
      %v793 = vld [vmem:[#allocation2 + $0xb4] sm:$0xf]
      %v794 = vld [vmem:[#allocation2 + $0xb8] sm:$0xf]
      %795 = vst.msk [vmem:[#allocation3] sm:$0xf] %vm172, %v763
      %796 = vst.msk [vmem:[#allocation3 + $0x4] sm:$0xf] %vm172, %v764
      %797 = vst.msk [vmem:[#allocation3 + $0x8] sm:$0xf] %vm172, %v765
      %798 = vst.msk [vmem:[#allocation3 + $0xc] sm:$0xf] %vm172, %v766
      %799 = vst.msk [vmem:[#allocation3 + $0x10] sm:$0xf] %vm172, %v767
      %800 = vst.msk [vmem:[#allocation3 + $0x14] sm:$0xf] %vm172, %v768
      %801 = vst.msk [vmem:[#allocation3 + $0x18] sm:$0xf] %vm172, %v769
      %802 = vst.msk [vmem:[#allocation3 + $0x1c] sm:$0xf] %vm172, %v770
      %803 = vst.msk [vmem:[#allocation3 + $0x20] sm:$0xf] %vm172, %v771
      %804 = vst.msk [vmem:[#allocation3 + $0x24] sm:$0xf] %vm172, %v772
      %805 = vst.msk [vmem:[#allocation3 + $0x28] sm:$0xf] %vm172, %v773
      %806 = vst.msk [vmem:[#allocation3 + $0x2c] sm:$0xf] %vm172, %v774
      %807 = vst.msk [vmem:[#allocation3 + $0x30] sm:$0xf] %vm172, %v775
      %808 = vst.msk [vmem:[#allocation3 + $0x34] sm:$0xf] %vm172, %v776
      %809 = vst.msk [vmem:[#allocation3 + $0x38] sm:$0xf] %vm172, %v777
      %810 = vst.msk [vmem:[#allocation3 + $0x3c] sm:$0xf] %vm172, %v778
      %811 = vst.msk [vmem:[#allocation3 + $0x40] sm:$0xf] %vm172, %v779
      %812 = vst.msk [vmem:[#allocation3 + $0x44] sm:$0xf] %vm172, %v780
      %813 = vst.msk [vmem:[#allocation3 + $0x48] sm:$0xf] %vm172, %v781
      %814 = vst.msk [vmem:[#allocation3 + $0x4c] sm:$0xf] %vm172, %v782
      %815 = vst.msk [vmem:[#allocation3 + $0x50] sm:$0xf] %vm172, %v783
      %816 = vst.msk [vmem:[#allocation3 + $0x54] sm:$0xf] %vm172, %v784
      %817 = vst.msk [vmem:[#allocation3 + $0x58] sm:$0xf] %vm172, %v785
      %818 = vst.msk [vmem:[#allocation3 + $0x5c] sm:$0xf] %vm172, %v786
      %819 = vst.msk [vmem:[#allocation3 + $0x60] sm:$0xf] %vm172, %v787
      %820 = vst.msk [vmem:[#allocation3 + $0x64] sm:$0xf] %vm172, %v788
      %821 = vst.msk [vmem:[#allocation3 + $0x68] sm:$0xf] %vm172, %v789
      %822 = vst.msk [vmem:[#allocation3 + $0x6c] sm:$0xf] %vm172, %v790
      %823 = vst.msk [vmem:[#allocation3 + $0x70] sm:$0xf] %vm172, %v791
      %824 = vst.msk [vmem:[#allocation3 + $0x74] sm:$0xf] %vm172, %v792
      %825 = vst.msk [vmem:[#allocation3 + $0x78] sm:$0xf] %vm172, %v793
      %826 = vst.msk [vmem:[#allocation3 + $0x7c] sm:$0xf] %vm172, %v794
      %v827 = vld [vmem:[#allocation2] sm:$0xf]
      %v828 = vld [vmem:[#allocation2 + $0x4] sm:$0xf]
      %v829 = vld [vmem:[#allocation2 + $0x8] sm:$0x1]
      %v830 = vld [vmem:[#allocation2 + $0xc] sm:$0xf]
      %v831 = vld [vmem:[#allocation2 + $0x10] sm:$0xf]
      %v832 = vld [vmem:[#allocation2 + $0x14] sm:$0x1]
      %v833 = vld [vmem:[#allocation2 + $0x18] sm:$0xf]
      %v834 = vld [vmem:[#allocation2 + $0x1c] sm:$0xf]
      %v835 = vld [vmem:[#allocation2 + $0x20] sm:$0x1]
      %v836 = vld [vmem:[#allocation2 + $0x24] sm:$0xf]
      %v837 = vld [vmem:[#allocation2 + $0x28] sm:$0xf]
      %v838 = vld [vmem:[#allocation2 + $0x2c] sm:$0x1]
      %v839 = vld [vmem:[#allocation2 + $0x30] sm:$0xf]
      %v840 = vld [vmem:[#allocation2 + $0x34] sm:$0xf]
      %v841 = vld [vmem:[#allocation2 + $0x38] sm:$0x1]
      %v842 = vld [vmem:[#allocation2 + $0x3c] sm:$0xf]
      %v843 = vld [vmem:[#allocation2 + $0x40] sm:$0xf]
      %v844 = vld [vmem:[#allocation2 + $0x44] sm:$0x1]
      %v845 = vld [vmem:[#allocation2 + $0x48] sm:$0xf]
      %v846 = vld [vmem:[#allocation2 + $0x4c] sm:$0xf]
      %v847 = vld [vmem:[#allocation2 + $0x50] sm:$0x1]
      %v848 = vld [vmem:[#allocation2 + $0x54] sm:$0xf]
      %v849 = vld [vmem:[#allocation2 + $0x58] sm:$0xf]
      %v850 = vld [vmem:[#allocation2 + $0x5c] sm:$0x1]
      %v851 = vld [vmem:[#allocation2 + $0x60] sm:$0xf]
      %v852 = vld [vmem:[#allocation2 + $0x64] sm:$0xf]
      %v853 = vld [vmem:[#allocation2 + $0x68] sm:$0x1]
      %v854 = vld [vmem:[#allocation2 + $0x6c] sm:$0xf]
      %v855 = vld [vmem:[#allocation2 + $0x70] sm:$0xf]
      %v856 = vld [vmem:[#allocation2 + $0x74] sm:$0x1]
      %v857 = vld [vmem:[#allocation2 + $0x78] sm:$0xf]
      %v858 = vld [vmem:[#allocation2 + $0x7c] sm:$0xf]
      %v859 = vld [vmem:[#allocation2 + $0x80] sm:$0x1]
      %v860 = vld [vmem:[#allocation2 + $0x84] sm:$0xf]
      %v861 = vld [vmem:[#allocation2 + $0x88] sm:$0xf]
      %v862 = vld [vmem:[#allocation2 + $0x8c] sm:$0x1]
      %v863 = vld [vmem:[#allocation2 + $0x90] sm:$0xf]
      %v864 = vld [vmem:[#allocation2 + $0x94] sm:$0xf]
      %v865 = vld [vmem:[#allocation2 + $0x98] sm:$0x1]
      %v866 = vld [vmem:[#allocation2 + $0x9c] sm:$0xf]
      %v867 = vld [vmem:[#allocation2 + $0xa0] sm:$0xf]
      %v868 = vld [vmem:[#allocation2 + $0xa4] sm:$0x1]
      %v869 = vld [vmem:[#allocation2 + $0xa8] sm:$0xf]
      %v870 = vld [vmem:[#allocation2 + $0xac] sm:$0xf]
      %v871 = vld [vmem:[#allocation2 + $0xb0] sm:$0x1]
      %v872 = vld [vmem:[#allocation2 + $0xb4] sm:$0xf]
      %v873 = vld [vmem:[#allocation2 + $0xb8] sm:$0xf]
      %v874 = vld [vmem:[#allocation2 + $0xbc] sm:$0x1]
      %vm875 = vsmask.f32 3328
      %vm876 = vsmask.f32 7440
      %vm877 = vmor %vm875, %vm876
      %v879 = vshrl.u32 %v827, 16
      %v881 = vrot.slane %v879, 4
      %v882 = vshll.u32 %v827, 16
      %v884 = vrot.slane %v882, 5
      %v885 = vor.u32 %v881, %v884
      %v886 = vrot.slane %v885, 4
      %v888 = vshll.u32 %v828, 16
      %v890 = vrot.slane %v888, 5
      %v891 = vsel %vm877, %v886, %v890
      %v892 = vshrl.u32 %v828, 16
      %v894 = vrot.slane %v892, 4
      %v895 = vor.u32 %v894, %v890
      %v896 = vrot.slane %v895, 4
      %v898 = vshll.u32 %v829, 16
      %v900 = vrot.slane %v898, 5
      %v901 = vsel %vm877, %v896, %v900
      %v903 = vshrl.u32 %v830, 16
      %v905 = vrot.slane %v903, 4
      %v906 = vshll.u32 %v830, 16
      %v908 = vrot.slane %v906, 5
      %v909 = vor.u32 %v905, %v908
      %v910 = vrot.slane %v909, 4
      %v912 = vshll.u32 %v831, 16
      %v914 = vrot.slane %v912, 5
      %v915 = vsel %vm877, %v910, %v914
      %v916 = vshrl.u32 %v831, 16
      %v918 = vrot.slane %v916, 4
      %v919 = vor.u32 %v918, %v914
      %v920 = vrot.slane %v919, 4
      %v922 = vshll.u32 %v832, 16
      %v924 = vrot.slane %v922, 5
      %v925 = vsel %vm877, %v920, %v924
      %v927 = vshrl.u32 %v833, 16
      %v929 = vrot.slane %v927, 4
      %v930 = vshll.u32 %v833, 16
      %v932 = vrot.slane %v930, 5
      %v933 = vor.u32 %v929, %v932
      %v934 = vrot.slane %v933, 4
      %v936 = vshll.u32 %v834, 16
      %v938 = vrot.slane %v936, 5
      %v939 = vsel %vm877, %v934, %v938
      %v940 = vshrl.u32 %v834, 16
      %v942 = vrot.slane %v940, 4
      %v943 = vor.u32 %v942, %v938
      %v944 = vrot.slane %v943, 4
      %v946 = vshll.u32 %v835, 16
      %v948 = vrot.slane %v946, 5
      %v949 = vsel %vm877, %v944, %v948
      %v951 = vshrl.u32 %v836, 16
      %v953 = vrot.slane %v951, 4
      %v954 = vshll.u32 %v836, 16
      %v956 = vrot.slane %v954, 5
      %v957 = vor.u32 %v953, %v956
      %v958 = vrot.slane %v957, 4
      %v960 = vshll.u32 %v837, 16
      %v962 = vrot.slane %v960, 5
      %v963 = vsel %vm877, %v958, %v962
      %v964 = vshrl.u32 %v837, 16
      %v966 = vrot.slane %v964, 4
      %v967 = vor.u32 %v966, %v962
      %v968 = vrot.slane %v967, 4
      %v970 = vshll.u32 %v838, 16
      %v972 = vrot.slane %v970, 5
      %v973 = vsel %vm877, %v968, %v972
      %v975 = vshrl.u32 %v839, 16
      %v977 = vrot.slane %v975, 4
      %v978 = vshll.u32 %v839, 16
      %v980 = vrot.slane %v978, 5
      %v981 = vor.u32 %v977, %v980
      %v982 = vrot.slane %v981, 4
      %v984 = vshll.u32 %v840, 16
      %v986 = vrot.slane %v984, 5
      %v987 = vsel %vm877, %v982, %v986
      %v988 = vshrl.u32 %v840, 16
      %v990 = vrot.slane %v988, 4
      %v991 = vor.u32 %v990, %v986
      %v992 = vrot.slane %v991, 4
      %v994 = vshll.u32 %v841, 16
      %v996 = vrot.slane %v994, 5
      %v997 = vsel %vm877, %v992, %v996
      %v999 = vshrl.u32 %v842, 16
      %v1001 = vrot.slane %v999, 4
      %v1002 = vshll.u32 %v842, 16
      %v1004 = vrot.slane %v1002, 5
      %v1005 = vor.u32 %v1001, %v1004
      %v1006 = vrot.slane %v1005, 4
      %v1008 = vshll.u32 %v843, 16
      %v1010 = vrot.slane %v1008, 5
      %v1011 = vsel %vm877, %v1006, %v1010
      %v1012 = vshrl.u32 %v843, 16
      %v1014 = vrot.slane %v1012, 4
      %v1015 = vor.u32 %v1014, %v1010
      %v1016 = vrot.slane %v1015, 4
      %v1018 = vshll.u32 %v844, 16
      %v1020 = vrot.slane %v1018, 5
      %v1021 = vsel %vm877, %v1016, %v1020
      %v1023 = vshrl.u32 %v845, 16
      %v1025 = vrot.slane %v1023, 4
      %v1026 = vshll.u32 %v845, 16
      %v1028 = vrot.slane %v1026, 5
      %v1029 = vor.u32 %v1025, %v1028
      %v1030 = vrot.slane %v1029, 4
      %v1032 = vshll.u32 %v846, 16
      %v1034 = vrot.slane %v1032, 5
      %v1035 = vsel %vm877, %v1030, %v1034
      %v1036 = vshrl.u32 %v846, 16
      %v1038 = vrot.slane %v1036, 4
      %v1039 = vor.u32 %v1038, %v1034
      %v1040 = vrot.slane %v1039, 4
      %v1042 = vshll.u32 %v847, 16
      %v1044 = vrot.slane %v1042, 5
      %v1045 = vsel %vm877, %v1040, %v1044
      %v1047 = vshrl.u32 %v848, 16
      %v1049 = vrot.slane %v1047, 4
      %v1050 = vshll.u32 %v848, 16
      %v1052 = vrot.slane %v1050, 5
      %v1053 = vor.u32 %v1049, %v1052
      %v1054 = vrot.slane %v1053, 4
      %v1056 = vshll.u32 %v849, 16
      %v1058 = vrot.slane %v1056, 5
      %v1059 = vsel %vm877, %v1054, %v1058
      %v1060 = vshrl.u32 %v849, 16
      %v1062 = vrot.slane %v1060, 4
      %v1063 = vor.u32 %v1062, %v1058
      %v1064 = vrot.slane %v1063, 4
      %v1066 = vshll.u32 %v850, 16
      %v1068 = vrot.slane %v1066, 5
      %v1069 = vsel %vm877, %v1064, %v1068
      %v1071 = vshrl.u32 %v851, 16
      %v1073 = vrot.slane %v1071, 4
      %v1074 = vshll.u32 %v851, 16
      %v1076 = vrot.slane %v1074, 5
      %v1077 = vor.u32 %v1073, %v1076
      %v1078 = vrot.slane %v1077, 4
      %v1080 = vshll.u32 %v852, 16
      %v1082 = vrot.slane %v1080, 5
      %v1083 = vsel %vm877, %v1078, %v1082
      %v1084 = vshrl.u32 %v852, 16
      %v1086 = vrot.slane %v1084, 4
      %v1087 = vor.u32 %v1086, %v1082
      %v1088 = vrot.slane %v1087, 4
      %v1090 = vshll.u32 %v853, 16
      %v1092 = vrot.slane %v1090, 5
      %v1093 = vsel %vm877, %v1088, %v1092
      %v1095 = vshrl.u32 %v854, 16
      %v1097 = vrot.slane %v1095, 4
      %v1098 = vshll.u32 %v854, 16
      %v1100 = vrot.slane %v1098, 5
      %v1101 = vor.u32 %v1097, %v1100
      %v1102 = vrot.slane %v1101, 4
      %v1104 = vshll.u32 %v855, 16
      %v1106 = vrot.slane %v1104, 5
      %v1107 = vsel %vm877, %v1102, %v1106
      %v1108 = vshrl.u32 %v855, 16
      %v1110 = vrot.slane %v1108, 4
      %v1111 = vor.u32 %v1110, %v1106
      %v1112 = vrot.slane %v1111, 4
      %v1114 = vshll.u32 %v856, 16
      %v1116 = vrot.slane %v1114, 5
      %v1117 = vsel %vm877, %v1112, %v1116
      %v1119 = vshrl.u32 %v857, 16
      %v1121 = vrot.slane %v1119, 4
      %v1122 = vshll.u32 %v857, 16
      %v1124 = vrot.slane %v1122, 5
      %v1125 = vor.u32 %v1121, %v1124
      %v1126 = vrot.slane %v1125, 4
      %v1128 = vshll.u32 %v858, 16
      %v1130 = vrot.slane %v1128, 5
      %v1131 = vsel %vm877, %v1126, %v1130
      %v1132 = vshrl.u32 %v858, 16
      %v1134 = vrot.slane %v1132, 4
      %v1135 = vor.u32 %v1134, %v1130
      %v1136 = vrot.slane %v1135, 4
      %v1138 = vshll.u32 %v859, 16
      %v1140 = vrot.slane %v1138, 5
      %v1141 = vsel %vm877, %v1136, %v1140
      %v1143 = vshrl.u32 %v860, 16
      %v1145 = vrot.slane %v1143, 4
      %v1146 = vshll.u32 %v860, 16
      %v1148 = vrot.slane %v1146, 5
      %v1149 = vor.u32 %v1145, %v1148
      %v1150 = vrot.slane %v1149, 4
      %v1152 = vshll.u32 %v861, 16
      %v1154 = vrot.slane %v1152, 5
      %v1155 = vsel %vm877, %v1150, %v1154
      %v1156 = vshrl.u32 %v861, 16
      %v1158 = vrot.slane %v1156, 4
      %v1159 = vor.u32 %v1158, %v1154
      %v1160 = vrot.slane %v1159, 4
      %v1162 = vshll.u32 %v862, 16
      %v1164 = vrot.slane %v1162, 5
      %v1165 = vsel %vm877, %v1160, %v1164
      %v1167 = vshrl.u32 %v863, 16
      %v1169 = vrot.slane %v1167, 4
      %v1170 = vshll.u32 %v863, 16
      %v1172 = vrot.slane %v1170, 5
      %v1173 = vor.u32 %v1169, %v1172
      %v1174 = vrot.slane %v1173, 4
      %v1176 = vshll.u32 %v864, 16
      %v1178 = vrot.slane %v1176, 5
      %v1179 = vsel %vm877, %v1174, %v1178
      %v1180 = vshrl.u32 %v864, 16
      %v1182 = vrot.slane %v1180, 4
      %v1183 = vor.u32 %v1182, %v1178
      %v1184 = vrot.slane %v1183, 4
      %v1186 = vshll.u32 %v865, 16
      %v1188 = vrot.slane %v1186, 5
      %v1189 = vsel %vm877, %v1184, %v1188
      %v1191 = vshrl.u32 %v866, 16
      %v1193 = vrot.slane %v1191, 4
      %v1194 = vshll.u32 %v866, 16
      %v1196 = vrot.slane %v1194, 5
      %v1197 = vor.u32 %v1193, %v1196
      %v1198 = vrot.slane %v1197, 4
      %v1200 = vshll.u32 %v867, 16
      %v1202 = vrot.slane %v1200, 5
      %v1203 = vsel %vm877, %v1198, %v1202
      %v1204 = vshrl.u32 %v867, 16
      %v1206 = vrot.slane %v1204, 4
      %v1207 = vor.u32 %v1206, %v1202
      %v1208 = vrot.slane %v1207, 4
      %v1210 = vshll.u32 %v868, 16
      %v1212 = vrot.slane %v1210, 5
      %v1213 = vsel %vm877, %v1208, %v1212
      %v1215 = vshrl.u32 %v869, 16
      %v1217 = vrot.slane %v1215, 4
      %v1218 = vshll.u32 %v869, 16
      %v1220 = vrot.slane %v1218, 5
      %v1221 = vor.u32 %v1217, %v1220
      %v1222 = vrot.slane %v1221, 4
      %v1224 = vshll.u32 %v870, 16
      %v1226 = vrot.slane %v1224, 5
      %v1227 = vsel %vm877, %v1222, %v1226
      %v1228 = vshrl.u32 %v870, 16
      %v1230 = vrot.slane %v1228, 4
      %v1231 = vor.u32 %v1230, %v1226
      %v1232 = vrot.slane %v1231, 4
      %v1234 = vshll.u32 %v871, 16
      %v1236 = vrot.slane %v1234, 5
      %v1237 = vsel %vm877, %v1232, %v1236
      %v1239 = vshrl.u32 %v872, 16
      %v1241 = vrot.slane %v1239, 4
      %v1242 = vshll.u32 %v872, 16
      %v1244 = vrot.slane %v1242, 5
      %v1245 = vor.u32 %v1241, %v1244
      %v1246 = vrot.slane %v1245, 4
      %v1248 = vshll.u32 %v873, 16
      %v1250 = vrot.slane %v1248, 5
      %v1251 = vsel %vm877, %v1246, %v1250
      %v1252 = vshrl.u32 %v873, 16
      %v1254 = vrot.slane %v1252, 4
      %v1255 = vor.u32 %v1254, %v1250
      %v1256 = vrot.slane %v1255, 4
      %v1258 = vshll.u32 %v874, 16
      %v1260 = vrot.slane %v1258, 5
      %v1261 = vsel %vm877, %v1256, %v1260
      %1262 = vrot.lane.b32.xlu0 %v891, 4
      %v1263 = vpop.permute.xlu0 %1262
      %1264 = vrot.lane.b32.xlu0 %v901, 4
      %v1265 = vpop.permute.xlu0 %1264
      %1266 = vrot.lane.b32.xlu0 %v915, 4
      %v1267 = vpop.permute.xlu0 %1266
      %1268 = vrot.lane.b32.xlu0 %v925, 4
      %v1269 = vpop.permute.xlu0 %1268
      %1270 = vrot.lane.b32.xlu0 %v939, 4
      %v1271 = vpop.permute.xlu0 %1270
      %1272 = vrot.lane.b32.xlu0 %v949, 4
      %v1273 = vpop.permute.xlu0 %1272
      %1274 = vrot.lane.b32.xlu0 %v963, 4
      %v1275 = vpop.permute.xlu0 %1274
      %1276 = vrot.lane.b32.xlu0 %v973, 4
      %v1277 = vpop.permute.xlu0 %1276
      %1278 = vrot.lane.b32.xlu0 %v987, 4
      %v1279 = vpop.permute.xlu0 %1278
      %1280 = vrot.lane.b32.xlu0 %v997, 4
      %v1281 = vpop.permute.xlu0 %1280
      %1282 = vrot.lane.b32.xlu0 %v1011, 4
      %v1283 = vpop.permute.xlu0 %1282
      %1284 = vrot.lane.b32.xlu0 %v1021, 4
      %v1285 = vpop.permute.xlu0 %1284
      %1286 = vrot.lane.b32.xlu0 %v1035, 4
      %v1287 = vpop.permute.xlu0 %1286
      %1288 = vrot.lane.b32.xlu0 %v1045, 4
      %v1289 = vpop.permute.xlu0 %1288
      %1290 = vrot.lane.b32.xlu0 %v1059, 4
      %v1291 = vpop.permute.xlu0 %1290
      %1292 = vrot.lane.b32.xlu0 %v1069, 4
      %v1293 = vpop.permute.xlu0 %1292
      %1294 = vrot.lane.b32.xlu0 %v1083, 4
      %v1295 = vpop.permute.xlu0 %1294
      %1296 = vrot.lane.b32.xlu0 %v1093, 4
      %v1297 = vpop.permute.xlu0 %1296
      %1298 = vrot.lane.b32.xlu0 %v1107, 4
      %v1299 = vpop.permute.xlu0 %1298
      %1300 = vrot.lane.b32.xlu0 %v1117, 4
      %v1301 = vpop.permute.xlu0 %1300
      %1302 = vrot.lane.b32.xlu0 %v1131, 4
      %v1303 = vpop.permute.xlu0 %1302
      %1304 = vrot.lane.b32.xlu0 %v1141, 4
      %v1305 = vpop.permute.xlu0 %1304
      %1306 = vrot.lane.b32.xlu0 %v1155, 4
      %v1307 = vpop.permute.xlu0 %1306
      %1308 = vrot.lane.b32.xlu0 %v1165, 4
      %v1309 = vpop.permute.xlu0 %1308
      %1310 = vrot.lane.b32.xlu0 %v1179, 4
      %v1311 = vpop.permute.xlu0 %1310
      %1312 = vrot.lane.b32.xlu0 %v1189, 4
      %v1313 = vpop.permute.xlu0 %1312
      %1314 = vrot.lane.b32.xlu0 %v1203, 4
      %v1315 = vpop.permute.xlu0 %1314
      %1316 = vrot.lane.b32.xlu0 %v1213, 4
      %v1317 = vpop.permute.xlu0 %1316
      %1318 = vrot.lane.b32.xlu0 %v1227, 4
      %v1319 = vpop.permute.xlu0 %1318
      %1320 = vrot.lane.b32.xlu0 %v1237, 4
      %v1321 = vpop.permute.xlu0 %1320
      %1322 = vrot.lane.b32.xlu0 %v1251, 4
      %v1323 = vpop.permute.xlu0 %1322
      %1324 = vrot.lane.b32.xlu0 %v1261, 4
      %v1325 = vpop.permute.xlu0 %1324
      %vm1358 = vcmask 60448
      %1359 = vst.msk [vmem:[#allocation3] sm:$0xf] %vm1358, %v1263
      %1360 = vst.msk [vmem:[#allocation3 + $0x4] sm:$0xf] %vm1358, %v1265
      %1361 = vst.msk [vmem:[#allocation3 + $0x8] sm:$0xf] %vm1358, %v1267
      %1362 = vst.msk [vmem:[#allocation3 + $0xc] sm:$0xf] %vm1358, %v1269
      %1363 = vst.msk [vmem:[#allocation3 + $0x10] sm:$0xf] %vm1358, %v1271
      %1364 = vst.msk [vmem:[#allocation3 + $0x14] sm:$0xf] %vm1358, %v1273
      %1365 = vst.msk [vmem:[#allocation3 + $0x18] sm:$0xf] %vm1358, %v1275
      %1366 = vst.msk [vmem:[#allocation3 + $0x1c] sm:$0xf] %vm1358, %v1277
      %1367 = vst.msk [vmem:[#allocation3 + $0x20] sm:$0xf] %vm1358, %v1279
      %1368 = vst.msk [vmem:[#allocation3 + $0x24] sm:$0xf] %vm1358, %v1281
      %1369 = vst.msk [vmem:[#allocation3 + $0x28] sm:$0xf] %vm1358, %v1283
      %1370 = vst.msk [vmem:[#allocation3 + $0x2c] sm:$0xf] %vm1358, %v1285
      %1371 = vst.msk [vmem:[#allocation3 + $0x30] sm:$0xf] %vm1358, %v1287
      %1372 = vst.msk [vmem:[#allocation3 + $0x34] sm:$0xf] %vm1358, %v1289
      %1373 = vst.msk [vmem:[#allocation3 + $0x38] sm:$0xf] %vm1358, %v1291
      %1374 = vst.msk [vmem:[#allocation3 + $0x3c] sm:$0xf] %vm1358, %v1293
      %1375 = vst.msk [vmem:[#allocation3 + $0x40] sm:$0xf] %vm1358, %v1295
      %1376 = vst.msk [vmem:[#allocation3 + $0x44] sm:$0xf] %vm1358, %v1297
      %1377 = vst.msk [vmem:[#allocation3 + $0x48] sm:$0xf] %vm1358, %v1299
      %1378 = vst.msk [vmem:[#allocation3 + $0x4c] sm:$0xf] %vm1358, %v1301
      %1379 = vst.msk [vmem:[#allocation3 + $0x50] sm:$0xf] %vm1358, %v1303
      %1380 = vst.msk [vmem:[#allocation3 + $0x54] sm:$0xf] %vm1358, %v1305
      %1381 = vst.msk [vmem:[#allocation3 + $0x58] sm:$0xf] %vm1358, %v1307
      %1382 = vst.msk [vmem:[#allocation3 + $0x5c] sm:$0xf] %vm1358, %v1309
      %1383 = vst.msk [vmem:[#allocation3 + $0x60] sm:$0xf] %vm1358, %v1311
      %1384 = vst.msk [vmem:[#allocation3 + $0x64] sm:$0xf] %vm1358, %v1313
      %1385 = vst.msk [vmem:[#allocation3 + $0x68] sm:$0xf] %vm1358, %v1315
      %1386 = vst.msk [vmem:[#allocation3 + $0x6c] sm:$0xf] %vm1358, %v1317
      %1387 = vst.msk [vmem:[#allocation3 + $0x70] sm:$0xf] %vm1358, %v1319
      %1388 = vst.msk [vmem:[#allocation3 + $0x74] sm:$0xf] %vm1358, %v1321
      %1389 = vst.msk [vmem:[#allocation3 + $0x78] sm:$0xf] %vm1358, %v1323
      %1390 = vst.msk [vmem:[#allocation3 + $0x7c] sm:$0xf] %vm1358, %v1325
      %v1391 = vld [vmem:[#allocation2] sm:$0xe]
      %v1392 = vld [vmem:[#allocation2 + $0x4] sm:$0xf]
      %v1393 = vld [vmem:[#allocation2 + $0x8] sm:$0x1]
      %v1394 = vld [vmem:[#allocation2 + $0xc] sm:$0xe]
      %v1395 = vld [vmem:[#allocation2 + $0x10] sm:$0xf]
      %v1396 = vld [vmem:[#allocation2 + $0x14] sm:$0x1]
      %v1397 = vld [vmem:[#allocation2 + $0x18] sm:$0xe]
      %v1398 = vld [vmem:[#allocation2 + $0x1c] sm:$0xf]
      %v1399 = vld [vmem:[#allocation2 + $0x20] sm:$0x1]
      %v1400 = vld [vmem:[#allocation2 + $0x24] sm:$0xe]
      %v1401 = vld [vmem:[#allocation2 + $0x28] sm:$0xf]
      %v1402 = vld [vmem:[#allocation2 + $0x2c] sm:$0x1]
      %v1403 = vld [vmem:[#allocation2 + $0x30] sm:$0xe]
      %v1404 = vld [vmem:[#allocation2 + $0x34] sm:$0xf]
      %v1405 = vld [vmem:[#allocation2 + $0x38] sm:$0x1]
      %v1406 = vld [vmem:[#allocation2 + $0x3c] sm:$0xe]
      %v1407 = vld [vmem:[#allocation2 + $0x40] sm:$0xf]
      %v1408 = vld [vmem:[#allocation2 + $0x44] sm:$0x1]
      %v1409 = vld [vmem:[#allocation2 + $0x48] sm:$0xe]
      %v1410 = vld [vmem:[#allocation2 + $0x4c] sm:$0xf]
      %v1411 = vld [vmem:[#allocation2 + $0x50] sm:$0x1]
      %v1412 = vld [vmem:[#allocation2 + $0x54] sm:$0xe]
      %v1413 = vld [vmem:[#allocation2 + $0x58] sm:$0xf]
      %v1414 = vld [vmem:[#allocation2 + $0x5c] sm:$0x1]
      %v1415 = vld [vmem:[#allocation2 + $0x60] sm:$0xe]
      %v1416 = vld [vmem:[#allocation2 + $0x64] sm:$0xf]
      %v1417 = vld [vmem:[#allocation2 + $0x68] sm:$0x1]
      %v1418 = vld [vmem:[#allocation2 + $0x6c] sm:$0xe]
      %v1419 = vld [vmem:[#allocation2 + $0x70] sm:$0xf]
      %v1420 = vld [vmem:[#allocation2 + $0x74] sm:$0x1]
      %v1421 = vld [vmem:[#allocation2 + $0x78] sm:$0xe]
      %v1422 = vld [vmem:[#allocation2 + $0x7c] sm:$0xf]
      %v1423 = vld [vmem:[#allocation2 + $0x80] sm:$0x1]
      %v1424 = vld [vmem:[#allocation2 + $0x84] sm:$0xe]
      %v1425 = vld [vmem:[#allocation2 + $0x88] sm:$0xf]
      %v1426 = vld [vmem:[#allocation2 + $0x8c] sm:$0x1]
      %v1427 = vld [vmem:[#allocation2 + $0x90] sm:$0xe]
      %v1428 = vld [vmem:[#allocation2 + $0x94] sm:$0xf]
      %v1429 = vld [vmem:[#allocation2 + $0x98] sm:$0x1]
      %v1430 = vld [vmem:[#allocation2 + $0x9c] sm:$0xe]
      %v1431 = vld [vmem:[#allocation2 + $0xa0] sm:$0xf]
      %v1432 = vld [vmem:[#allocation2 + $0xa4] sm:$0x1]
      %v1433 = vld [vmem:[#allocation2 + $0xa8] sm:$0xe]
      %v1434 = vld [vmem:[#allocation2 + $0xac] sm:$0xf]
      %v1435 = vld [vmem:[#allocation2 + $0xb0] sm:$0x1]
      %v1436 = vld [vmem:[#allocation2 + $0xb4] sm:$0xe]
      %v1437 = vld [vmem:[#allocation2 + $0xb8] sm:$0xf]
      %v1438 = vld [vmem:[#allocation2 + $0xbc] sm:$0x1]
      %vm1487 = vcmask 1042432
      %vm1488 = vcmask 1046532
      %vm1489 = vmor %vm1487, %vm1488
      %v1490 = vrot.slane %v1391, 5
      %v1491 = vrot.slane %v1490, 4
      %v1492 = vrot.slane %v1392, 5
      %v1493 = vsel %vm1489, %v1491, %v1492
      %v1494 = vrot.slane %v1492, 4
      %v1495 = vrot.slane %v1393, 5
      %v1496 = vsel %vm1489, %v1494, %v1495
      %v1497 = vrot.slane %v1394, 5
      %v1498 = vrot.slane %v1497, 4
      %v1499 = vrot.slane %v1395, 5
      %v1500 = vsel %vm1489, %v1498, %v1499
      %v1501 = vrot.slane %v1499, 4
      %v1502 = vrot.slane %v1396, 5
      %v1503 = vsel %vm1489, %v1501, %v1502
      %v1504 = vrot.slane %v1397, 5
      %v1505 = vrot.slane %v1504, 4
      %v1506 = vrot.slane %v1398, 5
      %v1507 = vsel %vm1489, %v1505, %v1506
      %v1508 = vrot.slane %v1506, 4
      %v1509 = vrot.slane %v1399, 5
      %v1510 = vsel %vm1489, %v1508, %v1509
      %v1511 = vrot.slane %v1400, 5
      %v1512 = vrot.slane %v1511, 4
      %v1513 = vrot.slane %v1401, 5
      %v1514 = vsel %vm1489, %v1512, %v1513
      %v1515 = vrot.slane %v1513, 4
      %v1516 = vrot.slane %v1402, 5
      %v1517 = vsel %vm1489, %v1515, %v1516
      %v1518 = vrot.slane %v1403, 5
      %v1519 = vrot.slane %v1518, 4
      %v1520 = vrot.slane %v1404, 5
      %v1521 = vsel %vm1489, %v1519, %v1520
      %v1522 = vrot.slane %v1520, 4
      %v1523 = vrot.slane %v1405, 5
      %v1524 = vsel %vm1489, %v1522, %v1523
      %v1525 = vrot.slane %v1406, 5
      %v1526 = vrot.slane %v1525, 4
      %v1527 = vrot.slane %v1407, 5
      %v1528 = vsel %vm1489, %v1526, %v1527
      %v1529 = vrot.slane %v1527, 4
      %v1530 = vrot.slane %v1408, 5
      %v1531 = vsel %vm1489, %v1529, %v1530
      %v1532 = vrot.slane %v1409, 5
      %v1533 = vrot.slane %v1532, 4
      %v1534 = vrot.slane %v1410, 5
      %v1535 = vsel %vm1489, %v1533, %v1534
      %v1536 = vrot.slane %v1534, 4
      %v1537 = vrot.slane %v1411, 5
      %v1538 = vsel %vm1489, %v1536, %v1537
      %v1539 = vrot.slane %v1412, 5
      %v1540 = vrot.slane %v1539, 4
      %v1541 = vrot.slane %v1413, 5
      %v1542 = vsel %vm1489, %v1540, %v1541
      %v1543 = vrot.slane %v1541, 4
      %v1544 = vrot.slane %v1414, 5
      %v1545 = vsel %vm1489, %v1543, %v1544
      %v1546 = vrot.slane %v1415, 5
      %v1547 = vrot.slane %v1546, 4
      %v1548 = vrot.slane %v1416, 5
      %v1549 = vsel %vm1489, %v1547, %v1548
      %v1550 = vrot.slane %v1548, 4
      %v1551 = vrot.slane %v1417, 5
      %v1552 = vsel %vm1489, %v1550, %v1551
      %v1553 = vrot.slane %v1418, 5
      %v1554 = vrot.slane %v1553, 4
      %v1555 = vrot.slane %v1419, 5
      %v1556 = vsel %vm1489, %v1554, %v1555
      %v1557 = vrot.slane %v1555, 4
      %v1558 = vrot.slane %v1420, 5
      %v1559 = vsel %vm1489, %v1557, %v1558
      %v1560 = vrot.slane %v1421, 5
      %v1561 = vrot.slane %v1560, 4
      %v1562 = vrot.slane %v1422, 5
      %v1563 = vsel %vm1489, %v1561, %v1562
      %v1564 = vrot.slane %v1562, 4
      %v1565 = vrot.slane %v1423, 5
      %v1566 = vsel %vm1489, %v1564, %v1565
      %v1567 = vrot.slane %v1424, 5
      %v1568 = vrot.slane %v1567, 4
      %v1569 = vrot.slane %v1425, 5
      %v1570 = vsel %vm1489, %v1568, %v1569
      %v1571 = vrot.slane %v1569, 4
      %v1572 = vrot.slane %v1426, 5
      %v1573 = vsel %vm1489, %v1571, %v1572
      %v1574 = vrot.slane %v1427, 5
      %v1575 = vrot.slane %v1574, 4
      %v1576 = vrot.slane %v1428, 5
      %v1577 = vsel %vm1489, %v1575, %v1576
      %v1578 = vrot.slane %v1576, 4
      %v1579 = vrot.slane %v1429, 5
      %v1580 = vsel %vm1489, %v1578, %v1579
      %v1581 = vrot.slane %v1430, 5
      %v1582 = vrot.slane %v1581, 4
      %v1583 = vrot.slane %v1431, 5
      %v1584 = vsel %vm1489, %v1582, %v1583
      %v1585 = vrot.slane %v1583, 4
      %v1586 = vrot.slane %v1432, 5
      %v1587 = vsel %vm1489, %v1585, %v1586
      %v1588 = vrot.slane %v1433, 5
      %v1589 = vrot.slane %v1588, 4
      %v1590 = vrot.slane %v1434, 5
      %v1591 = vsel %vm1489, %v1589, %v1590
      %v1592 = vrot.slane %v1590, 4
      %v1593 = vrot.slane %v1435, 5
      %v1594 = vsel %vm1489, %v1592, %v1593
      %v1595 = vrot.slane %v1436, 5
      %v1596 = vrot.slane %v1595, 4
      %v1597 = vrot.slane %v1437, 5
      %v1598 = vsel %vm1489, %v1596, %v1597
      %v1599 = vrot.slane %v1597, 4
      %v1600 = vrot.slane %v1438, 5
      %v1601 = vsel %vm1489, %v1599, %v1600
      %1602 = vrot.lane.b32.xlu0 %v1493, 8
      %v1603 = vpop.permute.xlu0 %1602
      %1604 = vrot.lane.b32.xlu0 %v1496, 8
      %v1605 = vpop.permute.xlu0 %1604
      %1606 = vrot.lane.b32.xlu0 %v1500, 8
      %v1607 = vpop.permute.xlu0 %1606
      %1608 = vrot.lane.b32.xlu0 %v1503, 8
      %v1609 = vpop.permute.xlu0 %1608
      %1610 = vrot.lane.b32.xlu0 %v1507, 8
      %v1611 = vpop.permute.xlu0 %1610
      %1612 = vrot.lane.b32.xlu0 %v1510, 8
      %v1613 = vpop.permute.xlu0 %1612
      %1614 = vrot.lane.b32.xlu0 %v1514, 8
      %v1615 = vpop.permute.xlu0 %1614
      %1616 = vrot.lane.b32.xlu0 %v1517, 8
      %v1617 = vpop.permute.xlu0 %1616
      %1618 = vrot.lane.b32.xlu0 %v1521, 8
      %v1619 = vpop.permute.xlu0 %1618
      %1620 = vrot.lane.b32.xlu0 %v1524, 8
      %v1621 = vpop.permute.xlu0 %1620
      %1622 = vrot.lane.b32.xlu0 %v1528, 8
      %v1623 = vpop.permute.xlu0 %1622
      %1624 = vrot.lane.b32.xlu0 %v1531, 8
      %v1625 = vpop.permute.xlu0 %1624
      %1626 = vrot.lane.b32.xlu0 %v1535, 8
      %v1627 = vpop.permute.xlu0 %1626
      %1628 = vrot.lane.b32.xlu0 %v1538, 8
      %v1629 = vpop.permute.xlu0 %1628
      %1630 = vrot.lane.b32.xlu0 %v1542, 8
      %v1631 = vpop.permute.xlu0 %1630
      %1632 = vrot.lane.b32.xlu0 %v1545, 8
      %v1633 = vpop.permute.xlu0 %1632
      %1634 = vrot.lane.b32.xlu0 %v1549, 8
      %v1635 = vpop.permute.xlu0 %1634
      %1636 = vrot.lane.b32.xlu0 %v1552, 8
      %v1637 = vpop.permute.xlu0 %1636
      %1638 = vrot.lane.b32.xlu0 %v1556, 8
      %v1639 = vpop.permute.xlu0 %1638
      %1640 = vrot.lane.b32.xlu0 %v1559, 8
      %v1641 = vpop.permute.xlu0 %1640
      %1642 = vrot.lane.b32.xlu0 %v1563, 8
      %v1643 = vpop.permute.xlu0 %1642
      %1644 = vrot.lane.b32.xlu0 %v1566, 8
      %v1645 = vpop.permute.xlu0 %1644
      %1646 = vrot.lane.b32.xlu0 %v1570, 8
      %v1647 = vpop.permute.xlu0 %1646
      %1648 = vrot.lane.b32.xlu0 %v1573, 8
      %v1649 = vpop.permute.xlu0 %1648
      %1650 = vrot.lane.b32.xlu0 %v1577, 8
      %v1651 = vpop.permute.xlu0 %1650
      %1652 = vrot.lane.b32.xlu0 %v1580, 8
      %v1653 = vpop.permute.xlu0 %1652
      %1654 = vrot.lane.b32.xlu0 %v1584, 8
      %v1655 = vpop.permute.xlu0 %1654
      %1656 = vrot.lane.b32.xlu0 %v1587, 8
      %v1657 = vpop.permute.xlu0 %1656
      %1658 = vrot.lane.b32.xlu0 %v1591, 8
      %v1659 = vpop.permute.xlu0 %1658
      %1660 = vrot.lane.b32.xlu0 %v1594, 8
      %v1661 = vpop.permute.xlu0 %1660
      %1662 = vrot.lane.b32.xlu0 %v1598, 8
      %v1663 = vpop.permute.xlu0 %1662
      %1664 = vrot.lane.b32.xlu0 %v1601, 8
      %v1665 = vpop.permute.xlu0 %1664
      %vm1698 = vcmask 93248
      %1699 = vst.msk [vmem:[#allocation3] sm:$0xf] %vm1698, %v1603
      %1700 = vst.msk [vmem:[#allocation3 + $0x4] sm:$0xf] %vm1698, %v1605
      %1701 = vst.msk [vmem:[#allocation3 + $0x8] sm:$0xf] %vm1698, %v1607
      %1702 = vst.msk [vmem:[#allocation3 + $0xc] sm:$0xf] %vm1698, %v1609
      %1703 = vst.msk [vmem:[#allocation3 + $0x10] sm:$0xf] %vm1698, %v1611
      %1704 = vst.msk [vmem:[#allocation3 + $0x14] sm:$0xf] %vm1698, %v1613
      %1705 = vst.msk [vmem:[#allocation3 + $0x18] sm:$0xf] %vm1698, %v1615
      %1706 = vst.msk [vmem:[#allocation3 + $0x1c] sm:$0xf] %vm1698, %v1617
      %1707 = vst.msk [vmem:[#allocation3 + $0x20] sm:$0xf] %vm1698, %v1619
      %1708 = vst.msk [vmem:[#allocation3 + $0x24] sm:$0xf] %vm1698, %v1621
      %1709 = vst.msk [vmem:[#allocation3 + $0x28] sm:$0xf] %vm1698, %v1623
      %1710 = vst.msk [vmem:[#allocation3 + $0x2c] sm:$0xf] %vm1698, %v1625
      %1711 = vst.msk [vmem:[#allocation3 + $0x30] sm:$0xf] %vm1698, %v1627
      %1712 = vst.msk [vmem:[#allocation3 + $0x34] sm:$0xf] %vm1698, %v1629
      %1713 = vst.msk [vmem:[#allocation3 + $0x38] sm:$0xf] %vm1698, %v1631
      %1714 = vst.msk [vmem:[#allocation3 + $0x3c] sm:$0xf] %vm1698, %v1633
      %1715 = vst.msk [vmem:[#allocation3 + $0x40] sm:$0xf] %vm1698, %v1635
      %1716 = vst.msk [vmem:[#allocation3 + $0x44] sm:$0xf] %vm1698, %v1637
      %1717 = vst.msk [vmem:[#allocation3 + $0x48] sm:$0xf] %vm1698, %v1639
      %1718 = vst.msk [vmem:[#allocation3 + $0x4c] sm:$0xf] %vm1698, %v1641
      %1719 = vst.msk [vmem:[#allocation3 + $0x50] sm:$0xf] %vm1698, %v1643
      %1720 = vst.msk [vmem:[#allocation3 + $0x54] sm:$0xf] %vm1698, %v1645
      %1721 = vst.msk [vmem:[#allocation3 + $0x58] sm:$0xf] %vm1698, %v1647
      %1722 = vst.msk [vmem:[#allocation3 + $0x5c] sm:$0xf] %vm1698, %v1649
      %1723 = vst.msk [vmem:[#allocation3 + $0x60] sm:$0xf] %vm1698, %v1651
      %1724 = vst.msk [vmem:[#allocation3 + $0x64] sm:$0xf] %vm1698, %v1653
      %1725 = vst.msk [vmem:[#allocation3 + $0x68] sm:$0xf] %vm1698, %v1655
      %1726 = vst.msk [vmem:[#allocation3 + $0x6c] sm:$0xf] %vm1698, %v1657
      %1727 = vst.msk [vmem:[#allocation3 + $0x70] sm:$0xf] %vm1698, %v1659
      %1728 = vst.msk [vmem:[#allocation3 + $0x74] sm:$0xf] %vm1698, %v1661
      %1729 = vst.msk [vmem:[#allocation3 + $0x78] sm:$0xf] %vm1698, %v1663
      %1730 = vst.msk [vmem:[#allocation3 + $0x7c] sm:$0xf] %vm1698, %v1665
      %v1731 = vld [vmem:[%s648] sm:$0xf]
      %v1732 = vld [vmem:[%s648 + $0x4] sm:$0xf]
      %v1733 = vld [vmem:[%s648 + $0xc] sm:$0xf]
      %v1734 = vld [vmem:[%s648 + $0x10] sm:$0xf]
      %v1735 = vld [vmem:[%s648 + $0x18] sm:$0xf]
      %v1736 = vld [vmem:[%s648 + $0x1c] sm:$0xf]
      %v1737 = vld [vmem:[%s648 + $0x24] sm:$0xf]
      %v1738 = vld [vmem:[%s648 + $0x28] sm:$0xf]
      %v1739 = vld [vmem:[%s648 + $0x30] sm:$0xf]
      %v1740 = vld [vmem:[%s648 + $0x34] sm:$0xf]
      %v1741 = vld [vmem:[%s648 + $0x3c] sm:$0xf]
      %v1742 = vld [vmem:[%s648 + $0x40] sm:$0xf]
      %v1743 = vld [vmem:[%s648 + $0x48] sm:$0xf]
      %v1744 = vld [vmem:[%s648 + $0x4c] sm:$0xf]
      %v1745 = vld [vmem:[%s648 + $0x54] sm:$0xf]
      %v1746 = vld [vmem:[%s648 + $0x58] sm:$0xf]
      %v1747 = vld [vmem:[%s648 + $0x60] sm:$0xf]
      %v1748 = vld [vmem:[%s648 + $0x64] sm:$0xf]
      %v1749 = vld [vmem:[%s648 + $0x6c] sm:$0xf]
      %v1750 = vld [vmem:[%s648 + $0x70] sm:$0xf]
      %v1751 = vld [vmem:[%s648 + $0x78] sm:$0xf]
      %v1752 = vld [vmem:[%s648 + $0x7c] sm:$0xf]
      %v1753 = vld [vmem:[%s648 + $0x84] sm:$0xf]
      %v1754 = vld [vmem:[%s648 + $0x88] sm:$0xf]
      %v1755 = vld [vmem:[%s648 + $0x90] sm:$0xf]
      %v1756 = vld [vmem:[%s648 + $0x94] sm:$0xf]
      %v1757 = vld [vmem:[%s648 + $0x9c] sm:$0xf]
      %v1758 = vld [vmem:[%s648 + $0xa0] sm:$0xf]
      %v1759 = vld [vmem:[%s648 + $0xa8] sm:$0xf]
      %v1760 = vld [vmem:[%s648 + $0xac] sm:$0xf]
      %v1761 = vld [vmem:[%s648 + $0xb4] sm:$0xf]
      %v1762 = vld [vmem:[%s648 + $0xb8] sm:$0xf]
      %1795 = vrot.lane.b32.xlu0 %v1731, 12
      %v1796 = vpop.permute.xlu0 %1795
      %1797 = vrot.lane.b32.xlu0 %v1732, 12
      %v1798 = vpop.permute.xlu0 %1797
      %1799 = vrot.lane.b32.xlu0 %v1733, 12
      %v1800 = vpop.permute.xlu0 %1799
      %1801 = vrot.lane.b32.xlu0 %v1734, 12
      %v1802 = vpop.permute.xlu0 %1801
      %1803 = vrot.lane.b32.xlu0 %v1735, 12
      %v1804 = vpop.permute.xlu0 %1803
      %1805 = vrot.lane.b32.xlu0 %v1736, 12
      %v1806 = vpop.permute.xlu0 %1805
      %1807 = vrot.lane.b32.xlu0 %v1737, 12
      %v1808 = vpop.permute.xlu0 %1807
      %1809 = vrot.lane.b32.xlu0 %v1738, 12
      %v1810 = vpop.permute.xlu0 %1809
      %1811 = vrot.lane.b32.xlu0 %v1739, 12
      %v1812 = vpop.permute.xlu0 %1811
      %1813 = vrot.lane.b32.xlu0 %v1740, 12
      %v1814 = vpop.permute.xlu0 %1813
      %1815 = vrot.lane.b32.xlu0 %v1741, 12
      %v1816 = vpop.permute.xlu0 %1815
      %1817 = vrot.lane.b32.xlu0 %v1742, 12
      %v1818 = vpop.permute.xlu0 %1817
      %1819 = vrot.lane.b32.xlu0 %v1743, 12
      %v1820 = vpop.permute.xlu0 %1819
      %1821 = vrot.lane.b32.xlu0 %v1744, 12
      %v1822 = vpop.permute.xlu0 %1821
      %1823 = vrot.lane.b32.xlu0 %v1745, 12
      %v1824 = vpop.permute.xlu0 %1823
      %1825 = vrot.lane.b32.xlu0 %v1746, 12
      %v1826 = vpop.permute.xlu0 %1825
      %1827 = vrot.lane.b32.xlu0 %v1747, 12
      %v1828 = vpop.permute.xlu0 %1827
      %1829 = vrot.lane.b32.xlu0 %v1748, 12
      %v1830 = vpop.permute.xlu0 %1829
      %1831 = vrot.lane.b32.xlu0 %v1749, 12
      %v1832 = vpop.permute.xlu0 %1831
      %1833 = vrot.lane.b32.xlu0 %v1750, 12
      %v1834 = vpop.permute.xlu0 %1833
      %1835 = vrot.lane.b32.xlu0 %v1751, 12
      %v1836 = vpop.permute.xlu0 %1835
      %1837 = vrot.lane.b32.xlu0 %v1752, 12
      %v1838 = vpop.permute.xlu0 %1837
      %1839 = vrot.lane.b32.xlu0 %v1753, 12
      %v1840 = vpop.permute.xlu0 %1839
      %1841 = vrot.lane.b32.xlu0 %v1754, 12
      %v1842 = vpop.permute.xlu0 %1841
      %1843 = vrot.lane.b32.xlu0 %v1755, 12
      %v1844 = vpop.permute.xlu0 %1843
      %1845 = vrot.lane.b32.xlu0 %v1756, 12
      %v1846 = vpop.permute.xlu0 %1845
      %1847 = vrot.lane.b32.xlu0 %v1757, 12
      %v1848 = vpop.permute.xlu0 %1847
      %1849 = vrot.lane.b32.xlu0 %v1758, 12
      %v1850 = vpop.permute.xlu0 %1849
      %1851 = vrot.lane.b32.xlu0 %v1759, 12
      %v1852 = vpop.permute.xlu0 %1851
      %1853 = vrot.lane.b32.xlu0 %v1760, 12
      %v1854 = vpop.permute.xlu0 %1853
      %1855 = vrot.lane.b32.xlu0 %v1761, 12
      %v1856 = vpop.permute.xlu0 %1855
      %1857 = vrot.lane.b32.xlu0 %v1762, 12
      %v1858 = vpop.permute.xlu0 %1857
      %vm1891 = vcmask 126048
      %1892 = vst.msk [vmem:[#allocation3] sm:$0xf] %vm1891, %v1796
      %1893 = vst.msk [vmem:[#allocation3 + $0x4] sm:$0xf] %vm1891, %v1798
      %1894 = vst.msk [vmem:[#allocation3 + $0x8] sm:$0xf] %vm1891, %v1800
      %1895 = vst.msk [vmem:[#allocation3 + $0xc] sm:$0xf] %vm1891, %v1802
      %1896 = vst.msk [vmem:[#allocation3 + $0x10] sm:$0xf] %vm1891, %v1804
      %1897 = vst.msk [vmem:[#allocation3 + $0x14] sm:$0xf] %vm1891, %v1806
      %1898 = vst.msk [vmem:[#allocation3 + $0x18] sm:$0xf] %vm1891, %v1808
      %1899 = vst.msk [vmem:[#allocation3 + $0x1c] sm:$0xf] %vm1891, %v1810
      %1900 = vst.msk [vmem:[#allocation3 + $0x20] sm:$0xf] %vm1891, %v1812
      %1901 = vst.msk [vmem:[#allocation3 + $0x24] sm:$0xf] %vm1891, %v1814
      %1902 = vst.msk [vmem:[#allocation3 + $0x28] sm:$0xf] %vm1891, %v1816
      %1903 = vst.msk [vmem:[#allocation3 + $0x2c] sm:$0xf] %vm1891, %v1818
      %1904 = vst.msk [vmem:[#allocation3 + $0x30] sm:$0xf] %vm1891, %v1820
      %1905 = vst.msk [vmem:[#allocation3 + $0x34] sm:$0xf] %vm1891, %v1822
      %1906 = vst.msk [vmem:[#allocation3 + $0x38] sm:$0xf] %vm1891, %v1824
      %1907 = vst.msk [vmem:[#allocation3 + $0x3c] sm:$0xf] %vm1891, %v1826
      %1908 = vst.msk [vmem:[#allocation3 + $0x40] sm:$0xf] %vm1891, %v1828
      %1909 = vst.msk [vmem:[#allocation3 + $0x44] sm:$0xf] %vm1891, %v1830
      %1910 = vst.msk [vmem:[#allocation3 + $0x48] sm:$0xf] %vm1891, %v1832
      %1911 = vst.msk [vmem:[#allocation3 + $0x4c] sm:$0xf] %vm1891, %v1834
      %1912 = vst.msk [vmem:[#allocation3 + $0x50] sm:$0xf] %vm1891, %v1836
      %1913 = vst.msk [vmem:[#allocation3 + $0x54] sm:$0xf] %vm1891, %v1838
      %1914 = vst.msk [vmem:[#allocation3 + $0x58] sm:$0xf] %vm1891, %v1840
      %1915 = vst.msk [vmem:[#allocation3 + $0x5c] sm:$0xf] %vm1891, %v1842
      %1916 = vst.msk [vmem:[#allocation3 + $0x60] sm:$0xf] %vm1891, %v1844
      %1917 = vst.msk [vmem:[#allocation3 + $0x64] sm:$0xf] %vm1891, %v1846
      %1918 = vst.msk [vmem:[#allocation3 + $0x68] sm:$0xf] %vm1891, %v1848
      %1919 = vst.msk [vmem:[#allocation3 + $0x6c] sm:$0xf] %vm1891, %v1850
      %1920 = vst.msk [vmem:[#allocation3 + $0x70] sm:$0xf] %vm1891, %v1852
      %1921 = vst.msk [vmem:[#allocation3 + $0x74] sm:$0xf] %vm1891, %v1854
      %1922 = vst.msk [vmem:[#allocation3 + $0x78] sm:$0xf] %vm1891, %v1856
      %1923 = vst.msk [vmem:[#allocation3 + $0x7c] sm:$0xf] %vm1891, %v1858
      %v1924 = vld [vmem:[%s648] sm:$0xf]
      %v1925 = vld [vmem:[%s648 + $0x4] sm:$0xf]
      %v1926 = vld [vmem:[%s648 + $0x8] sm:$0x1]
      %v1927 = vld [vmem:[%s648 + $0xc] sm:$0xf]
      %v1928 = vld [vmem:[%s648 + $0x10] sm:$0xf]
      %v1929 = vld [vmem:[%s648 + $0x14] sm:$0x1]
      %v1930 = vld [vmem:[%s648 + $0x18] sm:$0xf]
      %v1931 = vld [vmem:[%s648 + $0x1c] sm:$0xf]
      %v1932 = vld [vmem:[%s648 + $0x20] sm:$0x1]
      %v1933 = vld [vmem:[%s648 + $0x24] sm:$0xf]
      %v1934 = vld [vmem:[%s648 + $0x28] sm:$0xf]
      %v1935 = vld [vmem:[%s648 + $0x2c] sm:$0x1]
      %v1936 = vld [vmem:[%s648 + $0x30] sm:$0xf]
      %v1937 = vld [vmem:[%s648 + $0x34] sm:$0xf]
      %v1938 = vld [vmem:[%s648 + $0x38] sm:$0x1]
      %v1939 = vld [vmem:[%s648 + $0x3c] sm:$0xf]
      %v1940 = vld [vmem:[%s648 + $0x40] sm:$0xf]
      %v1941 = vld [vmem:[%s648 + $0x44] sm:$0x1]
      %v1942 = vld [vmem:[%s648 + $0x48] sm:$0xf]
      %v1943 = vld [vmem:[%s648 + $0x4c] sm:$0xf]
      %v1944 = vld [vmem:[%s648 + $0x50] sm:$0x1]
      %v1945 = vld [vmem:[%s648 + $0x54] sm:$0xf]
      %v1946 = vld [vmem:[%s648 + $0x58] sm:$0xf]
      %v1947 = vld [vmem:[%s648 + $0x5c] sm:$0x1]
      %v1948 = vld [vmem:[%s648 + $0x60] sm:$0xf]
      %v1949 = vld [vmem:[%s648 + $0x64] sm:$0xf]
      %v1950 = vld [vmem:[%s648 + $0x68] sm:$0x1]
      %v1951 = vld [vmem:[%s648 + $0x6c] sm:$0xf]
      %v1952 = vld [vmem:[%s648 + $0x70] sm:$0xf]
      %v1953 = vld [vmem:[%s648 + $0x74] sm:$0x1]
      %v1954 = vld [vmem:[%s648 + $0x78] sm:$0xf]
      %v1955 = vld [vmem:[%s648 + $0x7c] sm:$0xf]
      %v1956 = vld [vmem:[%s648 + $0x80] sm:$0x1]
      %v1957 = vld [vmem:[%s648 + $0x84] sm:$0xf]
      %v1958 = vld [vmem:[%s648 + $0x88] sm:$0xf]
      %v1959 = vld [vmem:[%s648 + $0x8c] sm:$0x1]
      %v1960 = vld [vmem:[%s648 + $0x90] sm:$0xf]
      %v1961 = vld [vmem:[%s648 + $0x94] sm:$0xf]
      %v1962 = vld [vmem:[%s648 + $0x98] sm:$0x1]
      %v1963 = vld [vmem:[%s648 + $0x9c] sm:$0xf]
      %v1964 = vld [vmem:[%s648 + $0xa0] sm:$0xf]
      %v1965 = vld [vmem:[%s648 + $0xa4] sm:$0x1]
      %v1966 = vld [vmem:[%s648 + $0xa8] sm:$0xf]
      %v1967 = vld [vmem:[%s648 + $0xac] sm:$0xf]
      %v1968 = vld [vmem:[%s648 + $0xb0] sm:$0x1]
      %v1969 = vld [vmem:[%s648 + $0xb4] sm:$0xf]
      %v1970 = vld [vmem:[%s648 + $0xb8] sm:$0xf]
      %v1971 = vld [vmem:[%s648 + $0xbc] sm:$0x1]
      %v1973 = vshrl.u32 %v1924, 16
      %v1975 = vrot.slane %v1973, 4
      %v1976 = vshll.u32 %v1924, 16
      %v1978 = vrot.slane %v1976, 5
      %v1979 = vor.u32 %v1975, %v1978
      %v1980 = vrot.slane %v1979, 4
      %v1982 = vshll.u32 %v1925, 16
      %v1984 = vrot.slane %v1982, 5
      %v1985 = vsel %vm877, %v1980, %v1984
      %v1986 = vshrl.u32 %v1925, 16
      %v1988 = vrot.slane %v1986, 4
      %v1989 = vor.u32 %v1988, %v1984
      %v1990 = vrot.slane %v1989, 4
      %v1992 = vshll.u32 %v1926, 16
      %v1994 = vrot.slane %v1992, 5
      %v1995 = vsel %vm877, %v1990, %v1994
      %v1997 = vshrl.u32 %v1927, 16
      %v1999 = vrot.slane %v1997, 4
      %v2000 = vshll.u32 %v1927, 16
      %v2002 = vrot.slane %v2000, 5
      %v2003 = vor.u32 %v1999, %v2002
      %v2004 = vrot.slane %v2003, 4
      %v2006 = vshll.u32 %v1928, 16
      %v2008 = vrot.slane %v2006, 5
      %v2009 = vsel %vm877, %v2004, %v2008
      %v2010 = vshrl.u32 %v1928, 16
      %v2012 = vrot.slane %v2010, 4
      %v2013 = vor.u32 %v2012, %v2008
      %v2014 = vrot.slane %v2013, 4
      %v2016 = vshll.u32 %v1929, 16
      %v2018 = vrot.slane %v2016, 5
      %v2019 = vsel %vm877, %v2014, %v2018
      %v2021 = vshrl.u32 %v1930, 16
      %v2023 = vrot.slane %v2021, 4
      %v2024 = vshll.u32 %v1930, 16
      %v2026 = vrot.slane %v2024, 5
      %v2027 = vor.u32 %v2023, %v2026
      %v2028 = vrot.slane %v2027, 4
      %v2030 = vshll.u32 %v1931, 16
      %v2032 = vrot.slane %v2030, 5
      %v2033 = vsel %vm877, %v2028, %v2032
      %v2034 = vshrl.u32 %v1931, 16
      %v2036 = vrot.slane %v2034, 4
      %v2037 = vor.u32 %v2036, %v2032
      %v2038 = vrot.slane %v2037, 4
      %v2040 = vshll.u32 %v1932, 16
      %v2042 = vrot.slane %v2040, 5
      %v2043 = vsel %vm877, %v2038, %v2042
      %v2045 = vshrl.u32 %v1933, 16
      %v2047 = vrot.slane %v2045, 4
      %v2048 = vshll.u32 %v1933, 16
      %v2050 = vrot.slane %v2048, 5
      %v2051 = vor.u32 %v2047, %v2050
      %v2052 = vrot.slane %v2051, 4
      %v2054 = vshll.u32 %v1934, 16
      %v2056 = vrot.slane %v2054, 5
      %v2057 = vsel %vm877, %v2052, %v2056
      %v2058 = vshrl.u32 %v1934, 16
      %v2060 = vrot.slane %v2058, 4
      %v2061 = vor.u32 %v2060, %v2056
      %v2062 = vrot.slane %v2061, 4
      %v2064 = vshll.u32 %v1935, 16
      %v2066 = vrot.slane %v2064, 5
      %v2067 = vsel %vm877, %v2062, %v2066
      %v2069 = vshrl.u32 %v1936, 16
      %v2071 = vrot.slane %v2069, 4
      %v2072 = vshll.u32 %v1936, 16
      %v2074 = vrot.slane %v2072, 5
      %v2075 = vor.u32 %v2071, %v2074
      %v2076 = vrot.slane %v2075, 4
      %v2078 = vshll.u32 %v1937, 16
      %v2080 = vrot.slane %v2078, 5
      %v2081 = vsel %vm877, %v2076, %v2080
      %v2082 = vshrl.u32 %v1937, 16
      %v2084 = vrot.slane %v2082, 4
      %v2085 = vor.u32 %v2084, %v2080
      %v2086 = vrot.slane %v2085, 4
      %v2088 = vshll.u32 %v1938, 16
      %v2090 = vrot.slane %v2088, 5
      %v2091 = vsel %vm877, %v2086, %v2090
      %v2093 = vshrl.u32 %v1939, 16
      %v2095 = vrot.slane %v2093, 4
      %v2096 = vshll.u32 %v1939, 16
      %v2098 = vrot.slane %v2096, 5
      %v2099 = vor.u32 %v2095, %v2098
      %v2100 = vrot.slane %v2099, 4
      %v2102 = vshll.u32 %v1940, 16
      %v2104 = vrot.slane %v2102, 5
      %v2105 = vsel %vm877, %v2100, %v2104
      %v2106 = vshrl.u32 %v1940, 16
      %v2108 = vrot.slane %v2106, 4
      %v2109 = vor.u32 %v2108, %v2104
      %v2110 = vrot.slane %v2109, 4
      %v2112 = vshll.u32 %v1941, 16
      %v2114 = vrot.slane %v2112, 5
      %v2115 = vsel %vm877, %v2110, %v2114
      %v2117 = vshrl.u32 %v1942, 16
      %v2119 = vrot.slane %v2117, 4
      %v2120 = vshll.u32 %v1942, 16
      %v2122 = vrot.slane %v2120, 5
      %v2123 = vor.u32 %v2119, %v2122
      %v2124 = vrot.slane %v2123, 4
      %v2126 = vshll.u32 %v1943, 16
      %v2128 = vrot.slane %v2126, 5
      %v2129 = vsel %vm877, %v2124, %v2128
      %v2130 = vshrl.u32 %v1943, 16
      %v2132 = vrot.slane %v2130, 4
      %v2133 = vor.u32 %v2132, %v2128
      %v2134 = vrot.slane %v2133, 4
      %v2136 = vshll.u32 %v1944, 16
      %v2138 = vrot.slane %v2136, 5
      %v2139 = vsel %vm877, %v2134, %v2138
      %v2141 = vshrl.u32 %v1945, 16
      %v2143 = vrot.slane %v2141, 4
      %v2144 = vshll.u32 %v1945, 16
      %v2146 = vrot.slane %v2144, 5
      %v2147 = vor.u32 %v2143, %v2146
      %v2148 = vrot.slane %v2147, 4
      %v2150 = vshll.u32 %v1946, 16
      %v2152 = vrot.slane %v2150, 5
      %v2153 = vsel %vm877, %v2148, %v2152
      %v2154 = vshrl.u32 %v1946, 16
      %v2156 = vrot.slane %v2154, 4
      %v2157 = vor.u32 %v2156, %v2152
      %v2158 = vrot.slane %v2157, 4
      %v2160 = vshll.u32 %v1947, 16
      %v2162 = vrot.slane %v2160, 5
      %v2163 = vsel %vm877, %v2158, %v2162
      %v2165 = vshrl.u32 %v1948, 16
      %v2167 = vrot.slane %v2165, 4
      %v2168 = vshll.u32 %v1948, 16
      %v2170 = vrot.slane %v2168, 5
      %v2171 = vor.u32 %v2167, %v2170
      %v2172 = vrot.slane %v2171, 4
      %v2174 = vshll.u32 %v1949, 16
      %v2176 = vrot.slane %v2174, 5
      %v2177 = vsel %vm877, %v2172, %v2176
      %v2178 = vshrl.u32 %v1949, 16
      %v2180 = vrot.slane %v2178, 4
      %v2181 = vor.u32 %v2180, %v2176
      %v2182 = vrot.slane %v2181, 4
      %v2184 = vshll.u32 %v1950, 16
      %v2186 = vrot.slane %v2184, 5
      %v2187 = vsel %vm877, %v2182, %v2186
      %v2189 = vshrl.u32 %v1951, 16
      %v2191 = vrot.slane %v2189, 4
      %v2192 = vshll.u32 %v1951, 16
      %v2194 = vrot.slane %v2192, 5
      %v2195 = vor.u32 %v2191, %v2194
      %v2196 = vrot.slane %v2195, 4
      %v2198 = vshll.u32 %v1952, 16
      %v2200 = vrot.slane %v2198, 5
      %v2201 = vsel %vm877, %v2196, %v2200
      %v2202 = vshrl.u32 %v1952, 16
      %v2204 = vrot.slane %v2202, 4
      %v2205 = vor.u32 %v2204, %v2200
      %v2206 = vrot.slane %v2205, 4
      %v2208 = vshll.u32 %v1953, 16
      %v2210 = vrot.slane %v2208, 5
      %v2211 = vsel %vm877, %v2206, %v2210
      %v2213 = vshrl.u32 %v1954, 16
      %v2215 = vrot.slane %v2213, 4
      %v2216 = vshll.u32 %v1954, 16
      %v2218 = vrot.slane %v2216, 5
      %v2219 = vor.u32 %v2215, %v2218
      %v2220 = vrot.slane %v2219, 4
      %v2222 = vshll.u32 %v1955, 16
      %v2224 = vrot.slane %v2222, 5
      %v2225 = vsel %vm877, %v2220, %v2224
      %v2226 = vshrl.u32 %v1955, 16
      %v2228 = vrot.slane %v2226, 4
      %v2229 = vor.u32 %v2228, %v2224
      %v2230 = vrot.slane %v2229, 4
      %v2232 = vshll.u32 %v1956, 16
      %v2234 = vrot.slane %v2232, 5
      %v2235 = vsel %vm877, %v2230, %v2234
      %v2237 = vshrl.u32 %v1957, 16
      %v2239 = vrot.slane %v2237, 4
      %v2240 = vshll.u32 %v1957, 16
      %v2242 = vrot.slane %v2240, 5
      %v2243 = vor.u32 %v2239, %v2242
      %v2244 = vrot.slane %v2243, 4
      %v2246 = vshll.u32 %v1958, 16
      %v2248 = vrot.slane %v2246, 5
      %v2249 = vsel %vm877, %v2244, %v2248
      %v2250 = vshrl.u32 %v1958, 16
      %v2252 = vrot.slane %v2250, 4
      %v2253 = vor.u32 %v2252, %v2248
      %v2254 = vrot.slane %v2253, 4
      %v2256 = vshll.u32 %v1959, 16
      %v2258 = vrot.slane %v2256, 5
      %v2259 = vsel %vm877, %v2254, %v2258
      %v2261 = vshrl.u32 %v1960, 16
      %v2263 = vrot.slane %v2261, 4
      %v2264 = vshll.u32 %v1960, 16
      %v2266 = vrot.slane %v2264, 5
      %v2267 = vor.u32 %v2263, %v2266
      %v2268 = vrot.slane %v2267, 4
      %v2270 = vshll.u32 %v1961, 16
      %v2272 = vrot.slane %v2270, 5
      %v2273 = vsel %vm877, %v2268, %v2272
      %v2274 = vshrl.u32 %v1961, 16
      %v2276 = vrot.slane %v2274, 4
      %v2277 = vor.u32 %v2276, %v2272
      %v2278 = vrot.slane %v2277, 4
      %v2280 = vshll.u32 %v1962, 16
      %v2282 = vrot.slane %v2280, 5
      %v2283 = vsel %vm877, %v2278, %v2282
      %v2285 = vshrl.u32 %v1963, 16
      %v2287 = vrot.slane %v2285, 4
      %v2288 = vshll.u32 %v1963, 16
      %v2290 = vrot.slane %v2288, 5
      %v2291 = vor.u32 %v2287, %v2290
      %v2292 = vrot.slane %v2291, 4
      %v2294 = vshll.u32 %v1964, 16
      %v2296 = vrot.slane %v2294, 5
      %v2297 = vsel %vm877, %v2292, %v2296
      %v2298 = vshrl.u32 %v1964, 16
      %v2300 = vrot.slane %v2298, 4
      %v2301 = vor.u32 %v2300, %v2296
      %v2302 = vrot.slane %v2301, 4
      %v2304 = vshll.u32 %v1965, 16
      %v2306 = vrot.slane %v2304, 5
      %v2307 = vsel %vm877, %v2302, %v2306
      %v2309 = vshrl.u32 %v1966, 16
      %v2311 = vrot.slane %v2309, 4
      %v2312 = vshll.u32 %v1966, 16
      %v2314 = vrot.slane %v2312, 5
      %v2315 = vor.u32 %v2311, %v2314
      %v2316 = vrot.slane %v2315, 4
      %v2318 = vshll.u32 %v1967, 16
      %v2320 = vrot.slane %v2318, 5
      %v2321 = vsel %vm877, %v2316, %v2320
      %v2322 = vshrl.u32 %v1967, 16
      %v2324 = vrot.slane %v2322, 4
      %v2325 = vor.u32 %v2324, %v2320
      %v2326 = vrot.slane %v2325, 4
      %v2328 = vshll.u32 %v1968, 16
      %v2330 = vrot.slane %v2328, 5
      %v2331 = vsel %vm877, %v2326, %v2330
      %v2333 = vshrl.u32 %v1969, 16
      %v2335 = vrot.slane %v2333, 4
      %v2336 = vshll.u32 %v1969, 16
      %v2338 = vrot.slane %v2336, 5
      %v2339 = vor.u32 %v2335, %v2338
      %v2340 = vrot.slane %v2339, 4
      %v2342 = vshll.u32 %v1970, 16
      %v2344 = vrot.slane %v2342, 5
      %v2345 = vsel %vm877, %v2340, %v2344
      %v2346 = vshrl.u32 %v1970, 16
      %v2348 = vrot.slane %v2346, 4
      %v2349 = vor.u32 %v2348, %v2344
      %v2350 = vrot.slane %v2349, 4
      %v2352 = vshll.u32 %v1971, 16
      %v2354 = vrot.slane %v2352, 5
      %v2355 = vsel %vm877, %v2350, %v2354
      %2356 = vrot.lane.b32.xlu0 %v1985, 16
      %v2357 = vpop.permute.xlu0 %2356
      %2358 = vrot.lane.b32.xlu0 %v1995, 16
      %v2359 = vpop.permute.xlu0 %2358
      %2360 = vrot.lane.b32.xlu0 %v2009, 16
      %v2361 = vpop.permute.xlu0 %2360
      %2362 = vrot.lane.b32.xlu0 %v2019, 16
      %v2363 = vpop.permute.xlu0 %2362
      %2364 = vrot.lane.b32.xlu0 %v2033, 16
      %v2365 = vpop.permute.xlu0 %2364
      %2366 = vrot.lane.b32.xlu0 %v2043, 16
      %v2367 = vpop.permute.xlu0 %2366
      %2368 = vrot.lane.b32.xlu0 %v2057, 16
      %v2369 = vpop.permute.xlu0 %2368
      %2370 = vrot.lane.b32.xlu0 %v2067, 16
      %v2371 = vpop.permute.xlu0 %2370
      %2372 = vrot.lane.b32.xlu0 %v2081, 16
      %v2373 = vpop.permute.xlu0 %2372
      %2374 = vrot.lane.b32.xlu0 %v2091, 16
      %v2375 = vpop.permute.xlu0 %2374
      %2376 = vrot.lane.b32.xlu0 %v2105, 16
      %v2377 = vpop.permute.xlu0 %2376
      %2378 = vrot.lane.b32.xlu0 %v2115, 16
      %v2379 = vpop.permute.xlu0 %2378
      %2380 = vrot.lane.b32.xlu0 %v2129, 16
      %v2381 = vpop.permute.xlu0 %2380
      %2382 = vrot.lane.b32.xlu0 %v2139, 16
      %v2383 = vpop.permute.xlu0 %2382
      %2384 = vrot.lane.b32.xlu0 %v2153, 16
      %v2385 = vpop.permute.xlu0 %2384
      %2386 = vrot.lane.b32.xlu0 %v2163, 16
      %v2387 = vpop.permute.xlu0 %2386
      %2388 = vrot.lane.b32.xlu0 %v2177, 16
      %v2389 = vpop.permute.xlu0 %2388
      %2390 = vrot.lane.b32.xlu0 %v2187, 16
      %v2391 = vpop.permute.xlu0 %2390
      %2392 = vrot.lane.b32.xlu0 %v2201, 16
      %v2393 = vpop.permute.xlu0 %2392
      %2394 = vrot.lane.b32.xlu0 %v2211, 16
      %v2395 = vpop.permute.xlu0 %2394
      %2396 = vrot.lane.b32.xlu0 %v2225, 16
      %v2397 = vpop.permute.xlu0 %2396
      %2398 = vrot.lane.b32.xlu0 %v2235, 16
      %v2399 = vpop.permute.xlu0 %2398
      %2400 = vrot.lane.b32.xlu0 %v2249, 16
      %v2401 = vpop.permute.xlu0 %2400
      %2402 = vrot.lane.b32.xlu0 %v2259, 16
      %v2403 = vpop.permute.xlu0 %2402
      %2404 = vrot.lane.b32.xlu0 %v2273, 16
      %v2405 = vpop.permute.xlu0 %2404
      %2406 = vrot.lane.b32.xlu0 %v2283, 16
      %v2407 = vpop.permute.xlu0 %2406
      %2408 = vrot.lane.b32.xlu0 %v2297, 16
      %v2409 = vpop.permute.xlu0 %2408
      %2410 = vrot.lane.b32.xlu0 %v2307, 16
      %v2411 = vpop.permute.xlu0 %2410
      %2412 = vrot.lane.b32.xlu0 %v2321, 16
      %v2413 = vpop.permute.xlu0 %2412
      %2414 = vrot.lane.b32.xlu0 %v2331, 16
      %v2415 = vpop.permute.xlu0 %2414
      %2416 = vrot.lane.b32.xlu0 %v2345, 16
      %v2417 = vpop.permute.xlu0 %2416
      %2418 = vrot.lane.b32.xlu0 %v2355, 16
      %v2419 = vpop.permute.xlu0 %2418
      %vm2452 = vcmask 158848
      %2453 = vst.msk [vmem:[#allocation3] sm:$0xf] %vm2452, %v2357
      %2454 = vst.msk [vmem:[#allocation3 + $0x4] sm:$0xf] %vm2452, %v2359
      %2455 = vst.msk [vmem:[#allocation3 + $0x8] sm:$0xf] %vm2452, %v2361
      %2456 = vst.msk [vmem:[#allocation3 + $0xc] sm:$0xf] %vm2452, %v2363
      %2457 = vst.msk [vmem:[#allocation3 + $0x10] sm:$0xf] %vm2452, %v2365
      %2458 = vst.msk [vmem:[#allocation3 + $0x14] sm:$0xf] %vm2452, %v2367
      %2459 = vst.msk [vmem:[#allocation3 + $0x18] sm:$0xf] %vm2452, %v2369
      %2460 = vst.msk [vmem:[#allocation3 + $0x1c] sm:$0xf] %vm2452, %v2371
      %2461 = vst.msk [vmem:[#allocation3 + $0x20] sm:$0xf] %vm2452, %v2373
      %2462 = vst.msk [vmem:[#allocation3 + $0x24] sm:$0xf] %vm2452, %v2375
      %2463 = vst.msk [vmem:[#allocation3 + $0x28] sm:$0xf] %vm2452, %v2377
      %2464 = vst.msk [vmem:[#allocation3 + $0x2c] sm:$0xf] %vm2452, %v2379
      %2465 = vst.msk [vmem:[#allocation3 + $0x30] sm:$0xf] %vm2452, %v2381
      %2466 = vst.msk [vmem:[#allocation3 + $0x34] sm:$0xf] %vm2452, %v2383
      %2467 = vst.msk [vmem:[#allocation3 + $0x38] sm:$0xf] %vm2452, %v2385
      %2468 = vst.msk [vmem:[#allocation3 + $0x3c] sm:$0xf] %vm2452, %v2387
      %2469 = vst.msk [vmem:[#allocation3 + $0x40] sm:$0xf] %vm2452, %v2389
      %2470 = vst.msk [vmem:[#allocation3 + $0x44] sm:$0xf] %vm2452, %v2391
      %2471 = vst.msk [vmem:[#allocation3 + $0x48] sm:$0xf] %vm2452, %v2393
      %2472 = vst.msk [vmem:[#allocation3 + $0x4c] sm:$0xf] %vm2452, %v2395
      %2473 = vst.msk [vmem:[#allocation3 + $0x50] sm:$0xf] %vm2452, %v2397
      %2474 = vst.msk [vmem:[#allocation3 + $0x54] sm:$0xf] %vm2452, %v2399
      %2475 = vst.msk [vmem:[#allocation3 + $0x58] sm:$0xf] %vm2452, %v2401
      %2476 = vst.msk [vmem:[#allocation3 + $0x5c] sm:$0xf] %vm2452, %v2403
      %2477 = vst.msk [vmem:[#allocation3 + $0x60] sm:$0xf] %vm2452, %v2405
      %2478 = vst.msk [vmem:[#allocation3 + $0x64] sm:$0xf] %vm2452, %v2407
      %2479 = vst.msk [vmem:[#allocation3 + $0x68] sm:$0xf] %vm2452, %v2409
      %2480 = vst.msk [vmem:[#allocation3 + $0x6c] sm:$0xf] %vm2452, %v2411
      %2481 = vst.msk [vmem:[#allocation3 + $0x70] sm:$0xf] %vm2452, %v2413
      %2482 = vst.msk [vmem:[#allocation3 + $0x74] sm:$0xf] %vm2452, %v2415
      %2483 = vst.msk [vmem:[#allocation3 + $0x78] sm:$0xf] %vm2452, %v2417
      %2484 = vst.msk [vmem:[#allocation3 + $0x7c] sm:$0xf] %vm2452, %v2419
      %v2485 = vld [vmem:[%s648] sm:$0xe]
      %v2486 = vld [vmem:[%s648 + $0x4] sm:$0xf]
      %v2487 = vld [vmem:[%s648 + $0x8] sm:$0x1]
      %v2488 = vld [vmem:[%s648 + $0xc] sm:$0xe]
      %v2489 = vld [vmem:[%s648 + $0x10] sm:$0xf]
      %v2490 = vld [vmem:[%s648 + $0x14] sm:$0x1]
      %v2491 = vld [vmem:[%s648 + $0x18] sm:$0xe]
      %v2492 = vld [vmem:[%s648 + $0x1c] sm:$0xf]
      %v2493 = vld [vmem:[%s648 + $0x20] sm:$0x1]
      %v2494 = vld [vmem:[%s648 + $0x24] sm:$0xe]
      %v2495 = vld [vmem:[%s648 + $0x28] sm:$0xf]
      %v2496 = vld [vmem:[%s648 + $0x2c] sm:$0x1]
      %v2497 = vld [vmem:[%s648 + $0x30] sm:$0xe]
      %v2498 = vld [vmem:[%s648 + $0x34] sm:$0xf]
      %v2499 = vld [vmem:[%s648 + $0x38] sm:$0x1]
      %v2500 = vld [vmem:[%s648 + $0x3c] sm:$0xe]
      %v2501 = vld [vmem:[%s648 + $0x40] sm:$0xf]
      %v2502 = vld [vmem:[%s648 + $0x44] sm:$0x1]
      %v2503 = vld [vmem:[%s648 + $0x48] sm:$0xe]
      %v2504 = vld [vmem:[%s648 + $0x4c] sm:$0xf]
      %v2505 = vld [vmem:[%s648 + $0x50] sm:$0x1]
      %v2506 = vld [vmem:[%s648 + $0x54] sm:$0xe]
      %v2507 = vld [vmem:[%s648 + $0x58] sm:$0xf]
      %v2508 = vld [vmem:[%s648 + $0x5c] sm:$0x1]
      %v2509 = vld [vmem:[%s648 + $0x60] sm:$0xe]
      %v2510 = vld [vmem:[%s648 + $0x64] sm:$0xf]
      %v2511 = vld [vmem:[%s648 + $0x68] sm:$0x1]
      %v2512 = vld [vmem:[%s648 + $0x6c] sm:$0xe]
      %v2513 = vld [vmem:[%s648 + $0x70] sm:$0xf]
      %v2514 = vld [vmem:[%s648 + $0x74] sm:$0x1]
      %v2515 = vld [vmem:[%s648 + $0x78] sm:$0xe]
      %v2516 = vld [vmem:[%s648 + $0x7c] sm:$0xf]
      %v2517 = vld [vmem:[%s648 + $0x80] sm:$0x1]
      %v2518 = vld [vmem:[%s648 + $0x84] sm:$0xe]
      %v2519 = vld [vmem:[%s648 + $0x88] sm:$0xf]
      %v2520 = vld [vmem:[%s648 + $0x8c] sm:$0x1]
      %v2521 = vld [vmem:[%s648 + $0x90] sm:$0xe]
      %v2522 = vld [vmem:[%s648 + $0x94] sm:$0xf]
      %v2523 = vld [vmem:[%s648 + $0x98] sm:$0x1]
      %v2524 = vld [vmem:[%s648 + $0x9c] sm:$0xe]
      %v2525 = vld [vmem:[%s648 + $0xa0] sm:$0xf]
      %v2526 = vld [vmem:[%s648 + $0xa4] sm:$0x1]
      %v2527 = vld [vmem:[%s648 + $0xa8] sm:$0xe]
      %v2528 = vld [vmem:[%s648 + $0xac] sm:$0xf]
      %v2529 = vld [vmem:[%s648 + $0xb0] sm:$0x1]
      %v2530 = vld [vmem:[%s648 + $0xb4] sm:$0xe]
      %v2531 = vld [vmem:[%s648 + $0xb8] sm:$0xf]
      %v2532 = vld [vmem:[%s648 + $0xbc] sm:$0x1]
      %v2581 = vrot.slane %v2485, 5
      %v2582 = vrot.slane %v2581, 4
      %v2583 = vrot.slane %v2486, 5
      %v2584 = vsel %vm1489, %v2582, %v2583
      %v2585 = vrot.slane %v2583, 4
      %v2586 = vrot.slane %v2487, 5
      %v2587 = vsel %vm1489, %v2585, %v2586
      %v2588 = vrot.slane %v2488, 5
      %v2589 = vrot.slane %v2588, 4
      %v2590 = vrot.slane %v2489, 5
      %v2591 = vsel %vm1489, %v2589, %v2590
      %v2592 = vrot.slane %v2590, 4
      %v2593 = vrot.slane %v2490, 5
      %v2594 = vsel %vm1489, %v2592, %v2593
      %v2595 = vrot.slane %v2491, 5
      %v2596 = vrot.slane %v2595, 4
      %v2597 = vrot.slane %v2492, 5
      %v2598 = vsel %vm1489, %v2596, %v2597
      %v2599 = vrot.slane %v2597, 4
      %v2600 = vrot.slane %v2493, 5
      %v2601 = vsel %vm1489, %v2599, %v2600
      %v2602 = vrot.slane %v2494, 5
      %v2603 = vrot.slane %v2602, 4
      %v2604 = vrot.slane %v2495, 5
      %v2605 = vsel %vm1489, %v2603, %v2604
      %v2606 = vrot.slane %v2604, 4
      %v2607 = vrot.slane %v2496, 5
      %v2608 = vsel %vm1489, %v2606, %v2607
      %v2609 = vrot.slane %v2497, 5
      %v2610 = vrot.slane %v2609, 4
      %v2611 = vrot.slane %v2498, 5
      %v2612 = vsel %vm1489, %v2610, %v2611
      %v2613 = vrot.slane %v2611, 4
      %v2614 = vrot.slane %v2499, 5
      %v2615 = vsel %vm1489, %v2613, %v2614
      %v2616 = vrot.slane %v2500, 5
      %v2617 = vrot.slane %v2616, 4
      %v2618 = vrot.slane %v2501, 5
      %v2619 = vsel %vm1489, %v2617, %v2618
      %v2620 = vrot.slane %v2618, 4
      %v2621 = vrot.slane %v2502, 5
      %v2622 = vsel %vm1489, %v2620, %v2621
      %v2623 = vrot.slane %v2503, 5
      %v2624 = vrot.slane %v2623, 4
      %v2625 = vrot.slane %v2504, 5
      %v2626 = vsel %vm1489, %v2624, %v2625
      %v2627 = vrot.slane %v2625, 4
      %v2628 = vrot.slane %v2505, 5
      %v2629 = vsel %vm1489, %v2627, %v2628
      %v2630 = vrot.slane %v2506, 5
      %v2631 = vrot.slane %v2630, 4
      %v2632 = vrot.slane %v2507, 5
      %v2633 = vsel %vm1489, %v2631, %v2632
      %v2634 = vrot.slane %v2632, 4
      %v2635 = vrot.slane %v2508, 5
      %v2636 = vsel %vm1489, %v2634, %v2635
      %v2637 = vrot.slane %v2509, 5
      %v2638 = vrot.slane %v2637, 4
      %v2639 = vrot.slane %v2510, 5
      %v2640 = vsel %vm1489, %v2638, %v2639
      %v2641 = vrot.slane %v2639, 4
      %v2642 = vrot.slane %v2511, 5
      %v2643 = vsel %vm1489, %v2641, %v2642
      %v2644 = vrot.slane %v2512, 5
      %v2645 = vrot.slane %v2644, 4
      %v2646 = vrot.slane %v2513, 5
      %v2647 = vsel %vm1489, %v2645, %v2646
      %v2648 = vrot.slane %v2646, 4
      %v2649 = vrot.slane %v2514, 5
      %v2650 = vsel %vm1489, %v2648, %v2649
      %v2651 = vrot.slane %v2515, 5
      %v2652 = vrot.slane %v2651, 4
      %v2653 = vrot.slane %v2516, 5
      %v2654 = vsel %vm1489, %v2652, %v2653
      %v2655 = vrot.slane %v2653, 4
      %v2656 = vrot.slane %v2517, 5
      %v2657 = vsel %vm1489, %v2655, %v2656
      %v2658 = vrot.slane %v2518, 5
      %v2659 = vrot.slane %v2658, 4
      %v2660 = vrot.slane %v2519, 5
      %v2661 = vsel %vm1489, %v2659, %v2660
      %v2662 = vrot.slane %v2660, 4
      %v2663 = vrot.slane %v2520, 5
      %v2664 = vsel %vm1489, %v2662, %v2663
      %v2665 = vrot.slane %v2521, 5
      %v2666 = vrot.slane %v2665, 4
      %v2667 = vrot.slane %v2522, 5
      %v2668 = vsel %vm1489, %v2666, %v2667
      %v2669 = vrot.slane %v2667, 4
      %v2670 = vrot.slane %v2523, 5
      %v2671 = vsel %vm1489, %v2669, %v2670
      %v2672 = vrot.slane %v2524, 5
      %v2673 = vrot.slane %v2672, 4
      %v2674 = vrot.slane %v2525, 5
      %v2675 = vsel %vm1489, %v2673, %v2674
      %v2676 = vrot.slane %v2674, 4
      %v2677 = vrot.slane %v2526, 5
      %v2678 = vsel %vm1489, %v2676, %v2677
      %v2679 = vrot.slane %v2527, 5
      %v2680 = vrot.slane %v2679, 4
      %v2681 = vrot.slane %v2528, 5
      %v2682 = vsel %vm1489, %v2680, %v2681
      %v2683 = vrot.slane %v2681, 4
      %v2684 = vrot.slane %v2529, 5
      %v2685 = vsel %vm1489, %v2683, %v2684
      %v2686 = vrot.slane %v2530, 5
      %v2687 = vrot.slane %v2686, 4
      %v2688 = vrot.slane %v2531, 5
      %v2689 = vsel %vm1489, %v2687, %v2688
      %v2690 = vrot.slane %v2688, 4
      %v2691 = vrot.slane %v2532, 5
      %v2692 = vsel %vm1489, %v2690, %v2691
      %2693 = vrot.lane.b32.xlu0 %v2584, 20
      %v2694 = vpop.permute.xlu0 %2693
      %2695 = vrot.lane.b32.xlu0 %v2587, 20
      %v2696 = vpop.permute.xlu0 %2695
      %2697 = vrot.lane.b32.xlu0 %v2591, 20
      %v2698 = vpop.permute.xlu0 %2697
      %2699 = vrot.lane.b32.xlu0 %v2594, 20
      %v2700 = vpop.permute.xlu0 %2699
      %2701 = vrot.lane.b32.xlu0 %v2598, 20
      %v2702 = vpop.permute.xlu0 %2701
      %2703 = vrot.lane.b32.xlu0 %v2601, 20
      %v2704 = vpop.permute.xlu0 %2703
      %2705 = vrot.lane.b32.xlu0 %v2605, 20
      %v2706 = vpop.permute.xlu0 %2705
      %2707 = vrot.lane.b32.xlu0 %v2608, 20
      %v2708 = vpop.permute.xlu0 %2707
      %2709 = vrot.lane.b32.xlu0 %v2612, 20
      %v2710 = vpop.permute.xlu0 %2709
      %2711 = vrot.lane.b32.xlu0 %v2615, 20
      %v2712 = vpop.permute.xlu0 %2711
      %2713 = vrot.lane.b32.xlu0 %v2619, 20
      %v2714 = vpop.permute.xlu0 %2713
      %2715 = vrot.lane.b32.xlu0 %v2622, 20
      %v2716 = vpop.permute.xlu0 %2715
      %2717 = vrot.lane.b32.xlu0 %v2626, 20
      %v2718 = vpop.permute.xlu0 %2717
      %2719 = vrot.lane.b32.xlu0 %v2629, 20
      %v2720 = vpop.permute.xlu0 %2719
      %2721 = vrot.lane.b32.xlu0 %v2633, 20
      %v2722 = vpop.permute.xlu0 %2721
      %2723 = vrot.lane.b32.xlu0 %v2636, 20
      %v2724 = vpop.permute.xlu0 %2723
      %2725 = vrot.lane.b32.xlu0 %v2640, 20
      %v2726 = vpop.permute.xlu0 %2725
      %2727 = vrot.lane.b32.xlu0 %v2643, 20
      %v2728 = vpop.permute.xlu0 %2727
      %2729 = vrot.lane.b32.xlu0 %v2647, 20
      %v2730 = vpop.permute.xlu0 %2729
      %2731 = vrot.lane.b32.xlu0 %v2650, 20
      %v2732 = vpop.permute.xlu0 %2731
      %2733 = vrot.lane.b32.xlu0 %v2654, 20
      %v2734 = vpop.permute.xlu0 %2733
      %2735 = vrot.lane.b32.xlu0 %v2657, 20
      %v2736 = vpop.permute.xlu0 %2735
      %2737 = vrot.lane.b32.xlu0 %v2661, 20
      %v2738 = vpop.permute.xlu0 %2737
      %2739 = vrot.lane.b32.xlu0 %v2664, 20
      %v2740 = vpop.permute.xlu0 %2739
      %2741 = vrot.lane.b32.xlu0 %v2668, 20
      %v2742 = vpop.permute.xlu0 %2741
      %2743 = vrot.lane.b32.xlu0 %v2671, 20
      %v2744 = vpop.permute.xlu0 %2743
      %2745 = vrot.lane.b32.xlu0 %v2675, 20
      %v2746 = vpop.permute.xlu0 %2745
      %2747 = vrot.lane.b32.xlu0 %v2678, 20
      %v2748 = vpop.permute.xlu0 %2747
      %2749 = vrot.lane.b32.xlu0 %v2682, 20
      %v2750 = vpop.permute.xlu0 %2749
      %2751 = vrot.lane.b32.xlu0 %v2685, 20
      %v2752 = vpop.permute.xlu0 %2751
      %2753 = vrot.lane.b32.xlu0 %v2689, 20
      %v2754 = vpop.permute.xlu0 %2753
      %2755 = vrot.lane.b32.xlu0 %v2692, 20
      %v2756 = vpop.permute.xlu0 %2755
      %vm2789 = vcmask 191648
      %2790 = vst.msk [vmem:[#allocation3] sm:$0xf] %vm2789, %v2694
      %2791 = vst.msk [vmem:[#allocation3 + $0x4] sm:$0xf] %vm2789, %v2696
      %2792 = vst.msk [vmem:[#allocation3 + $0x8] sm:$0xf] %vm2789, %v2698
      %2793 = vst.msk [vmem:[#allocation3 + $0xc] sm:$0xf] %vm2789, %v2700
      %2794 = vst.msk [vmem:[#allocation3 + $0x10] sm:$0xf] %vm2789, %v2702
      %2795 = vst.msk [vmem:[#allocation3 + $0x14] sm:$0xf] %vm2789, %v2704
      %2796 = vst.msk [vmem:[#allocation3 + $0x18] sm:$0xf] %vm2789, %v2706
      %2797 = vst.msk [vmem:[#allocation3 + $0x1c] sm:$0xf] %vm2789, %v2708
      %2798 = vst.msk [vmem:[#allocation3 + $0x20] sm:$0xf] %vm2789, %v2710
      %2799 = vst.msk [vmem:[#allocation3 + $0x24] sm:$0xf] %vm2789, %v2712
      %2800 = vst.msk [vmem:[#allocation3 + $0x28] sm:$0xf] %vm2789, %v2714
      %2801 = vst.msk [vmem:[#allocation3 + $0x2c] sm:$0xf] %vm2789, %v2716
      %2802 = vst.msk [vmem:[#allocation3 + $0x30] sm:$0xf] %vm2789, %v2718
      %2803 = vst.msk [vmem:[#allocation3 + $0x34] sm:$0xf] %vm2789, %v2720
      %2804 = vst.msk [vmem:[#allocation3 + $0x38] sm:$0xf] %vm2789, %v2722
      %2805 = vst.msk [vmem:[#allocation3 + $0x3c] sm:$0xf] %vm2789, %v2724
      %2806 = vst.msk [vmem:[#allocation3 + $0x40] sm:$0xf] %vm2789, %v2726
      %2807 = vst.msk [vmem:[#allocation3 + $0x44] sm:$0xf] %vm2789, %v2728
      %2808 = vst.msk [vmem:[#allocation3 + $0x48] sm:$0xf] %vm2789, %v2730
      %2809 = vst.msk [vmem:[#allocation3 + $0x4c] sm:$0xf] %vm2789, %v2732
      %2810 = vst.msk [vmem:[#allocation3 + $0x50] sm:$0xf] %vm2789, %v2734
      %2811 = vst.msk [vmem:[#allocation3 + $0x54] sm:$0xf] %vm2789, %v2736
      %2812 = vst.msk [vmem:[#allocation3 + $0x58] sm:$0xf] %vm2789, %v2738
      %2813 = vst.msk [vmem:[#allocation3 + $0x5c] sm:$0xf] %vm2789, %v2740
      %2814 = vst.msk [vmem:[#allocation3 + $0x60] sm:$0xf] %vm2789, %v2742
      %2815 = vst.msk [vmem:[#allocation3 + $0x64] sm:$0xf] %vm2789, %v2744
      %2816 = vst.msk [vmem:[#allocation3 + $0x68] sm:$0xf] %vm2789, %v2746
      %2817 = vst.msk [vmem:[#allocation3 + $0x6c] sm:$0xf] %vm2789, %v2748
      %2818 = vst.msk [vmem:[#allocation3 + $0x70] sm:$0xf] %vm2789, %v2750
      %2819 = vst.msk [vmem:[#allocation3 + $0x74] sm:$0xf] %vm2789, %v2752
      %2820 = vst.msk [vmem:[#allocation3 + $0x78] sm:$0xf] %vm2789, %v2754
      %2821 = vst.msk [vmem:[#allocation3 + $0x7c] sm:$0xf] %vm2789, %v2756
      %s2822 = scalar_lea.vmem [#allocation2], 24
      %v2823 = vld [vmem:[%s2822] sm:$0xf]
      %v2824 = vld [vmem:[%s2822 + $0x4] sm:$0xf]
      %v2825 = vld [vmem:[%s2822 + $0xc] sm:$0xf]
      %v2826 = vld [vmem:[%s2822 + $0x10] sm:$0xf]
      %v2827 = vld [vmem:[%s2822 + $0x18] sm:$0xf]
      %v2828 = vld [vmem:[%s2822 + $0x1c] sm:$0xf]
      %v2829 = vld [vmem:[%s2822 + $0x24] sm:$0xf]
      %v2830 = vld [vmem:[%s2822 + $0x28] sm:$0xf]
      %v2831 = vld [vmem:[%s2822 + $0x30] sm:$0xf]
      %v2832 = vld [vmem:[%s2822 + $0x34] sm:$0xf]
      %v2833 = vld [vmem:[%s2822 + $0x3c] sm:$0xf]
      %v2834 = vld [vmem:[%s2822 + $0x40] sm:$0xf]
      %v2835 = vld [vmem:[%s2822 + $0x48] sm:$0xf]
      %v2836 = vld [vmem:[%s2822 + $0x4c] sm:$0xf]
      %v2837 = vld [vmem:[%s2822 + $0x54] sm:$0xf]
      %v2838 = vld [vmem:[%s2822 + $0x58] sm:$0xf]
      %v2839 = vld [vmem:[%s2822 + $0x60] sm:$0xf]
      %v2840 = vld [vmem:[%s2822 + $0x64] sm:$0xf]
      %v2841 = vld [vmem:[%s2822 + $0x6c] sm:$0xf]
      %v2842 = vld [vmem:[%s2822 + $0x70] sm:$0xf]
      %v2843 = vld [vmem:[%s2822 + $0x78] sm:$0xf]
      %v2844 = vld [vmem:[%s2822 + $0x7c] sm:$0xf]
      %v2845 = vld [vmem:[%s2822 + $0x84] sm:$0xf]
      %v2846 = vld [vmem:[%s2822 + $0x88] sm:$0xf]
      %v2847 = vld [vmem:[%s2822 + $0x90] sm:$0xf]
      %v2848 = vld [vmem:[%s2822 + $0x94] sm:$0xf]
      %v2849 = vld [vmem:[%s2822 + $0x9c] sm:$0xf]
      %v2850 = vld [vmem:[%s2822 + $0xa0] sm:$0xf]
      %v2851 = vld [vmem:[%s2822 + $0xa8] sm:$0xf]
      %v2852 = vld [vmem:[%s2822 + $0xac] sm:$0xf]
      %v2853 = vld [vmem:[%s2822 + $0xb4] sm:$0xf]
      %v2854 = vld [vmem:[%s2822 + $0xb8] sm:$0xf]
      %2887 = vrot.lane.b32.xlu0 %v2823, 24
      %v2888 = vpop.permute.xlu0 %2887
      %2889 = vrot.lane.b32.xlu0 %v2824, 24
      %v2890 = vpop.permute.xlu0 %2889
      %2891 = vrot.lane.b32.xlu0 %v2825, 24
      %v2892 = vpop.permute.xlu0 %2891
      %2893 = vrot.lane.b32.xlu0 %v2826, 24
      %v2894 = vpop.permute.xlu0 %2893
      %2895 = vrot.lane.b32.xlu0 %v2827, 24
      %v2896 = vpop.permute.xlu0 %2895
      %2897 = vrot.lane.b32.xlu0 %v2828, 24
      %v2898 = vpop.permute.xlu0 %2897
      %2899 = vrot.lane.b32.xlu0 %v2829, 24
      %v2900 = vpop.permute.xlu0 %2899
      %2901 = vrot.lane.b32.xlu0 %v2830, 24
      %v2902 = vpop.permute.xlu0 %2901
      %2903 = vrot.lane.b32.xlu0 %v2831, 24
      %v2904 = vpop.permute.xlu0 %2903
      %2905 = vrot.lane.b32.xlu0 %v2832, 24
      %v2906 = vpop.permute.xlu0 %2905
      %2907 = vrot.lane.b32.xlu0 %v2833, 24
      %v2908 = vpop.permute.xlu0 %2907
      %2909 = vrot.lane.b32.xlu0 %v2834, 24
      %v2910 = vpop.permute.xlu0 %2909
      %2911 = vrot.lane.b32.xlu0 %v2835, 24
      %v2912 = vpop.permute.xlu0 %2911
      %2913 = vrot.lane.b32.xlu0 %v2836, 24
      %v2914 = vpop.permute.xlu0 %2913
      %2915 = vrot.lane.b32.xlu0 %v2837, 24
      %v2916 = vpop.permute.xlu0 %2915
      %2917 = vrot.lane.b32.xlu0 %v2838, 24
      %v2918 = vpop.permute.xlu0 %2917
      %2919 = vrot.lane.b32.xlu0 %v2839, 24
      %v2920 = vpop.permute.xlu0 %2919
      %2921 = vrot.lane.b32.xlu0 %v2840, 24
      %v2922 = vpop.permute.xlu0 %2921
      %2923 = vrot.lane.b32.xlu0 %v2841, 24
      %v2924 = vpop.permute.xlu0 %2923
      %2925 = vrot.lane.b32.xlu0 %v2842, 24
      %v2926 = vpop.permute.xlu0 %2925
      %2927 = vrot.lane.b32.xlu0 %v2843, 24
      %v2928 = vpop.permute.xlu0 %2927
      %2929 = vrot.lane.b32.xlu0 %v2844, 24
      %v2930 = vpop.permute.xlu0 %2929
      %2931 = vrot.lane.b32.xlu0 %v2845, 24
      %v2932 = vpop.permute.xlu0 %2931
      %2933 = vrot.lane.b32.xlu0 %v2846, 24
      %v2934 = vpop.permute.xlu0 %2933
      %2935 = vrot.lane.b32.xlu0 %v2847, 24
      %v2936 = vpop.permute.xlu0 %2935
      %2937 = vrot.lane.b32.xlu0 %v2848, 24
      %v2938 = vpop.permute.xlu0 %2937
      %2939 = vrot.lane.b32.xlu0 %v2849, 24
      %v2940 = vpop.permute.xlu0 %2939
      %2941 = vrot.lane.b32.xlu0 %v2850, 24
      %v2942 = vpop.permute.xlu0 %2941
      %2943 = vrot.lane.b32.xlu0 %v2851, 24
      %v2944 = vpop.permute.xlu0 %2943
      %2945 = vrot.lane.b32.xlu0 %v2852, 24
      %v2946 = vpop.permute.xlu0 %2945
      %2947 = vrot.lane.b32.xlu0 %v2853, 24
      %v2948 = vpop.permute.xlu0 %2947
      %2949 = vrot.lane.b32.xlu0 %v2854, 24
      %v2950 = vpop.permute.xlu0 %2949
      %vm2983 = vcmask 224448
      %2984 = vst.msk [vmem:[#allocation3] sm:$0xf] %vm2983, %v2888
      %2985 = vst.msk [vmem:[#allocation3 + $0x4] sm:$0xf] %vm2983, %v2890
      %2986 = vst.msk [vmem:[#allocation3 + $0x8] sm:$0xf] %vm2983, %v2892
      %2987 = vst.msk [vmem:[#allocation3 + $0xc] sm:$0xf] %vm2983, %v2894
      %2988 = vst.msk [vmem:[#allocation3 + $0x10] sm:$0xf] %vm2983, %v2896
      %2989 = vst.msk [vmem:[#allocation3 + $0x14] sm:$0xf] %vm2983, %v2898
      %2990 = vst.msk [vmem:[#allocation3 + $0x18] sm:$0xf] %vm2983, %v2900
      %2991 = vst.msk [vmem:[#allocation3 + $0x1c] sm:$0xf] %vm2983, %v2902
      %2992 = vst.msk [vmem:[#allocation3 + $0x20] sm:$0xf] %vm2983, %v2904
      %2993 = vst.msk [vmem:[#allocation3 + $0x24] sm:$0xf] %vm2983, %v2906
      %2994 = vst.msk [vmem:[#allocation3 + $0x28] sm:$0xf] %vm2983, %v2908
      %2995 = vst.msk [vmem:[#allocation3 + $0x2c] sm:$0xf] %vm2983, %v2910
      %2996 = vst.msk [vmem:[#allocation3 + $0x30] sm:$0xf] %vm2983, %v2912
      %2997 = vst.msk [vmem:[#allocation3 + $0x34] sm:$0xf] %vm2983, %v2914
      %2998 = vst.msk [vmem:[#allocation3 + $0x38] sm:$0xf] %vm2983, %v2916
      %2999 = vst.msk [vmem:[#allocation3 + $0x3c] sm:$0xf] %vm2983, %v2918
      %3000 = vst.msk [vmem:[#allocation3 + $0x40] sm:$0xf] %vm2983, %v2920
      %3001 = vst.msk [vmem:[#allocation3 + $0x44] sm:$0xf] %vm2983, %v2922
      %3002 = vst.msk [vmem:[#allocation3 + $0x48] sm:$0xf] %vm2983, %v2924
      %3003 = vst.msk [vmem:[#allocation3 + $0x4c] sm:$0xf] %vm2983, %v2926
      %3004 = vst.msk [vmem:[#allocation3 + $0x50] sm:$0xf] %vm2983, %v2928
      %3005 = vst.msk [vmem:[#allocation3 + $0x54] sm:$0xf] %vm2983, %v2930
      %3006 = vst.msk [vmem:[#allocation3 + $0x58] sm:$0xf] %vm2983, %v2932
      %3007 = vst.msk [vmem:[#allocation3 + $0x5c] sm:$0xf] %vm2983, %v2934
      %3008 = vst.msk [vmem:[#allocation3 + $0x60] sm:$0xf] %vm2983, %v2936
      %3009 = vst.msk [vmem:[#allocation3 + $0x64] sm:$0xf] %vm2983, %v2938
      %3010 = vst.msk [vmem:[#allocation3 + $0x68] sm:$0xf] %vm2983, %v2940
      %3011 = vst.msk [vmem:[#allocation3 + $0x6c] sm:$0xf] %vm2983, %v2942
      %3012 = vst.msk [vmem:[#allocation3 + $0x70] sm:$0xf] %vm2983, %v2944
      %3013 = vst.msk [vmem:[#allocation3 + $0x74] sm:$0xf] %vm2983, %v2946
      %3014 = vst.msk [vmem:[#allocation3 + $0x78] sm:$0xf] %vm2983, %v2948
      %3015 = vst.msk [vmem:[#allocation3 + $0x7c] sm:$0xf] %vm2983, %v2950
      %v3016 = vld [vmem:[%s2822] sm:$0xf]
      %v3017 = vld [vmem:[%s2822 + $0x4] sm:$0xf]
      %v3018 = vld [vmem:[%s2822 + $0x8] sm:$0x1]
      %v3019 = vld [vmem:[%s2822 + $0xc] sm:$0xf]
      %v3020 = vld [vmem:[%s2822 + $0x10] sm:$0xf]
      %v3021 = vld [vmem:[%s2822 + $0x14] sm:$0x1]
      %v3022 = vld [vmem:[%s2822 + $0x18] sm:$0xf]
      %v3023 = vld [vmem:[%s2822 + $0x1c] sm:$0xf]
      %v3024 = vld [vmem:[%s2822 + $0x20] sm:$0x1]
      %v3025 = vld [vmem:[%s2822 + $0x24] sm:$0xf]
      %v3026 = vld [vmem:[%s2822 + $0x28] sm:$0xf]
      %v3027 = vld [vmem:[%s2822 + $0x2c] sm:$0x1]
      %v3028 = vld [vmem:[%s2822 + $0x30] sm:$0xf]
      %v3029 = vld [vmem:[%s2822 + $0x34] sm:$0xf]
      %v3030 = vld [vmem:[%s2822 + $0x38] sm:$0x1]
      %v3031 = vld [vmem:[%s2822 + $0x3c] sm:$0xf]
      %v3032 = vld [vmem:[%s2822 + $0x40] sm:$0xf]
      %v3033 = vld [vmem:[%s2822 + $0x44] sm:$0x1]
      %v3034 = vld [vmem:[%s2822 + $0x48] sm:$0xf]
      %v3035 = vld [vmem:[%s2822 + $0x4c] sm:$0xf]
      %v3036 = vld [vmem:[%s2822 + $0x50] sm:$0x1]
      %v3037 = vld [vmem:[%s2822 + $0x54] sm:$0xf]
      %v3038 = vld [vmem:[%s2822 + $0x58] sm:$0xf]
      %v3039 = vld [vmem:[%s2822 + $0x5c] sm:$0x1]
      %v3040 = vld [vmem:[%s2822 + $0x60] sm:$0xf]
      %v3041 = vld [vmem:[%s2822 + $0x64] sm:$0xf]
      %v3042 = vld [vmem:[%s2822 + $0x68] sm:$0x1]
      %v3043 = vld [vmem:[%s2822 + $0x6c] sm:$0xf]
      %v3044 = vld [vmem:[%s2822 + $0x70] sm:$0xf]
      %v3045 = vld [vmem:[%s2822 + $0x74] sm:$0x1]
      %v3046 = vld [vmem:[%s2822 + $0x78] sm:$0xf]
      %v3047 = vld [vmem:[%s2822 + $0x7c] sm:$0xf]
      %v3048 = vld [vmem:[%s2822 + $0x80] sm:$0x1]
      %v3049 = vld [vmem:[%s2822 + $0x84] sm:$0xf]
      %v3050 = vld [vmem:[%s2822 + $0x88] sm:$0xf]
      %v3051 = vld [vmem:[%s2822 + $0x8c] sm:$0x1]
      %v3052 = vld [vmem:[%s2822 + $0x90] sm:$0xf]
      %v3053 = vld [vmem:[%s2822 + $0x94] sm:$0xf]
      %v3054 = vld [vmem:[%s2822 + $0x98] sm:$0x1]
      %v3055 = vld [vmem:[%s2822 + $0x9c] sm:$0xf]
      %v3056 = vld [vmem:[%s2822 + $0xa0] sm:$0xf]
      %v3057 = vld [vmem:[%s2822 + $0xa4] sm:$0x1]
      %v3058 = vld [vmem:[%s2822 + $0xa8] sm:$0xf]
      %v3059 = vld [vmem:[%s2822 + $0xac] sm:$0xf]
      %v3060 = vld [vmem:[%s2822 + $0xb0] sm:$0x1]
      %v3061 = vld [vmem:[%s2822 + $0xb4] sm:$0xf]
      %v3062 = vld [vmem:[%s2822 + $0xb8] sm:$0xf]
      %v3063 = vld [vmem:[%s2822 + $0xbc] sm:$0x1]
      %v3065 = vshrl.u32 %v3016, 16
      %v3067 = vrot.slane %v3065, 4
      %v3068 = vshll.u32 %v3016, 16
      %v3070 = vrot.slane %v3068, 5
      %v3071 = vor.u32 %v3067, %v3070
      %v3072 = vrot.slane %v3071, 4
      %v3074 = vshll.u32 %v3017, 16
      %v3076 = vrot.slane %v3074, 5
      %v3077 = vsel %vm877, %v3072, %v3076
      %v3078 = vshrl.u32 %v3017, 16
      %v3080 = vrot.slane %v3078, 4
      %v3081 = vor.u32 %v3080, %v3076
      %v3082 = vrot.slane %v3081, 4
      %v3084 = vshll.u32 %v3018, 16
      %v3086 = vrot.slane %v3084, 5
      %v3087 = vsel %vm877, %v3082, %v3086
      %v3089 = vshrl.u32 %v3019, 16
      %v3091 = vrot.slane %v3089, 4
      %v3092 = vshll.u32 %v3019, 16
      %v3094 = vrot.slane %v3092, 5
      %v3095 = vor.u32 %v3091, %v3094
      %v3096 = vrot.slane %v3095, 4
      %v3098 = vshll.u32 %v3020, 16
      %v3100 = vrot.slane %v3098, 5
      %v3101 = vsel %vm877, %v3096, %v3100
      %v3102 = vshrl.u32 %v3020, 16
      %v3104 = vrot.slane %v3102, 4
      %v3105 = vor.u32 %v3104, %v3100
      %v3106 = vrot.slane %v3105, 4
      %v3108 = vshll.u32 %v3021, 16
      %v3110 = vrot.slane %v3108, 5
      %v3111 = vsel %vm877, %v3106, %v3110
      %v3113 = vshrl.u32 %v3022, 16
      %v3115 = vrot.slane %v3113, 4
      %v3116 = vshll.u32 %v3022, 16
      %v3118 = vrot.slane %v3116, 5
      %v3119 = vor.u32 %v3115, %v3118
      %v3120 = vrot.slane %v3119, 4
      %v3122 = vshll.u32 %v3023, 16
      %v3124 = vrot.slane %v3122, 5
      %v3125 = vsel %vm877, %v3120, %v3124
      %v3126 = vshrl.u32 %v3023, 16
      %v3128 = vrot.slane %v3126, 4
      %v3129 = vor.u32 %v3128, %v3124
      %v3130 = vrot.slane %v3129, 4
      %v3132 = vshll.u32 %v3024, 16
      %v3134 = vrot.slane %v3132, 5
      %v3135 = vsel %vm877, %v3130, %v3134
      %v3137 = vshrl.u32 %v3025, 16
      %v3139 = vrot.slane %v3137, 4
      %v3140 = vshll.u32 %v3025, 16
      %v3142 = vrot.slane %v3140, 5
      %v3143 = vor.u32 %v3139, %v3142
      %v3144 = vrot.slane %v3143, 4
      %v3146 = vshll.u32 %v3026, 16
      %v3148 = vrot.slane %v3146, 5
      %v3149 = vsel %vm877, %v3144, %v3148
      %v3150 = vshrl.u32 %v3026, 16
      %v3152 = vrot.slane %v3150, 4
      %v3153 = vor.u32 %v3152, %v3148
      %v3154 = vrot.slane %v3153, 4
      %v3156 = vshll.u32 %v3027, 16
      %v3158 = vrot.slane %v3156, 5
      %v3159 = vsel %vm877, %v3154, %v3158
      %v3161 = vshrl.u32 %v3028, 16
      %v3163 = vrot.slane %v3161, 4
      %v3164 = vshll.u32 %v3028, 16
      %v3166 = vrot.slane %v3164, 5
      %v3167 = vor.u32 %v3163, %v3166
      %v3168 = vrot.slane %v3167, 4
      %v3170 = vshll.u32 %v3029, 16
      %v3172 = vrot.slane %v3170, 5
      %v3173 = vsel %vm877, %v3168, %v3172
      %v3174 = vshrl.u32 %v3029, 16
      %v3176 = vrot.slane %v3174, 4
      %v3177 = vor.u32 %v3176, %v3172
      %v3178 = vrot.slane %v3177, 4
      %v3180 = vshll.u32 %v3030, 16
      %v3182 = vrot.slane %v3180, 5
      %v3183 = vsel %vm877, %v3178, %v3182
      %v3185 = vshrl.u32 %v3031, 16
      %v3187 = vrot.slane %v3185, 4
      %v3188 = vshll.u32 %v3031, 16
      %v3190 = vrot.slane %v3188, 5
      %v3191 = vor.u32 %v3187, %v3190
      %v3192 = vrot.slane %v3191, 4
      %v3194 = vshll.u32 %v3032, 16
      %v3196 = vrot.slane %v3194, 5
      %v3197 = vsel %vm877, %v3192, %v3196
      %v3198 = vshrl.u32 %v3032, 16
      %v3200 = vrot.slane %v3198, 4
      %v3201 = vor.u32 %v3200, %v3196
      %v3202 = vrot.slane %v3201, 4
      %v3204 = vshll.u32 %v3033, 16
      %v3206 = vrot.slane %v3204, 5
      %v3207 = vsel %vm877, %v3202, %v3206
      %v3209 = vshrl.u32 %v3034, 16
      %v3211 = vrot.slane %v3209, 4
      %v3212 = vshll.u32 %v3034, 16
      %v3214 = vrot.slane %v3212, 5
      %v3215 = vor.u32 %v3211, %v3214
      %v3216 = vrot.slane %v3215, 4
      %v3218 = vshll.u32 %v3035, 16
      %v3220 = vrot.slane %v3218, 5
      %v3221 = vsel %vm877, %v3216, %v3220
      %v3222 = vshrl.u32 %v3035, 16
      %v3224 = vrot.slane %v3222, 4
      %v3225 = vor.u32 %v3224, %v3220
      %v3226 = vrot.slane %v3225, 4
      %v3228 = vshll.u32 %v3036, 16
      %v3230 = vrot.slane %v3228, 5
      %v3231 = vsel %vm877, %v3226, %v3230
      %v3233 = vshrl.u32 %v3037, 16
      %v3235 = vrot.slane %v3233, 4
      %v3236 = vshll.u32 %v3037, 16
      %v3238 = vrot.slane %v3236, 5
      %v3239 = vor.u32 %v3235, %v3238
      %v3240 = vrot.slane %v3239, 4
      %v3242 = vshll.u32 %v3038, 16
      %v3244 = vrot.slane %v3242, 5
      %v3245 = vsel %vm877, %v3240, %v3244
      %v3246 = vshrl.u32 %v3038, 16
      %v3248 = vrot.slane %v3246, 4
      %v3249 = vor.u32 %v3248, %v3244
      %v3250 = vrot.slane %v3249, 4
      %v3252 = vshll.u32 %v3039, 16
      %v3254 = vrot.slane %v3252, 5
      %v3255 = vsel %vm877, %v3250, %v3254
      %v3257 = vshrl.u32 %v3040, 16
      %v3259 = vrot.slane %v3257, 4
      %v3260 = vshll.u32 %v3040, 16
      %v3262 = vrot.slane %v3260, 5
      %v3263 = vor.u32 %v3259, %v3262
      %v3264 = vrot.slane %v3263, 4
      %v3266 = vshll.u32 %v3041, 16
      %v3268 = vrot.slane %v3266, 5
      %v3269 = vsel %vm877, %v3264, %v3268
      %v3270 = vshrl.u32 %v3041, 16
      %v3272 = vrot.slane %v3270, 4
      %v3273 = vor.u32 %v3272, %v3268
      %v3274 = vrot.slane %v3273, 4
      %v3276 = vshll.u32 %v3042, 16
      %v3278 = vrot.slane %v3276, 5
      %v3279 = vsel %vm877, %v3274, %v3278
      %v3281 = vshrl.u32 %v3043, 16
      %v3283 = vrot.slane %v3281, 4
      %v3284 = vshll.u32 %v3043, 16
      %v3286 = vrot.slane %v3284, 5
      %v3287 = vor.u32 %v3283, %v3286
      %v3288 = vrot.slane %v3287, 4
      %v3290 = vshll.u32 %v3044, 16
      %v3292 = vrot.slane %v3290, 5
      %v3293 = vsel %vm877, %v3288, %v3292
      %v3294 = vshrl.u32 %v3044, 16
      %v3296 = vrot.slane %v3294, 4
      %v3297 = vor.u32 %v3296, %v3292
      %v3298 = vrot.slane %v3297, 4
      %v3300 = vshll.u32 %v3045, 16
      %v3302 = vrot.slane %v3300, 5
      %v3303 = vsel %vm877, %v3298, %v3302
      %v3305 = vshrl.u32 %v3046, 16
      %v3307 = vrot.slane %v3305, 4
      %v3308 = vshll.u32 %v3046, 16
      %v3310 = vrot.slane %v3308, 5
      %v3311 = vor.u32 %v3307, %v3310
      %v3312 = vrot.slane %v3311, 4
      %v3314 = vshll.u32 %v3047, 16
      %v3316 = vrot.slane %v3314, 5
      %v3317 = vsel %vm877, %v3312, %v3316
      %v3318 = vshrl.u32 %v3047, 16
      %v3320 = vrot.slane %v3318, 4
      %v3321 = vor.u32 %v3320, %v3316
      %v3322 = vrot.slane %v3321, 4
      %v3324 = vshll.u32 %v3048, 16
      %v3326 = vrot.slane %v3324, 5
      %v3327 = vsel %vm877, %v3322, %v3326
      %v3329 = vshrl.u32 %v3049, 16
      %v3331 = vrot.slane %v3329, 4
      %v3332 = vshll.u32 %v3049, 16
      %v3334 = vrot.slane %v3332, 5
      %v3335 = vor.u32 %v3331, %v3334
      %v3336 = vrot.slane %v3335, 4
      %v3338 = vshll.u32 %v3050, 16
      %v3340 = vrot.slane %v3338, 5
      %v3341 = vsel %vm877, %v3336, %v3340
      %v3342 = vshrl.u32 %v3050, 16
      %v3344 = vrot.slane %v3342, 4
      %v3345 = vor.u32 %v3344, %v3340
      %v3346 = vrot.slane %v3345, 4
      %v3348 = vshll.u32 %v3051, 16
      %v3350 = vrot.slane %v3348, 5
      %v3351 = vsel %vm877, %v3346, %v3350
      %v3353 = vshrl.u32 %v3052, 16
      %v3355 = vrot.slane %v3353, 4
      %v3356 = vshll.u32 %v3052, 16
      %v3358 = vrot.slane %v3356, 5
      %v3359 = vor.u32 %v3355, %v3358
      %v3360 = vrot.slane %v3359, 4
      %v3362 = vshll.u32 %v3053, 16
      %v3364 = vrot.slane %v3362, 5
      %v3365 = vsel %vm877, %v3360, %v3364
      %v3366 = vshrl.u32 %v3053, 16
      %v3368 = vrot.slane %v3366, 4
      %v3369 = vor.u32 %v3368, %v3364
      %v3370 = vrot.slane %v3369, 4
      %v3372 = vshll.u32 %v3054, 16
      %v3374 = vrot.slane %v3372, 5
      %v3375 = vsel %vm877, %v3370, %v3374
      %v3377 = vshrl.u32 %v3055, 16
      %v3379 = vrot.slane %v3377, 4
      %v3380 = vshll.u32 %v3055, 16
      %v3382 = vrot.slane %v3380, 5
      %v3383 = vor.u32 %v3379, %v3382
      %v3384 = vrot.slane %v3383, 4
      %v3386 = vshll.u32 %v3056, 16
      %v3388 = vrot.slane %v3386, 5
      %v3389 = vsel %vm877, %v3384, %v3388
      %v3390 = vshrl.u32 %v3056, 16
      %v3392 = vrot.slane %v3390, 4
      %v3393 = vor.u32 %v3392, %v3388
      %v3394 = vrot.slane %v3393, 4
      %v3396 = vshll.u32 %v3057, 16
      %v3398 = vrot.slane %v3396, 5
      %v3399 = vsel %vm877, %v3394, %v3398
      %v3401 = vshrl.u32 %v3058, 16
      %v3403 = vrot.slane %v3401, 4
      %v3404 = vshll.u32 %v3058, 16
      %v3406 = vrot.slane %v3404, 5
      %v3407 = vor.u32 %v3403, %v3406
      %v3408 = vrot.slane %v3407, 4
      %v3410 = vshll.u32 %v3059, 16
      %v3412 = vrot.slane %v3410, 5
      %v3413 = vsel %vm877, %v3408, %v3412
      %v3414 = vshrl.u32 %v3059, 16
      %v3416 = vrot.slane %v3414, 4
      %v3417 = vor.u32 %v3416, %v3412
      %v3418 = vrot.slane %v3417, 4
      %v3420 = vshll.u32 %v3060, 16
      %v3422 = vrot.slane %v3420, 5
      %v3423 = vsel %vm877, %v3418, %v3422
      %v3425 = vshrl.u32 %v3061, 16
      %v3427 = vrot.slane %v3425, 4
      %v3428 = vshll.u32 %v3061, 16
      %v3430 = vrot.slane %v3428, 5
      %v3431 = vor.u32 %v3427, %v3430
      %v3432 = vrot.slane %v3431, 4
      %v3434 = vshll.u32 %v3062, 16
      %v3436 = vrot.slane %v3434, 5
      %v3437 = vsel %vm877, %v3432, %v3436
      %v3438 = vshrl.u32 %v3062, 16
      %v3440 = vrot.slane %v3438, 4
      %v3441 = vor.u32 %v3440, %v3436
      %v3442 = vrot.slane %v3441, 4
      %v3444 = vshll.u32 %v3063, 16
      %v3446 = vrot.slane %v3444, 5
      %v3447 = vsel %vm877, %v3442, %v3446
      %3448 = vrot.lane.b32.xlu0 %v3077, 28
      %v3449 = vpop.permute.xlu0 %3448
      %3450 = vrot.lane.b32.xlu0 %v3087, 28
      %v3451 = vpop.permute.xlu0 %3450
      %3452 = vrot.lane.b32.xlu0 %v3101, 28
      %v3453 = vpop.permute.xlu0 %3452
      %3454 = vrot.lane.b32.xlu0 %v3111, 28
      %v3455 = vpop.permute.xlu0 %3454
      %3456 = vrot.lane.b32.xlu0 %v3125, 28
      %v3457 = vpop.permute.xlu0 %3456
      %3458 = vrot.lane.b32.xlu0 %v3135, 28
      %v3459 = vpop.permute.xlu0 %3458
      %3460 = vrot.lane.b32.xlu0 %v3149, 28
      %v3461 = vpop.permute.xlu0 %3460
      %3462 = vrot.lane.b32.xlu0 %v3159, 28
      %v3463 = vpop.permute.xlu0 %3462
      %3464 = vrot.lane.b32.xlu0 %v3173, 28
      %v3465 = vpop.permute.xlu0 %3464
      %3466 = vrot.lane.b32.xlu0 %v3183, 28
      %v3467 = vpop.permute.xlu0 %3466
      %3468 = vrot.lane.b32.xlu0 %v3197, 28
      %v3469 = vpop.permute.xlu0 %3468
      %3470 = vrot.lane.b32.xlu0 %v3207, 28
      %v3471 = vpop.permute.xlu0 %3470
      %3472 = vrot.lane.b32.xlu0 %v3221, 28
      %v3473 = vpop.permute.xlu0 %3472
      %3474 = vrot.lane.b32.xlu0 %v3231, 28
      %v3475 = vpop.permute.xlu0 %3474
      %3476 = vrot.lane.b32.xlu0 %v3245, 28
      %v3477 = vpop.permute.xlu0 %3476
      %3478 = vrot.lane.b32.xlu0 %v3255, 28
      %v3479 = vpop.permute.xlu0 %3478
      %3480 = vrot.lane.b32.xlu0 %v3269, 28
      %v3481 = vpop.permute.xlu0 %3480
      %3482 = vrot.lane.b32.xlu0 %v3279, 28
      %v3483 = vpop.permute.xlu0 %3482
      %3484 = vrot.lane.b32.xlu0 %v3293, 28
      %v3485 = vpop.permute.xlu0 %3484
      %3486 = vrot.lane.b32.xlu0 %v3303, 28
      %v3487 = vpop.permute.xlu0 %3486
      %3488 = vrot.lane.b32.xlu0 %v3317, 28
      %v3489 = vpop.permute.xlu0 %3488
      %3490 = vrot.lane.b32.xlu0 %v3327, 28
      %v3491 = vpop.permute.xlu0 %3490
      %3492 = vrot.lane.b32.xlu0 %v3341, 28
      %v3493 = vpop.permute.xlu0 %3492
      %3494 = vrot.lane.b32.xlu0 %v3351, 28
      %v3495 = vpop.permute.xlu0 %3494
      %3496 = vrot.lane.b32.xlu0 %v3365, 28
      %v3497 = vpop.permute.xlu0 %3496
      %3498 = vrot.lane.b32.xlu0 %v3375, 28
      %v3499 = vpop.permute.xlu0 %3498
      %3500 = vrot.lane.b32.xlu0 %v3389, 28
      %v3501 = vpop.permute.xlu0 %3500
      %3502 = vrot.lane.b32.xlu0 %v3399, 28
      %v3503 = vpop.permute.xlu0 %3502
      %3504 = vrot.lane.b32.xlu0 %v3413, 28
      %v3505 = vpop.permute.xlu0 %3504
      %3506 = vrot.lane.b32.xlu0 %v3423, 28
      %v3507 = vpop.permute.xlu0 %3506
      %3508 = vrot.lane.b32.xlu0 %v3437, 28
      %v3509 = vpop.permute.xlu0 %3508
      %3510 = vrot.lane.b32.xlu0 %v3447, 28
      %v3511 = vpop.permute.xlu0 %3510
      %vm3544 = vcmask 257248
      %3545 = vst.msk [vmem:[#allocation3] sm:$0xf] %vm3544, %v3449
      %3546 = vst.msk [vmem:[#allocation3 + $0x4] sm:$0xf] %vm3544, %v3451
      %3547 = vst.msk [vmem:[#allocation3 + $0x8] sm:$0xf] %vm3544, %v3453
      %3548 = vst.msk [vmem:[#allocation3 + $0xc] sm:$0xf] %vm3544, %v3455
      %3549 = vst.msk [vmem:[#allocation3 + $0x10] sm:$0xf] %vm3544, %v3457
      %3550 = vst.msk [vmem:[#allocation3 + $0x14] sm:$0xf] %vm3544, %v3459
      %3551 = vst.msk [vmem:[#allocation3 + $0x18] sm:$0xf] %vm3544, %v3461
      %3552 = vst.msk [vmem:[#allocation3 + $0x1c] sm:$0xf] %vm3544, %v3463
      %3553 = vst.msk [vmem:[#allocation3 + $0x20] sm:$0xf] %vm3544, %v3465
      %3554 = vst.msk [vmem:[#allocation3 + $0x24] sm:$0xf] %vm3544, %v3467
      %3555 = vst.msk [vmem:[#allocation3 + $0x28] sm:$0xf] %vm3544, %v3469
      %3556 = vst.msk [vmem:[#allocation3 + $0x2c] sm:$0xf] %vm3544, %v3471
      %3557 = vst.msk [vmem:[#allocation3 + $0x30] sm:$0xf] %vm3544, %v3473
      %3558 = vst.msk [vmem:[#allocation3 + $0x34] sm:$0xf] %vm3544, %v3475
      %3559 = vst.msk [vmem:[#allocation3 + $0x38] sm:$0xf] %vm3544, %v3477
      %3560 = vst.msk [vmem:[#allocation3 + $0x3c] sm:$0xf] %vm3544, %v3479
      %3561 = vst.msk [vmem:[#allocation3 + $0x40] sm:$0xf] %vm3544, %v3481
      %3562 = vst.msk [vmem:[#allocation3 + $0x44] sm:$0xf] %vm3544, %v3483
      %3563 = vst.msk [vmem:[#allocation3 + $0x48] sm:$0xf] %vm3544, %v3485
      %3564 = vst.msk [vmem:[#allocation3 + $0x4c] sm:$0xf] %vm3544, %v3487
      %3565 = vst.msk [vmem:[#allocation3 + $0x50] sm:$0xf] %vm3544, %v3489
      %3566 = vst.msk [vmem:[#allocation3 + $0x54] sm:$0xf] %vm3544, %v3491
      %3567 = vst.msk [vmem:[#allocation3 + $0x58] sm:$0xf] %vm3544, %v3493
      %3568 = vst.msk [vmem:[#allocation3 + $0x5c] sm:$0xf] %vm3544, %v3495
      %3569 = vst.msk [vmem:[#allocation3 + $0x60] sm:$0xf] %vm3544, %v3497
      %3570 = vst.msk [vmem:[#allocation3 + $0x64] sm:$0xf] %vm3544, %v3499
      %3571 = vst.msk [vmem:[#allocation3 + $0x68] sm:$0xf] %vm3544, %v3501
      %3572 = vst.msk [vmem:[#allocation3 + $0x6c] sm:$0xf] %vm3544, %v3503
      %3573 = vst.msk [vmem:[#allocation3 + $0x70] sm:$0xf] %vm3544, %v3505
      %3574 = vst.msk [vmem:[#allocation3 + $0x74] sm:$0xf] %vm3544, %v3507
      %3575 = vst.msk [vmem:[#allocation3 + $0x78] sm:$0xf] %vm3544, %v3509
      %3576 = vst.msk [vmem:[#allocation3 + $0x7c] sm:$0xf] %vm3544, %v3511
      %v3577 = vld [vmem:[%s2822] sm:$0xe]
      %v3578 = vld [vmem:[%s2822 + $0x4] sm:$0xf]
      %v3579 = vld [vmem:[%s2822 + $0x8] sm:$0x1]
      %v3580 = vld [vmem:[%s2822 + $0xc] sm:$0xe]
      %v3581 = vld [vmem:[%s2822 + $0x10] sm:$0xf]
      %v3582 = vld [vmem:[%s2822 + $0x14] sm:$0x1]
      %v3583 = vld [vmem:[%s2822 + $0x18] sm:$0xe]
      %v3584 = vld [vmem:[%s2822 + $0x1c] sm:$0xf]
      %v3585 = vld [vmem:[%s2822 + $0x20] sm:$0x1]
      %v3586 = vld [vmem:[%s2822 + $0x24] sm:$0xe]
      %v3587 = vld [vmem:[%s2822 + $0x28] sm:$0xf]
      %v3588 = vld [vmem:[%s2822 + $0x2c] sm:$0x1]
      %v3589 = vld [vmem:[%s2822 + $0x30] sm:$0xe]
      %v3590 = vld [vmem:[%s2822 + $0x34] sm:$0xf]
      %v3591 = vld [vmem:[%s2822 + $0x38] sm:$0x1]
      %v3592 = vld [vmem:[%s2822 + $0x3c] sm:$0xe]
      %v3593 = vld [vmem:[%s2822 + $0x40] sm:$0xf]
      %v3594 = vld [vmem:[%s2822 + $0x44] sm:$0x1]
      %v3595 = vld [vmem:[%s2822 + $0x48] sm:$0xe]
      %v3596 = vld [vmem:[%s2822 + $0x4c] sm:$0xf]
      %v3597 = vld [vmem:[%s2822 + $0x50] sm:$0x1]
      %v3598 = vld [vmem:[%s2822 + $0x54] sm:$0xe]
      %v3599 = vld [vmem:[%s2822 + $0x58] sm:$0xf]
      %v3600 = vld [vmem:[%s2822 + $0x5c] sm:$0x1]
      %v3601 = vld [vmem:[%s2822 + $0x60] sm:$0xe]
      %v3602 = vld [vmem:[%s2822 + $0x64] sm:$0xf]
      %v3603 = vld [vmem:[%s2822 + $0x68] sm:$0x1]
      %v3604 = vld [vmem:[%s2822 + $0x6c] sm:$0xe]
      %v3605 = vld [vmem:[%s2822 + $0x70] sm:$0xf]
      %v3606 = vld [vmem:[%s2822 + $0x74] sm:$0x1]
      %v3607 = vld [vmem:[%s2822 + $0x78] sm:$0xe]
      %v3608 = vld [vmem:[%s2822 + $0x7c] sm:$0xf]
      %v3609 = vld [vmem:[%s2822 + $0x80] sm:$0x1]
      %v3610 = vld [vmem:[%s2822 + $0x84] sm:$0xe]
      %v3611 = vld [vmem:[%s2822 + $0x88] sm:$0xf]
      %v3612 = vld [vmem:[%s2822 + $0x8c] sm:$0x1]
      %v3613 = vld [vmem:[%s2822 + $0x90] sm:$0xe]
      %v3614 = vld [vmem:[%s2822 + $0x94] sm:$0xf]
      %v3615 = vld [vmem:[%s2822 + $0x98] sm:$0x1]
      %v3616 = vld [vmem:[%s2822 + $0x9c] sm:$0xe]
      %v3617 = vld [vmem:[%s2822 + $0xa0] sm:$0xf]
      %v3618 = vld [vmem:[%s2822 + $0xa4] sm:$0x1]
      %v3619 = vld [vmem:[%s2822 + $0xa8] sm:$0xe]
      %v3620 = vld [vmem:[%s2822 + $0xac] sm:$0xf]
      %v3621 = vld [vmem:[%s2822 + $0xb0] sm:$0x1]
      %v3622 = vld [vmem:[%s2822 + $0xb4] sm:$0xe]
      %v3623 = vld [vmem:[%s2822 + $0xb8] sm:$0xf]
      %v3624 = vld [vmem:[%s2822 + $0xbc] sm:$0x1]
      %v3673 = vrot.slane %v3577, 5
      %v3674 = vrot.slane %v3673, 4
      %v3675 = vrot.slane %v3578, 5
      %v3676 = vsel %vm1489, %v3674, %v3675
      %v3677 = vrot.slane %v3675, 4
      %v3678 = vrot.slane %v3579, 5
      %v3679 = vsel %vm1489, %v3677, %v3678
      %v3680 = vrot.slane %v3580, 5
      %v3681 = vrot.slane %v3680, 4
      %v3682 = vrot.slane %v3581, 5
      %v3683 = vsel %vm1489, %v3681, %v3682
      %v3684 = vrot.slane %v3682, 4
      %v3685 = vrot.slane %v3582, 5
      %v3686 = vsel %vm1489, %v3684, %v3685
      %v3687 = vrot.slane %v3583, 5
      %v3688 = vrot.slane %v3687, 4
      %v3689 = vrot.slane %v3584, 5
      %v3690 = vsel %vm1489, %v3688, %v3689
      %v3691 = vrot.slane %v3689, 4
      %v3692 = vrot.slane %v3585, 5
      %v3693 = vsel %vm1489, %v3691, %v3692
      %v3694 = vrot.slane %v3586, 5
      %v3695 = vrot.slane %v3694, 4
      %v3696 = vrot.slane %v3587, 5
      %v3697 = vsel %vm1489, %v3695, %v3696
      %v3698 = vrot.slane %v3696, 4
      %v3699 = vrot.slane %v3588, 5
      %v3700 = vsel %vm1489, %v3698, %v3699
      %v3701 = vrot.slane %v3589, 5
      %v3702 = vrot.slane %v3701, 4
      %v3703 = vrot.slane %v3590, 5
      %v3704 = vsel %vm1489, %v3702, %v3703
      %v3705 = vrot.slane %v3703, 4
      %v3706 = vrot.slane %v3591, 5
      %v3707 = vsel %vm1489, %v3705, %v3706
      %v3708 = vrot.slane %v3592, 5
      %v3709 = vrot.slane %v3708, 4
      %v3710 = vrot.slane %v3593, 5
      %v3711 = vsel %vm1489, %v3709, %v3710
      %v3712 = vrot.slane %v3710, 4
      %v3713 = vrot.slane %v3594, 5
      %v3714 = vsel %vm1489, %v3712, %v3713
      %v3715 = vrot.slane %v3595, 5
      %v3716 = vrot.slane %v3715, 4
      %v3717 = vrot.slane %v3596, 5
      %v3718 = vsel %vm1489, %v3716, %v3717
      %v3719 = vrot.slane %v3717, 4
      %v3720 = vrot.slane %v3597, 5
      %v3721 = vsel %vm1489, %v3719, %v3720
      %v3722 = vrot.slane %v3598, 5
      %v3723 = vrot.slane %v3722, 4
      %v3724 = vrot.slane %v3599, 5
      %v3725 = vsel %vm1489, %v3723, %v3724
      %v3726 = vrot.slane %v3724, 4
      %v3727 = vrot.slane %v3600, 5
      %v3728 = vsel %vm1489, %v3726, %v3727
      %v3729 = vrot.slane %v3601, 5
      %v3730 = vrot.slane %v3729, 4
      %v3731 = vrot.slane %v3602, 5
      %v3732 = vsel %vm1489, %v3730, %v3731
      %v3733 = vrot.slane %v3731, 4
      %v3734 = vrot.slane %v3603, 5
      %v3735 = vsel %vm1489, %v3733, %v3734
      %v3736 = vrot.slane %v3604, 5
      %v3737 = vrot.slane %v3736, 4
      %v3738 = vrot.slane %v3605, 5
      %v3739 = vsel %vm1489, %v3737, %v3738
      %v3740 = vrot.slane %v3738, 4
      %v3741 = vrot.slane %v3606, 5
      %v3742 = vsel %vm1489, %v3740, %v3741
      %v3743 = vrot.slane %v3607, 5
      %v3744 = vrot.slane %v3743, 4
      %v3745 = vrot.slane %v3608, 5
      %v3746 = vsel %vm1489, %v3744, %v3745
      %v3747 = vrot.slane %v3745, 4
      %v3748 = vrot.slane %v3609, 5
      %v3749 = vsel %vm1489, %v3747, %v3748
      %v3750 = vrot.slane %v3610, 5
      %v3751 = vrot.slane %v3750, 4
      %v3752 = vrot.slane %v3611, 5
      %v3753 = vsel %vm1489, %v3751, %v3752
      %v3754 = vrot.slane %v3752, 4
      %v3755 = vrot.slane %v3612, 5
      %v3756 = vsel %vm1489, %v3754, %v3755
      %v3757 = vrot.slane %v3613, 5
      %v3758 = vrot.slane %v3757, 4
      %v3759 = vrot.slane %v3614, 5
      %v3760 = vsel %vm1489, %v3758, %v3759
      %v3761 = vrot.slane %v3759, 4
      %v3762 = vrot.slane %v3615, 5
      %v3763 = vsel %vm1489, %v3761, %v3762
      %v3764 = vrot.slane %v3616, 5
      %v3765 = vrot.slane %v3764, 4
      %v3766 = vrot.slane %v3617, 5
      %v3767 = vsel %vm1489, %v3765, %v3766
      %v3768 = vrot.slane %v3766, 4
      %v3769 = vrot.slane %v3618, 5
      %v3770 = vsel %vm1489, %v3768, %v3769
      %v3771 = vrot.slane %v3619, 5
      %v3772 = vrot.slane %v3771, 4
      %v3773 = vrot.slane %v3620, 5
      %v3774 = vsel %vm1489, %v3772, %v3773
      %v3775 = vrot.slane %v3773, 4
      %v3776 = vrot.slane %v3621, 5
      %v3777 = vsel %vm1489, %v3775, %v3776
      %v3778 = vrot.slane %v3622, 5
      %v3779 = vrot.slane %v3778, 4
      %v3780 = vrot.slane %v3623, 5
      %v3781 = vsel %vm1489, %v3779, %v3780
      %v3782 = vrot.slane %v3780, 4
      %v3783 = vrot.slane %v3624, 5
      %v3784 = vsel %vm1489, %v3782, %v3783
      %3785 = vrot.lane.b32.xlu0 %v3676, 32
      %v3786 = vpop.permute.xlu0 %3785
      %3787 = vrot.lane.b32.xlu0 %v3679, 32
      %v3788 = vpop.permute.xlu0 %3787
      %3789 = vrot.lane.b32.xlu0 %v3683, 32
      %v3790 = vpop.permute.xlu0 %3789
      %3791 = vrot.lane.b32.xlu0 %v3686, 32
      %v3792 = vpop.permute.xlu0 %3791
      %3793 = vrot.lane.b32.xlu0 %v3690, 32
      %v3794 = vpop.permute.xlu0 %3793
      %3795 = vrot.lane.b32.xlu0 %v3693, 32
      %v3796 = vpop.permute.xlu0 %3795
      %3797 = vrot.lane.b32.xlu0 %v3697, 32
      %v3798 = vpop.permute.xlu0 %3797
      %3799 = vrot.lane.b32.xlu0 %v3700, 32
      %v3800 = vpop.permute.xlu0 %3799
      %3801 = vrot.lane.b32.xlu0 %v3704, 32
      %v3802 = vpop.permute.xlu0 %3801
      %3803 = vrot.lane.b32.xlu0 %v3707, 32
      %v3804 = vpop.permute.xlu0 %3803
      %3805 = vrot.lane.b32.xlu0 %v3711, 32
      %v3806 = vpop.permute.xlu0 %3805
      %3807 = vrot.lane.b32.xlu0 %v3714, 32
      %v3808 = vpop.permute.xlu0 %3807
      %3809 = vrot.lane.b32.xlu0 %v3718, 32
      %v3810 = vpop.permute.xlu0 %3809
      %3811 = vrot.lane.b32.xlu0 %v3721, 32
      %v3812 = vpop.permute.xlu0 %3811
      %3813 = vrot.lane.b32.xlu0 %v3725, 32
      %v3814 = vpop.permute.xlu0 %3813
      %3815 = vrot.lane.b32.xlu0 %v3728, 32
      %v3816 = vpop.permute.xlu0 %3815
      %3817 = vrot.lane.b32.xlu0 %v3732, 32
      %v3818 = vpop.permute.xlu0 %3817
      %3819 = vrot.lane.b32.xlu0 %v3735, 32
      %v3820 = vpop.permute.xlu0 %3819
      %3821 = vrot.lane.b32.xlu0 %v3739, 32
      %v3822 = vpop.permute.xlu0 %3821
      %3823 = vrot.lane.b32.xlu0 %v3742, 32
      %v3824 = vpop.permute.xlu0 %3823
      %3825 = vrot.lane.b32.xlu0 %v3746, 32
      %v3826 = vpop.permute.xlu0 %3825
      %3827 = vrot.lane.b32.xlu0 %v3749, 32
      %v3828 = vpop.permute.xlu0 %3827
      %3829 = vrot.lane.b32.xlu0 %v3753, 32
      %v3830 = vpop.permute.xlu0 %3829
      %3831 = vrot.lane.b32.xlu0 %v3756, 32
      %v3832 = vpop.permute.xlu0 %3831
      %3833 = vrot.lane.b32.xlu0 %v3760, 32
      %v3834 = vpop.permute.xlu0 %3833
      %3835 = vrot.lane.b32.xlu0 %v3763, 32
      %v3836 = vpop.permute.xlu0 %3835
      %3837 = vrot.lane.b32.xlu0 %v3767, 32
      %v3838 = vpop.permute.xlu0 %3837
      %3839 = vrot.lane.b32.xlu0 %v3770, 32
      %v3840 = vpop.permute.xlu0 %3839
      %3841 = vrot.lane.b32.xlu0 %v3774, 32
      %v3842 = vpop.permute.xlu0 %3841
      %3843 = vrot.lane.b32.xlu0 %v3777, 32
      %v3844 = vpop.permute.xlu0 %3843
      %3845 = vrot.lane.b32.xlu0 %v3781, 32
      %v3846 = vpop.permute.xlu0 %3845
      %3847 = vrot.lane.b32.xlu0 %v3784, 32
      %v3848 = vpop.permute.xlu0 %3847
      %vm3881 = vcmask 290048
      %3882 = vst.msk [vmem:[#allocation3] sm:$0xf] %vm3881, %v3786
      %3883 = vst.msk [vmem:[#allocation3 + $0x4] sm:$0xf] %vm3881, %v3788
      %3884 = vst.msk [vmem:[#allocation3 + $0x8] sm:$0xf] %vm3881, %v3790
      %3885 = vst.msk [vmem:[#allocation3 + $0xc] sm:$0xf] %vm3881, %v3792
      %3886 = vst.msk [vmem:[#allocation3 + $0x10] sm:$0xf] %vm3881, %v3794
      %3887 = vst.msk [vmem:[#allocation3 + $0x14] sm:$0xf] %vm3881, %v3796
      %3888 = vst.msk [vmem:[#allocation3 + $0x18] sm:$0xf] %vm3881, %v3798
      %3889 = vst.msk [vmem:[#allocation3 + $0x1c] sm:$0xf] %vm3881, %v3800
      %3890 = vst.msk [vmem:[#allocation3 + $0x20] sm:$0xf] %vm3881, %v3802
      %3891 = vst.msk [vmem:[#allocation3 + $0x24] sm:$0xf] %vm3881, %v3804
      %3892 = vst.msk [vmem:[#allocation3 + $0x28] sm:$0xf] %vm3881, %v3806
      %3893 = vst.msk [vmem:[#allocation3 + $0x2c] sm:$0xf] %vm3881, %v3808
      %3894 = vst.msk [vmem:[#allocation3 + $0x30] sm:$0xf] %vm3881, %v3810
      %3895 = vst.msk [vmem:[#allocation3 + $0x34] sm:$0xf] %vm3881, %v3812
      %3896 = vst.msk [vmem:[#allocation3 + $0x38] sm:$0xf] %vm3881, %v3814
      %3897 = vst.msk [vmem:[#allocation3 + $0x3c] sm:$0xf] %vm3881, %v3816
      %3898 = vst.msk [vmem:[#allocation3 + $0x40] sm:$0xf] %vm3881, %v3818
      %3899 = vst.msk [vmem:[#allocation3 + $0x44] sm:$0xf] %vm3881, %v3820
      %3900 = vst.msk [vmem:[#allocation3 + $0x48] sm:$0xf] %vm3881, %v3822
      %3901 = vst.msk [vmem:[#allocation3 + $0x4c] sm:$0xf] %vm3881, %v3824
      %3902 = vst.msk [vmem:[#allocation3 + $0x50] sm:$0xf] %vm3881, %v3826
      %3903 = vst.msk [vmem:[#allocation3 + $0x54] sm:$0xf] %vm3881, %v3828
      %3904 = vst.msk [vmem:[#allocation3 + $0x58] sm:$0xf] %vm3881, %v3830
      %3905 = vst.msk [vmem:[#allocation3 + $0x5c] sm:$0xf] %vm3881, %v3832
      %3906 = vst.msk [vmem:[#allocation3 + $0x60] sm:$0xf] %vm3881, %v3834
      %3907 = vst.msk [vmem:[#allocation3 + $0x64] sm:$0xf] %vm3881, %v3836
      %3908 = vst.msk [vmem:[#allocation3 + $0x68] sm:$0xf] %vm3881, %v3838
      %3909 = vst.msk [vmem:[#allocation3 + $0x6c] sm:$0xf] %vm3881, %v3840
      %3910 = vst.msk [vmem:[#allocation3 + $0x70] sm:$0xf] %vm3881, %v3842
      %3911 = vst.msk [vmem:[#allocation3 + $0x74] sm:$0xf] %vm3881, %v3844
      %3912 = vst.msk [vmem:[#allocation3 + $0x78] sm:$0xf] %vm3881, %v3846
      %3913 = vst.msk [vmem:[#allocation3 + $0x7c] sm:$0xf] %vm3881, %v3848
      %v3914 = vld [vmem:[#allocation3] sm:$0xf]
      %v3915 = vld [vmem:[#allocation3 + $0x4] sm:$0xf]
      %v3916 = vld [vmem:[#allocation3 + $0x8] sm:$0xf]
      %v3917 = vld [vmem:[#allocation3 + $0xc] sm:$0xf]
      %v3918 = vld [vmem:[#allocation3 + $0x10] sm:$0xf]
      %v3919 = vld [vmem:[#allocation3 + $0x14] sm:$0xf]
      %v3920 = vld [vmem:[#allocation3 + $0x18] sm:$0xf]
      %v3921 = vld [vmem:[#allocation3 + $0x1c] sm:$0xf]
      %v3922 = vld [vmem:[#allocation3 + $0x20] sm:$0xf]
      %v3923 = vld [vmem:[#allocation3 + $0x24] sm:$0xf]
      %v3924 = vld [vmem:[#allocation3 + $0x28] sm:$0xf]
      %v3925 = vld [vmem:[#allocation3 + $0x2c] sm:$0xf]
      %v3926 = vld [vmem:[#allocation3 + $0x30] sm:$0xf]
      %v3927 = vld [vmem:[#allocation3 + $0x34] sm:$0xf]
      %v3928 = vld [vmem:[#allocation3 + $0x38] sm:$0xf]
      %v3929 = vld [vmem:[#allocation3 + $0x3c] sm:$0xf]
      %v3930 = vld [vmem:[#allocation3 + $0x40] sm:$0xf]
      %v3931 = vld [vmem:[#allocation3 + $0x44] sm:$0xf]
      %v3932 = vld [vmem:[#allocation3 + $0x48] sm:$0xf]
      %v3933 = vld [vmem:[#allocation3 + $0x4c] sm:$0xf]
      %v3934 = vld [vmem:[#allocation3 + $0x50] sm:$0xf]
      %v3935 = vld [vmem:[#allocation3 + $0x54] sm:$0xf]
      %v3936 = vld [vmem:[#allocation3 + $0x58] sm:$0xf]
      %v3937 = vld [vmem:[#allocation3 + $0x5c] sm:$0xf]
      %v3938 = vld [vmem:[#allocation3 + $0x60] sm:$0xf]
      %v3939 = vld [vmem:[#allocation3 + $0x64] sm:$0xf]
      %v3940 = vld [vmem:[#allocation3 + $0x68] sm:$0xf]
      %v3941 = vld [vmem:[#allocation3 + $0x6c] sm:$0xf]
      %v3942 = vld [vmem:[#allocation3 + $0x70] sm:$0xf]
      %v3943 = vld [vmem:[#allocation3 + $0x74] sm:$0xf]
      %v3944 = vld [vmem:[#allocation3 + $0x78] sm:$0xf]
      %v3945 = vld [vmem:[#allocation3 + $0x7c] sm:$0xf]
      %v3946 = vld [vmem:[%s1] sm:$0xf]
      %v3947 = vld [vmem:[%s1 + $0x4] sm:$0xf]
      %v3948 = vld [vmem:[%s1 + $0x8] sm:$0xf]
      %v3949 = vld [vmem:[%s1 + $0xc] sm:$0xf]
      %v3950 = vld [vmem:[%s1 + $0x10] sm:$0x3]
      %v3951 = vld [vmem:[%s2] sm:$0x1]
      %v3953 = vlaneseq
      %v3954 = vshrl.u32 %v3953, 7
      %v3955 = vsub.s32 0, %v3954
      %v3956 = vrot.slane %v3951, %v3955
      %v3990 = vunpack.c.l.b16 %v3914
      %v3991 = vunpack.c.l.b16 %v3915
      %v3992 = vunpack.c.l.b16 %v3916
      %v3993 = vunpack.c.l.b16 %v3917
      %v3994 = vunpack.c.l.b16 %v3918
      %v3995 = vunpack.c.l.b16 %v3919
      %v3996 = vunpack.c.l.b16 %v3920
      %v3997 = vunpack.c.l.b16 %v3921
      %v3998 = vunpack.c.l.b16 %v3922
      %v3999 = vunpack.c.l.b16 %v3923
      %v4000 = vunpack.c.l.b16 %v3924
      %v4001 = vunpack.c.l.b16 %v3925
      %v4002 = vunpack.c.l.b16 %v3926
      %v4003 = vunpack.c.l.b16 %v3927
      %v4004 = vunpack.c.l.b16 %v3928
      %v4005 = vunpack.c.l.b16 %v3929
      %v4006 = vunpack.c.l.b16 %v3930
      %v4007 = vunpack.c.l.b16 %v3931
      %v4008 = vunpack.c.l.b16 %v3932
      %v4009 = vunpack.c.l.b16 %v3933
      %v4010 = vunpack.c.l.b16 %v3934
      %v4011 = vunpack.c.l.b16 %v3935
      %v4012 = vunpack.c.l.b16 %v3936
      %v4013 = vunpack.c.l.b16 %v3937
      %v4014 = vunpack.c.l.b16 %v3938
      %v4015 = vunpack.c.l.b16 %v3939
      %v4016 = vunpack.c.l.b16 %v3940
      %v4017 = vunpack.c.l.b16 %v3941
      %v4018 = vunpack.c.l.b16 %v3942
      %v4019 = vunpack.c.l.b16 %v3943
      %v4020 = vunpack.c.l.b16 %v3944
      %v4021 = vunpack.c.l.b16 %v3945
      %v4022 = vpack.c.b16 %v3991, %v3990
      %v4023 = vpack.c.b16 %v3993, %v3992
      %v4024 = vpack.c.b16 %v3995, %v3994
      %v4025 = vpack.c.b16 %v3997, %v3996
      %v4026 = vpack.c.b16 %v3999, %v3998
      %v4027 = vpack.c.b16 %v4001, %v4000
      %v4028 = vpack.c.b16 %v4003, %v4002
      %v4029 = vpack.c.b16 %v4005, %v4004
      %v4030 = vpack.c.b16 %v4007, %v4006
      %v4031 = vpack.c.b16 %v4009, %v4008
      %v4032 = vpack.c.b16 %v4011, %v4010
      %v4033 = vpack.c.b16 %v4013, %v4012
      %v4034 = vpack.c.b16 %v4015, %v4014
      %v4035 = vpack.c.b16 %v4017, %v4016
      %v4036 = vpack.c.b16 %v4019, %v4018
      %v4037 = vpack.c.b16 %v4021, %v4020
      %v4043 = vunpack.c.l.b16 %v3946
      %v4044 = vunpack.c.l.b16 %v3947
      %v4045 = vunpack.c.l.b16 %v3948
      %v4046 = vunpack.c.l.b16 %v3949
      %v4047 = vunpack.c.l.b16 %v3950
      %v4048 = vpack.c.b16 %v4044, %v4043
      %v4049 = vpack.c.b16 %v4046, %v4045
      %v4050 = vpack.c.b16 %v4047, %v4047
      %vm4053 = vcmask 293888
      %v4055 = vsel %vm4053, %v4022, 0
      %v4058 = vsel %vm4053, %v4023, 0
      %v4061 = vsel %vm4053, %v4024, 0
      %v4064 = vsel %vm4053, %v4025, 0
      %v4067 = vsel %vm4053, %v4026, 0
      %v4070 = vsel %vm4053, %v4027, 0
      %v4073 = vsel %vm4053, %v4028, 0
      %v4076 = vsel %vm4053, %v4029, 0
      %v4079 = vsel %vm4053, %v4030, 0
      %v4082 = vsel %vm4053, %v4031, 0
      %v4085 = vsel %vm4053, %v4032, 0
      %v4088 = vsel %vm4053, %v4033, 0
      %v4091 = vsel %vm4053, %v4034, 0
      %v4094 = vsel %vm4053, %v4035, 0
      %v4097 = vsel %vm4053, %v4036, 0
      %v4100 = vsel %vm4053, %v4037, 0
      %vm4102 = vcmask 1041408
      %v4104 = vsel %vm4102, %v4050, 0
      %4106 = vmatprep.subr.bf16.mxu0 0
      %4107 = vmatpush1.bf16.msra.mxu0 0
      %4108 = vmatprep.subr.bf16.mxu0 0
      %4109 = vmatpush1.bf16.msra.mxu0 0
      %4110 = vmatprep.subr.bf16.mxu0 0
      %4111 = vmatpush1.bf16.msra.mxu0 0
      %4112 = vmatprep.subr.bf16.mxu0 0
      %4113 = vmatpush1.bf16.msra.mxu0 0
      %4114 = vmatprep.subr.bf16.mxu0 0
      %4115 = vmatpush1.bf16.msra.mxu0 0
      %4116 = vmatprep.subr.bf16.mxu0 0
      %4117 = vmatpush1.bf16.msra.mxu0 %v4104
      %4118 = vmatprep.subr.bf16.mxu0 0
      %4119 = vmatpush1.bf16.msra.mxu0 %v4049
      %4120 = vmatprep.subr.bf16.mxu0 0
      %4121 = vmatpush1.bf16.msra.mxu0 %v4048
      %4122 = vmatprep.subr.bf16.mxu0 0
      %4123 = vmatpush2.bf16.msra.mxu0 0
      %4124 = vmatprep.subr.bf16.mxu0 0
      %4125 = vmatpush2.bf16.msra.mxu0 0
      %4126 = vmatprep.subr.bf16.mxu0 0
      %4127 = vmatpush2.bf16.msra.mxu0 0
      %4128 = vmatprep.subr.bf16.mxu0 0
      %4129 = vmatpush2.bf16.msra.mxu0 0
      %4130 = vmatprep.subr.bf16.mxu0 0
      %4131 = vmatpush2.bf16.msra.mxu0 0
      %4132 = vmatprep.subr.bf16.mxu0 0
      %4133 = vmatpush2.bf16.msra.mxu0 0
      %4134 = vmatprep.subr.bf16.mxu0 0
      %4135 = vmatpush2.bf16.msra.mxu0 0
      %4136 = vmatprep.subr.bf16.mxu0 0
      %4137 = vmatpush2.bf16.msra.mxu0 0
      %4138 = vmatprep.mubr.bf16.mxu0 0
      %4139 = vmatmul.mubr.bf16.gmra.mxu0 %v4055
      %v4140 = vpop.f32.mrf.mxu0
      %v4141 = vadd.f32 %v3956, %v4140
      %v4142 = vpop.f32.mrf.mxu0
      %v4143 = vpop.f32.mrf.mxu0
      %v4144 = vadd.f32 %v3956, %v4143
      %v4145 = vpop.f32.mrf.mxu0
      %4146 = vmatprep.mubr.bf16.mxu0 0
      %4147 = vmatmul.mubr.bf16.gmra.mxu0 %v4058
      %v4148 = vpop.f32.mrf.mxu0
      %v4149 = vadd.f32 %v3956, %v4148
      %v4150 = vpop.f32.mrf.mxu0
      %v4151 = vpop.f32.mrf.mxu0
      %v4152 = vadd.f32 %v3956, %v4151
      %v4153 = vpop.f32.mrf.mxu0
      %4154 = vmatprep.mubr.bf16.mxu0 0
      %4155 = vmatmul.mubr.bf16.gmra.mxu0 %v4061
      %v4156 = vpop.f32.mrf.mxu0
      %v4157 = vadd.f32 %v3956, %v4156
      %v4158 = vpop.f32.mrf.mxu0
      %v4159 = vpop.f32.mrf.mxu0
      %v4160 = vadd.f32 %v3956, %v4159
      %v4161 = vpop.f32.mrf.mxu0
      %4162 = vmatprep.mubr.bf16.mxu0 0
      %4163 = vmatmul.mubr.bf16.gmra.mxu0 %v4064
      %v4164 = vpop.f32.mrf.mxu0
      %v4165 = vadd.f32 %v3956, %v4164
      %v4166 = vpop.f32.mrf.mxu0
      %v4167 = vpop.f32.mrf.mxu0
      %v4168 = vadd.f32 %v3956, %v4167
      %v4169 = vpop.f32.mrf.mxu0
      %4170 = vmatprep.mubr.bf16.mxu0 0
      %4171 = vmatmul.mubr.bf16.gmra.mxu0 %v4067
      %v4172 = vpop.f32.mrf.mxu0
      %v4173 = vadd.f32 %v3956, %v4172
      %v4174 = vpop.f32.mrf.mxu0
      %v4175 = vpop.f32.mrf.mxu0
      %v4176 = vadd.f32 %v3956, %v4175
      %v4177 = vpop.f32.mrf.mxu0
      %4178 = vmatprep.mubr.bf16.mxu0 0
      %4179 = vmatmul.mubr.bf16.gmra.mxu0 %v4070
      %v4180 = vpop.f32.mrf.mxu0
      %v4181 = vadd.f32 %v3956, %v4180
      %v4182 = vpop.f32.mrf.mxu0
      %v4183 = vpop.f32.mrf.mxu0
      %v4184 = vadd.f32 %v3956, %v4183
      %v4185 = vpop.f32.mrf.mxu0
      %4186 = vmatprep.mubr.bf16.mxu0 0
      %4187 = vmatmul.mubr.bf16.gmra.mxu0 %v4073
      %v4188 = vpop.f32.mrf.mxu0
      %v4189 = vadd.f32 %v3956, %v4188
      %v4190 = vpop.f32.mrf.mxu0
      %v4191 = vpop.f32.mrf.mxu0
      %v4192 = vadd.f32 %v3956, %v4191
      %v4193 = vpop.f32.mrf.mxu0
      %4194 = vmatprep.mubr.bf16.mxu0 0
      %4195 = vmatmul.mubr.bf16.gmra.mxu0 %v4076
      %v4196 = vpop.f32.mrf.mxu0
      %v4197 = vadd.f32 %v3956, %v4196
      %v4198 = vpop.f32.mrf.mxu0
      %v4199 = vpop.f32.mrf.mxu0
      %v4200 = vadd.f32 %v3956, %v4199
      %v4201 = vpop.f32.mrf.mxu0
      %4202 = vmatprep.mubr.bf16.mxu0 0
      %4203 = vmatmul.mubr.bf16.gmra.mxu0 %v4079
      %v4204 = vpop.f32.mrf.mxu0
      %v4205 = vadd.f32 %v3956, %v4204
      %v4206 = vpop.f32.mrf.mxu0
      %v4207 = vpop.f32.mrf.mxu0
      %v4208 = vadd.f32 %v3956, %v4207
      %v4209 = vpop.f32.mrf.mxu0
      %4210 = vmatprep.mubr.bf16.mxu0 0
      %4211 = vmatmul.mubr.bf16.gmra.mxu0 %v4082
      %v4212 = vpop.f32.mrf.mxu0
      %v4213 = vadd.f32 %v3956, %v4212
      %v4214 = vpop.f32.mrf.mxu0
      %v4215 = vpop.f32.mrf.mxu0
      %v4216 = vadd.f32 %v3956, %v4215
      %v4217 = vpop.f32.mrf.mxu0
      %4218 = vmatprep.mubr.bf16.mxu0 0
      %4219 = vmatmul.mubr.bf16.gmra.mxu0 %v4085
      %v4220 = vpop.f32.mrf.mxu0
      %v4221 = vadd.f32 %v3956, %v4220
      %v4222 = vpop.f32.mrf.mxu0
      %v4223 = vpop.f32.mrf.mxu0
      %v4224 = vadd.f32 %v3956, %v4223
      %v4225 = vpop.f32.mrf.mxu0
      %4226 = vmatprep.mubr.bf16.mxu0 0
      %4227 = vmatmul.mubr.bf16.gmra.mxu0 %v4088
      %v4228 = vpop.f32.mrf.mxu0
      %v4229 = vadd.f32 %v3956, %v4228
      %v4230 = vpop.f32.mrf.mxu0
      %v4231 = vpop.f32.mrf.mxu0
      %v4232 = vadd.f32 %v3956, %v4231
      %v4233 = vpop.f32.mrf.mxu0
      %4234 = vmatprep.mubr.bf16.mxu0 0
      %4235 = vmatmul.mubr.bf16.gmra.mxu0 %v4091
      %v4236 = vpop.f32.mrf.mxu0
      %v4237 = vadd.f32 %v3956, %v4236
      %v4238 = vpop.f32.mrf.mxu0
      %v4239 = vpop.f32.mrf.mxu0
      %v4240 = vadd.f32 %v3956, %v4239
      %v4241 = vpop.f32.mrf.mxu0
      %4242 = vmatprep.mubr.bf16.mxu0 0
      %4243 = vmatmul.mubr.bf16.gmra.mxu0 %v4094
      %v4244 = vpop.f32.mrf.mxu0
      %v4245 = vadd.f32 %v3956, %v4244
      %v4246 = vpop.f32.mrf.mxu0
      %v4247 = vpop.f32.mrf.mxu0
      %v4248 = vadd.f32 %v3956, %v4247
      %v4249 = vpop.f32.mrf.mxu0
      %4250 = vmatprep.mubr.bf16.mxu0 0
      %4251 = vmatmul.mubr.bf16.gmra.mxu0 %v4097
      %v4252 = vpop.f32.mrf.mxu0
      %v4253 = vadd.f32 %v3956, %v4252
      %v4254 = vpop.f32.mrf.mxu0
      %v4255 = vpop.f32.mrf.mxu0
      %v4256 = vadd.f32 %v3956, %v4255
      %v4257 = vpop.f32.mrf.mxu0
      %4258 = vmatprep.mubr.bf16.mxu0 0
      %4259 = vmatmul.mubr.bf16.gmra.mxu0 %v4100
      %v4260 = vpop.f32.mrf.mxu0
      %v4261 = vadd.f32 %v3956, %v4260
      %v4262 = vpop.f32.mrf.mxu0
      %v4263 = vpop.f32.mrf.mxu0
      %v4264 = vadd.f32 %v3956, %v4263
      %v4265 = vpop.f32.mrf.mxu0
      %4266 = vdwg.mxu0
      %vm4267 = vcmp.ge.f32.partialorder %v4141, 0.0
      %vm4268 = vcmp.ge.f32.partialorder %v4144, 0.0
      %vm4269 = vcmp.ge.f32.partialorder %v4149, 0.0
      %vm4270 = vcmp.ge.f32.partialorder %v4152, 0.0
      %vm4271 = vcmp.ge.f32.partialorder %v4157, 0.0
      %vm4272 = vcmp.ge.f32.partialorder %v4160, 0.0
      %vm4273 = vcmp.ge.f32.partialorder %v4165, 0.0
      %vm4274 = vcmp.ge.f32.partialorder %v4168, 0.0
      %vm4275 = vcmp.ge.f32.partialorder %v4173, 0.0
      %vm4276 = vcmp.ge.f32.partialorder %v4176, 0.0
      %vm4277 = vcmp.ge.f32.partialorder %v4181, 0.0
      %vm4278 = vcmp.ge.f32.partialorder %v4184, 0.0
      %vm4279 = vcmp.ge.f32.partialorder %v4189, 0.0
      %vm4280 = vcmp.ge.f32.partialorder %v4192, 0.0
      %vm4281 = vcmp.ge.f32.partialorder %v4197, 0.0
      %vm4282 = vcmp.ge.f32.partialorder %v4200, 0.0
      %vm4283 = vcmp.ge.f32.partialorder %v4205, 0.0
      %vm4284 = vcmp.ge.f32.partialorder %v4208, 0.0
      %vm4285 = vcmp.ge.f32.partialorder %v4213, 0.0
      %vm4286 = vcmp.ge.f32.partialorder %v4216, 0.0
      %vm4287 = vcmp.ge.f32.partialorder %v4221, 0.0
      %vm4288 = vcmp.ge.f32.partialorder %v4224, 0.0
      %vm4289 = vcmp.ge.f32.partialorder %v4229, 0.0
      %vm4290 = vcmp.ge.f32.partialorder %v4232, 0.0
      %vm4291 = vcmp.ge.f32.partialorder %v4237, 0.0
      %vm4292 = vcmp.ge.f32.partialorder %v4240, 0.0
      %vm4293 = vcmp.ge.f32.partialorder %v4245, 0.0
      %vm4294 = vcmp.ge.f32.partialorder %v4248, 0.0
      %vm4295 = vcmp.ge.f32.partialorder %v4253, 0.0
      %vm4296 = vcmp.ge.f32.partialorder %v4256, 0.0
      %vm4297 = vcmp.ge.f32.partialorder %v4261, 0.0
      %vm4298 = vcmp.ge.f32.partialorder %v4264, 0.0
      %v4299 = vmul.f32 %v4141, 0.2
      %v4300 = vmul.f32 %v4144, 0.2
      %v4301 = vmul.f32 %v4149, 0.2
      %v4302 = vmul.f32 %v4152, 0.2
      %v4303 = vmul.f32 %v4157, 0.2
      %v4304 = vmul.f32 %v4160, 0.2
      %v4305 = vmul.f32 %v4165, 0.2
      %v4306 = vmul.f32 %v4168, 0.2
      %v4307 = vmul.f32 %v4173, 0.2
      %v4308 = vmul.f32 %v4176, 0.2
      %v4309 = vmul.f32 %v4181, 0.2
      %v4310 = vmul.f32 %v4184, 0.2
      %v4311 = vmul.f32 %v4189, 0.2
      %v4312 = vmul.f32 %v4192, 0.2
      %v4313 = vmul.f32 %v4197, 0.2
      %v4314 = vmul.f32 %v4200, 0.2
      %v4315 = vmul.f32 %v4205, 0.2
      %v4316 = vmul.f32 %v4208, 0.2
      %v4317 = vmul.f32 %v4213, 0.2
      %v4318 = vmul.f32 %v4216, 0.2
      %v4319 = vmul.f32 %v4221, 0.2
      %v4320 = vmul.f32 %v4224, 0.2
      %v4321 = vmul.f32 %v4229, 0.2
      %v4322 = vmul.f32 %v4232, 0.2
      %v4323 = vmul.f32 %v4237, 0.2
      %v4324 = vmul.f32 %v4240, 0.2
      %v4325 = vmul.f32 %v4245, 0.2
      %v4326 = vmul.f32 %v4248, 0.2
      %v4327 = vmul.f32 %v4253, 0.2
      %v4328 = vmul.f32 %v4256, 0.2
      %v4329 = vmul.f32 %v4261, 0.2
      %v4330 = vmul.f32 %v4264, 0.2
      %v4331 = vsel %vm4267, %v4141, %v4299
      %v4332 = vsel %vm4268, %v4144, %v4300
      %v4333 = vsel %vm4269, %v4149, %v4301
      %v4334 = vsel %vm4270, %v4152, %v4302
      %v4335 = vsel %vm4271, %v4157, %v4303
      %v4336 = vsel %vm4272, %v4160, %v4304
      %v4337 = vsel %vm4273, %v4165, %v4305
      %v4338 = vsel %vm4274, %v4168, %v4306
      %v4339 = vsel %vm4275, %v4173, %v4307
      %v4340 = vsel %vm4276, %v4176, %v4308
      %v4341 = vsel %vm4277, %v4181, %v4309
      %v4342 = vsel %vm4278, %v4184, %v4310
      %v4343 = vsel %vm4279, %v4189, %v4311
      %v4344 = vsel %vm4280, %v4192, %v4312
      %v4345 = vsel %vm4281, %v4197, %v4313
      %v4346 = vsel %vm4282, %v4200, %v4314
      %v4347 = vsel %vm4283, %v4205, %v4315
      %v4348 = vsel %vm4284, %v4208, %v4316
      %v4349 = vsel %vm4285, %v4213, %v4317
      %v4350 = vsel %vm4286, %v4216, %v4318
      %v4351 = vsel %vm4287, %v4221, %v4319
      %v4352 = vsel %vm4288, %v4224, %v4320
      %v4353 = vsel %vm4289, %v4229, %v4321
      %v4354 = vsel %vm4290, %v4232, %v4322
      %v4355 = vsel %vm4291, %v4237, %v4323
      %v4356 = vsel %vm4292, %v4240, %v4324
      %v4357 = vsel %vm4293, %v4245, %v4325
      %v4358 = vsel %vm4294, %v4248, %v4326
      %v4359 = vsel %vm4295, %v4253, %v4327
      %v4360 = vsel %vm4296, %v4256, %v4328
      %v4361 = vsel %vm4297, %v4261, %v4329
      %v4362 = vsel %vm4298, %v4264, %v4330
      %v4363 = vpack.c.bf16 %v4332, %v4331
      %v4364 = vpack.c.bf16 %v4334, %v4333
      %v4365 = vpack.c.bf16 %v4336, %v4335
      %v4366 = vpack.c.bf16 %v4338, %v4337
      %v4367 = vpack.c.bf16 %v4340, %v4339
      %v4368 = vpack.c.bf16 %v4342, %v4341
      %v4369 = vpack.c.bf16 %v4344, %v4343
      %v4370 = vpack.c.bf16 %v4346, %v4345
      %v4371 = vpack.c.bf16 %v4348, %v4347
      %v4372 = vpack.c.bf16 %v4350, %v4349
      %v4373 = vpack.c.bf16 %v4352, %v4351
      %v4374 = vpack.c.bf16 %v4354, %v4353
      %v4375 = vpack.c.bf16 %v4356, %v4355
      %v4376 = vpack.c.bf16 %v4358, %v4357
      %v4377 = vpack.c.bf16 %v4360, %v4359
      %v4378 = vpack.c.bf16 %v4362, %v4361
      %v4395 = vunpack.c.l.b16 %v4363
      %v4396 = vunpack.c.h.b16 %v4363
      %v4397 = vunpack.c.l.b16 %v4364
      %v4398 = vunpack.c.h.b16 %v4364
      %v4399 = vunpack.c.l.b16 %v4365
      %v4400 = vunpack.c.h.b16 %v4365
      %v4401 = vunpack.c.l.b16 %v4366
      %v4402 = vunpack.c.h.b16 %v4366
      %v4403 = vunpack.c.l.b16 %v4367
      %v4404 = vunpack.c.h.b16 %v4367
      %v4405 = vunpack.c.l.b16 %v4368
      %v4406 = vunpack.c.h.b16 %v4368
      %v4407 = vunpack.c.l.b16 %v4369
      %v4408 = vunpack.c.h.b16 %v4369
      %v4409 = vunpack.c.l.b16 %v4370
      %v4410 = vunpack.c.h.b16 %v4370
      %v4411 = vunpack.c.l.b16 %v4371
      %v4412 = vunpack.c.h.b16 %v4371
      %v4413 = vunpack.c.l.b16 %v4372
      %v4414 = vunpack.c.h.b16 %v4372
      %v4415 = vunpack.c.l.b16 %v4373
      %v4416 = vunpack.c.h.b16 %v4373
      %v4417 = vunpack.c.l.b16 %v4374
      %v4418 = vunpack.c.h.b16 %v4374
      %v4419 = vunpack.c.l.b16 %v4375
      %v4420 = vunpack.c.h.b16 %v4375
      %v4421 = vunpack.c.l.b16 %v4376
      %v4422 = vunpack.c.h.b16 %v4376
      %v4423 = vunpack.c.l.b16 %v4377
      %v4424 = vunpack.c.h.b16 %v4377
      %v4425 = vunpack.c.l.b16 %v4378
      %v4426 = vunpack.c.h.b16 %v4378
      %v4427 = vpack.c.b16 %v4395, %v4395
      %v4428 = vpack.c.b16 %v4396, %v4396
      %v4429 = vpack.c.b16 %v4397, %v4397
      %v4430 = vpack.c.b16 %v4398, %v4398
      %v4431 = vpack.c.b16 %v4399, %v4399
      %v4432 = vpack.c.b16 %v4400, %v4400
      %v4433 = vpack.c.b16 %v4401, %v4401
      %v4434 = vpack.c.b16 %v4402, %v4402
      %v4435 = vpack.c.b16 %v4403, %v4403
      %v4436 = vpack.c.b16 %v4404, %v4404
      %v4437 = vpack.c.b16 %v4405, %v4405
      %v4438 = vpack.c.b16 %v4406, %v4406
      %v4439 = vpack.c.b16 %v4407, %v4407
      %v4440 = vpack.c.b16 %v4408, %v4408
      %v4441 = vpack.c.b16 %v4409, %v4409
      %v4442 = vpack.c.b16 %v4410, %v4410
      %v4443 = vpack.c.b16 %v4411, %v4411
      %v4444 = vpack.c.b16 %v4412, %v4412
      %v4445 = vpack.c.b16 %v4413, %v4413
      %v4446 = vpack.c.b16 %v4414, %v4414
      %v4447 = vpack.c.b16 %v4415, %v4415
      %v4448 = vpack.c.b16 %v4416, %v4416
      %v4449 = vpack.c.b16 %v4417, %v4417
      %v4450 = vpack.c.b16 %v4418, %v4418
      %v4451 = vpack.c.b16 %v4419, %v4419
      %v4452 = vpack.c.b16 %v4420, %v4420
      %v4453 = vpack.c.b16 %v4421, %v4421
      %v4454 = vpack.c.b16 %v4422, %v4422
      %v4455 = vpack.c.b16 %v4423, %v4423
      %v4456 = vpack.c.b16 %v4424, %v4424
      %v4457 = vpack.c.b16 %v4425, %v4425
      %v4458 = vpack.c.b16 %v4426, %v4426
      %vm4491 = vcmask 125952
      %4492 = vst.msk [vmem:[%s170] sm:$0xf] %vm4491, %v4427
      %4493 = vst.msk [vmem:[%s170 + $0x4] sm:$0xf] %vm4491, %v4428
      %4494 = vst.msk [vmem:[%s170 + $0x8] sm:$0xf] %vm4491, %v4429
      %4495 = vst.msk [vmem:[%s170 + $0xc] sm:$0xf] %vm4491, %v4430
      %4496 = vst.msk [vmem:[%s170 + $0x10] sm:$0xf] %vm4491, %v4431
      %4497 = vst.msk [vmem:[%s170 + $0x14] sm:$0xf] %vm4491, %v4432
      %4498 = vst.msk [vmem:[%s170 + $0x18] sm:$0xf] %vm4491, %v4433
      %4499 = vst.msk [vmem:[%s170 + $0x1c] sm:$0xf] %vm4491, %v4434
      %4500 = vst.msk [vmem:[%s170 + $0x20] sm:$0xf] %vm4491, %v4435
      %4501 = vst.msk [vmem:[%s170 + $0x24] sm:$0xf] %vm4491, %v4436
      %4502 = vst.msk [vmem:[%s170 + $0x28] sm:$0xf] %vm4491, %v4437
      %4503 = vst.msk [vmem:[%s170 + $0x2c] sm:$0xf] %vm4491, %v4438
      %4504 = vst.msk [vmem:[%s170 + $0x30] sm:$0xf] %vm4491, %v4439
      %4505 = vst.msk [vmem:[%s170 + $0x34] sm:$0xf] %vm4491, %v4440
      %4506 = vst.msk [vmem:[%s170 + $0x38] sm:$0xf] %vm4491, %v4441
      %4507 = vst.msk [vmem:[%s170 + $0x3c] sm:$0xf] %vm4491, %v4442
      %4508 = vst.msk [vmem:[%s170 + $0x40] sm:$0xf] %vm4491, %v4443
      %4509 = vst.msk [vmem:[%s170 + $0x44] sm:$0xf] %vm4491, %v4444
      %4510 = vst.msk [vmem:[%s170 + $0x48] sm:$0xf] %vm4491, %v4445
      %4511 = vst.msk [vmem:[%s170 + $0x4c] sm:$0xf] %vm4491, %v4446
      %4512 = vst.msk [vmem:[%s170 + $0x50] sm:$0xf] %vm4491, %v4447
      %4513 = vst.msk [vmem:[%s170 + $0x54] sm:$0xf] %vm4491, %v4448
      %4514 = vst.msk [vmem:[%s170 + $0x58] sm:$0xf] %vm4491, %v4449
      %4515 = vst.msk [vmem:[%s170 + $0x5c] sm:$0xf] %vm4491, %v4450
      %4516 = vst.msk [vmem:[%s170 + $0x60] sm:$0xf] %vm4491, %v4451
      %4517 = vst.msk [vmem:[%s170 + $0x64] sm:$0xf] %vm4491, %v4452
      %4518 = vst.msk [vmem:[%s170 + $0x68] sm:$0xf] %vm4491, %v4453
      %4519 = vst.msk [vmem:[%s170 + $0x6c] sm:$0xf] %vm4491, %v4454
      %4520 = vst.msk [vmem:[%s170 + $0x70] sm:$0xf] %vm4491, %v4455
      %4521 = vst.msk [vmem:[%s170 + $0x74] sm:$0xf] %vm4491, %v4456
      %4522 = vst.msk [vmem:[%s170 + $0x78] sm:$0xf] %vm4491, %v4457
      %4523 = vst.msk [vmem:[%s170 + $0x7c] sm:$0xf] %vm4491, %v4458
      %p4524 = scmp.lt.s32.totalorder %s14, 1
      %s4525 = scalar_select %p4524, %s14, 1
      %s4526 = smul.addr %s4525, 32
      %s4527 = smul.addr %s4526, 4
      %s4528 = scalar_lea.vmem %s3, %s4527
      // Predicated region
      $region33: #{tpu_custom_call.1} parent=31 // pred_check
        %p4529 = pneg %p100
      $region34: #{tpu_custom_call.1} parent=31 // pred_check_branch
        %4531 = sbr.rel (%p4529) target = $region36
      $region35: #{tpu_custom_call.1} parent=31 // pred_region
        _
      $region36: #{tpu_custom_call.1} parent=31 // pred_fallthru
        _
    $region32: #{tpu_custom_call.1} parent=5 // pred_fallthru
      _
    %p4532 = scmp.le.s32.totalorder 2, %s9
    // Predicated region
    $region37: #{tpu_custom_call.1} parent=5 // pred_check
      %p4533 = pneg %p4532
    $region38: #{tpu_custom_call.1} parent=5 // pred_check_branch
      %4535 = sbr.rel (%p4533) target = $region40
    $region39: #{tpu_custom_call.1} parent=5 // pred_region
      %s4536 = ssub.s32 %s9, 2
      // Predicated region
      $region41: #{tpu_custom_call.1} parent=39 // pred_check
        %p4537 = pneg %p106
      $region42: #{tpu_custom_call.1} parent=39 // pred_check_branch
        %4539 = sbr.rel (%p4537) target = $region44
      $region43: #{tpu_custom_call.1} parent=39 // pred_region
        %p4540 = scmp.lt.s32.totalorder %s15, 1
        %s4541 = scalar_select %p4540, %s15, 1
        %s4542 = smul.addr %s4541, 32
        %s4543 = smul.addr %s4542, 4
        %s4544 = scalar_lea.vmem %s3, %s4543
      $region44: #{tpu_custom_call.1} parent=39 // pred_fallthru
        _
    $region40: #{tpu_custom_call.1} parent=5 // pred_fallthru
      _
  $region6: #{tpu_custom_call.1} parent=0 // loop_footer
    %s13 = sadd.s32 1, %s9
  $region7: #{tpu_custom_call.1} parent=0 // loop_footer_branch
    %8 = sbr.rel target = $region3
  $region8: #{tpu_custom_call.1} parent=0 // loop_exit
    _

</llo_original>
